<compile_context>
chip_gen: v7x
topology: tpu7x:2x2x1
jax: 0.10.0
libtpu: 0.0.40
codegen_flags: <defaults>
</compile_context>

<pallas_src>
import numpy as np
import jax
import jax.numpy as jnp
from jax.experimental import pallas as pl
from jax.experimental.pallas import tpu as pltpu


# ---------------------------------------------------------------------------
# helpers mirroring the PyTorch module (numpy, used only to build constants)
# ---------------------------------------------------------------------------
def linear_space(backcast_length, forecast_length, is_forecast=True):
    horizon = forecast_length if is_forecast else backcast_length
    return np.arange(0, horizon) / horizon


def seasonality_basis(p, t):
    p1, p2 = (p // 2, p // 2) if p % 2 == 0 else (p // 2, p // 2 + 1)
    s1 = np.array([np.cos(2 * np.pi * i * t) for i in range(p1)])
    s2 = np.array([np.sin(2 * np.pi * i * t) for i in range(p2)])
    return np.concatenate([s1, s2], axis=0).astype(np.float32)      # (p, horizon)


def trend_basis(p, t):
    return np.array([t ** i for i in range(p)]).astype(np.float32)  # (p, horizon)


def squeeze_last_dim(x):
    if x.ndim == 3 and x.shape[-1] == 1:
        return x[..., 0]
    return x


def _round_up(v, m):
    return ((v + m - 1) // m) * m


STATE_PAD = 128            # lane-dense state width (backcast|forecast|zeros)


# ---------------------------------------------------------------------------
# Pallas kernel: the entire NBeatsNet forward (all stacks / blocks fused)
# ---------------------------------------------------------------------------
def nbeats_kernel(x_ref, w1_ref, w234_ref, b_ref, wbf_ref, out_ref):
    f32 = jnp.float32
    bf16 = jnp.bfloat16
    n_blocks = w1_ref.shape[0]
    state_pad = w1_ref.shape[1]
    bl = x_ref.shape[1]

    # Lane-dense state slab: [backcast | forecast accumulator | zero pad].
    # Built in-kernel so only the true (bt, backcast_length) input is DMA'd.
    state = jnp.pad(x_ref[...], ((0, 0), (0, state_pad - bl)))

    for k in range(n_blocks):                     # static unroll over 6 blocks
        # fc1 weights are zero-padded over the forecast/pad lanes of `state`,
        # so the forecast accumulator never leaks into the hidden layers.
        # fc1 stays f32 (residual-path precision).
        h = jnp.maximum(
            jnp.dot(state, w1_ref[k], preferred_element_type=f32)
            + b_ref[4 * k:4 * k + 1, :],
            0.0)
        for j in range(3):                        # fc2, fc3, fc4 (bf16 MXU)
            h = jnp.maximum(
                jnp.dot(h.astype(bf16), w234_ref[k, j],
                        preferred_element_type=f32)
                + b_ref[4 * k + j + 1:4 * k + j + 2, :],
                0.0)
        # folded theta->basis projection with signed backcast columns:
        #   state[:, :bl] -= theta @ S_back ; state[:, bl:15] += theta @ S_fore
        state = state + jnp.dot(h, wbf_ref[k], preferred_element_type=f32)

    out_ref[...] = state


def nbeats_forward(x, packed, backcast_length, forecast_length):
    """x: (B, backcast_length) or (B, backcast_length, 1) float32."""
    x = squeeze_last_dim(x).astype(jnp.float32)
    B = x.shape[0]
    bl = backcast_length
    w1_stack, w234_stack, b_stack, wbf_stack = packed
    n_blocks, state_pad, units = w1_stack.shape

    # Batch tile: multiple of 8 sublanes, up to 256 rows. When B > 128, force
    # >= 2 grid steps so ("parallel",) shards across both v7x TensorCores.
    if B <= 128:
        bt = _round_up(max(B, 8), 8)
    else:
        bt = min(256, _round_up(pl.cdiv(B, 2), 8))
    b_pad = _round_up(B, bt)
    if b_pad != B:
        x = jnp.pad(x, ((0, b_pad - B), (0, 0)))   # tiny (rows x 10) pad only

    itemsize = lambda a: a.dtype.itemsize
    flops = 2 * b_pad * n_blocks * (2 * state_pad * units + 3 * units * units)
    bytes_accessed = (x.size * 4 + b_pad * state_pad * 4
                      + w1_stack.size * itemsize(w1_stack)
                      + w234_stack.size * itemsize(w234_stack)
                      + b_stack.size * itemsize(b_stack)
                      + wbf_stack.size * itemsize(wbf_stack))

    out = pl.pallas_call(
        nbeats_kernel,
        out_shape=jax.ShapeDtypeStruct((b_pad, state_pad), jnp.float32),
        grid_spec=pltpu.PrefetchScalarGridSpec(
            num_scalar_prefetch=0,
            grid=(b_pad // bt,),
            in_specs=[
                pl.BlockSpec((bt, bl), lambda i: (i, 0)),
                # weight stacks: constant index_map -> resident across the grid
                pl.BlockSpec((n_blocks, state_pad, units), lambda i: (0, 0, 0)),
                pl.BlockSpec((n_blocks, 3, units, units),
                             lambda i: (0, 0, 0, 0)),
                pl.BlockSpec((n_blocks * 4, units), lambda i: (0, 0)),
                pl.BlockSpec((n_blocks, units, state_pad), lambda i: (0, 0, 0)),
            ],
            out_specs=pl.BlockSpec((bt, state_pad), lambda i: (i, 0)),
        ),
        compiler_params=pltpu.CompilerParams(
            dimension_semantics=("parallel",),     # 2 TCs on v7x, no-op else
            vmem_limit_bytes=32 * 1024 * 1024),    # headroom on v5e defaults
        cost_estimate=pl.CostEstimate(
            flops=flops, transcendentals=0, bytes_accessed=bytes_accessed),
    )(x, w1_stack, w234_stack, b_stack, wbf_stack)

    return out[:B, :bl], out[:B, bl:bl + forecast_length]


# ---------------------------------------------------------------------------
# deterministic synthetic parameters (nn.Linear-style init, weights as (in,out))
# ---------------------------------------------------------------------------
def make_block_params(key, backcast_length, units, thetas_dim):
    ks = jax.random.split(key, 9)

    def w(k, fan_in, fan_out):
        bound = 1.0 / np.sqrt(fan_in)
        return jax.random.uniform(k, (fan_in, fan_out), jnp.float32, -bound, bound)

    def b(k, fan_in, fan_out):
        bound = 1.0 / np.sqrt(fan_in)
        return jax.random.uniform(k, (fan_out,), jnp.float32, -bound, bound)

    w1 = w(ks[0], backcast_length, units); b1 = b(ks[1], backcast_length, units)
    w2 = w(ks[2], units, units);           b2 = b(ks[3], units, units)
    w3 = w(ks[4], units, units);           b3 = b(ks[5], units, units)
    w4 = w(ks[6], units, units);           b4 = b(ks[7], units, units)
    wt = w(ks[8], units, thetas_dim)       # theta_b_fc == theta_f_fc (shared, no bias)
    return (w1, b1, w2, b2, w3, b3, w4, b4, wt)


def pack_params(block_params, block_bases, backcast_length, forecast_length,
                units, state_pad=STATE_PAD):
    """Pack per-block weights into 4 stacked arrays; fold theta into bases,
    zero-pad to the lane-dense 128-wide state, hidden weights in bf16."""
    n = len(block_params)
    state_w = backcast_length + forecast_length
    w1_stack = np.zeros((n, state_pad, units), np.float32)
    w234_stack = np.zeros((n, 3, units, units), np.float32)
    b_stack = np.zeros((n * 4, units), np.float32)
    wbf_stack = np.zeros((n, units, state_pad), np.float32)
    for i, ((w1, b1, w2, b2, w3, b3, w4, b4, wt), (sb, sf)) in enumerate(
            zip(block_params, block_bases)):
        w1_stack[i, :backcast_length, :] = np.asarray(w1)   # other rows stay 0
        w234_stack[i, 0] = np.asarray(w2)
        w234_stack[i, 1] = np.asarray(w3)
        w234_stack[i, 2] = np.asarray(w4)
        b_stack[4 * i + 0] = np.asarray(b1)
        b_stack[4 * i + 1] = np.asarray(b2)
        b_stack[4 * i + 2] = np.asarray(b3)
        b_stack[4 * i + 3] = np.asarray(b4)
        # fold the shared theta projection into signed bases (float64 fold)
        basis = np.concatenate([-np.asarray(sb, np.float64),
                                np.asarray(sf, np.float64)], axis=1)  # (p, 15)
        wbf_stack[i, :, :state_w] = (
            np.asarray(wt, np.float64) @ basis).astype(np.float32)
    return (jnp.asarray(w1_stack),
            jnp.asarray(w234_stack).astype(jnp.bfloat16),
            jnp.asarray(b_stack),
            jnp.asarray(wbf_stack))


# ---------------------------------------------------------------------------
# pure-JAX reference (mirrors the PyTorch forward structure, no theta folding;
# uses the same bf16-hidden-matmul precision policy as the kernel)
# ---------------------------------------------------------------------------
def reference_forward(x, block_params, block_bases, forecast_length):
    HI = jax.lax.Precision.HIGHEST
    bf16 = jnp.bfloat16
    x = squeeze_last_dim(x).astype(jnp.float32)
    backcast = x
    forecast = jnp.zeros((x.shape[0], forecast_length), jnp.float32)
    for (w1, b1, w2, b2, w3, b3, w4, b4, wt), (sb, sf) in zip(block_params,
                                                              block_bases):
        h = jax.nn.relu(jnp.dot(backcast, w1, precision=HI) + b1)
        for wj, bj in ((w2, b2), (w3, b3), (w4, b4)):
            h = jax.nn.relu(
                jnp.dot(h.astype(bf16), wj.astype(bf16),
                        preferred_element_type=jnp.float32) + bj)
        theta = jnp.dot(h, wt, precision=HI)
        backcast = backcast - jnp.dot(theta, sb, precision=HI)
        forecast = forecast + jnp.dot(theta, sf, precision=HI)
    return backcast, forecast


if __name__ == "__main__":
    # NBeatsNet defaults
    batch = 16
    backcast_length = 10
    forecast_length = 5
    units = 256
    stack_types = ("trend", "seasonality")
    thetas_dims = (4, 8)
    nb_blocks_per_stack = 3

    key = jax.random.PRNGKey(0)
    k_x, k_p = jax.random.split(key)

    # (B, backcast_length, 1) exercises squeeze_last_dim like the torch path
    x = jax.random.normal(k_x, (batch, backcast_length, 1), jnp.float32)

    t_back = linear_space(backcast_length, forecast_length, is_forecast=False)
    t_fore = linear_space(backcast_length, forecast_length, is_forecast=True)

    block_params, block_bases = [], []
    block_keys = jax.random.split(k_p, len(stack_types) * nb_blocks_per_stack)
    bi = 0
    for sid, st in enumerate(stack_types):
        for _ in range(nb_blocks_per_stack):
            if st == "trend":
                p = thetas_dims[sid]                       # 4 (share_thetas=True)
                sb, sf = trend_basis(p, t_back), trend_basis(p, t_fore)
            else:                                          # seasonality
                p = forecast_length                        # nb_harmonics=None -> 5
                sb, sf = seasonality_basis(p, t_back), seasonality_basis(p, t_fore)
            block_params.append(
                make_block_params(block_keys[bi], backcast_length, units, p))
            block_bases.append((jnp.asarray(sb), jnp.asarray(sf)))
            bi += 1

    packed = pack_params(block_params, block_bases,
                         backcast_length, forecast_length, units)

    backcast, forecast = nbeats_forward(x, packed, backcast_length,
                                        forecast_length)
    jax.block_until_ready((backcast, forecast))

    ref_back, ref_fore = reference_forward(x, block_params, block_bases,
                                           forecast_length)
    np.testing.assert_allclose(np.asarray(backcast), np.asarray(ref_back),
                               rtol=5e-3, atol=5e-3)
    np.testing.assert_allclose(np.asarray(forecast), np.asarray(ref_fore),
                               rtol=5e-3, atol=5e-3)

    print("KERNEL_OK")
</pallas_src>

<mosaic_0001>
module attributes {stable_mosaic.version = 11 : i64} {
  func.func @nbeats_kernel(%arg0: i32, %arg1: memref<16x10xf32, #tpu.memory_space<vmem>>, %arg2: memref<6x128x256xf32, #tpu.memory_space<vmem>>, %arg3: memref<6x3x256x256xbf16, #tpu.memory_space<vmem>>, %arg4: memref<24x256xf32, #tpu.memory_space<vmem>>, %arg5: memref<6x256x128xf32, #tpu.memory_space<vmem>>, %arg6: memref<16x128xf32, #tpu.memory_space<vmem>>) attributes {dimension_semantics = [#tpu.dimension_semantics<parallel>], iteration_bounds = array<i64: 1>, scalar_prefetch = 0 : i64, scratch_operands = 0 : i64, tpu.core_type = #tpu.core_type<tc>, window_params = [{transform_indices = @transform_0, window_bounds = array<i64: 16, 10>}, {pipeline_mode = #tpu.pipeline_mode<synchronous>, transform_indices = @transform_1, window_bounds = array<i64: 6, 128, 256>}, {pipeline_mode = #tpu.pipeline_mode<synchronous>, transform_indices = @transform_2, window_bounds = array<i64: 6, 3, 256, 256>}, {pipeline_mode = #tpu.pipeline_mode<synchronous>, transform_indices = @transform_3, window_bounds = array<i64: 24, 256>}, {pipeline_mode = #tpu.pipeline_mode<synchronous>, transform_indices = @transform_4, window_bounds = array<i64: 6, 256, 128>}, {transform_indices = @transform_5, window_bounds = array<i64: 16, 128>}]} {
    %c0 = arith.constant 0 : index
    %c0_0 = arith.constant 0 : index
    %0 = vector.load %arg1[%c0, %c0_0] : memref<16x10xf32, #tpu.memory_space<vmem>>, vector<16x10xf32>
    %c0_i32 = arith.constant 0 : i32
    %1 = arith.sitofp %c0_i32 : i32 to f32
    %2 = vector.broadcast %1 : f32 to vector<16x118xf32>
    %3 = tpu.concatenate %0, %2 in 1 : vector<16x10xf32>, vector<16x118xf32> -> vector<16x128xf32>
    %c0_1 = arith.constant 0 : index
    %c0_2 = arith.constant 0 : index
    %c0_3 = arith.constant 0 : index
    %4 = vector.load %arg2[%c0_1, %c0_2, %c0_3] : memref<6x128x256xf32, #tpu.memory_space<vmem>>, vector<1x128x256xf32>
    %5 = vector.shape_cast %4 : vector<1x128x256xf32> to vector<128x256xf32>
    %cst = arith.constant dense<0.000000e+00> : vector<16x256xf32>
    %6 = tpu.matmul %3, %5, %cst {dimension_numbers = #tpu.dot_dimension_numbers<[1], [0], [0], [1], [0, 0, 1, 1], [], []>} : vector<16x128xf32>, vector<128x256xf32>, vector<16x256xf32> -> vector<16x256xf32>
    %c0_4 = arith.constant 0 : index
    %c0_5 = arith.constant 0 : index
    %7 = vector.load %arg4[%c0_4, %c0_5] : memref<24x256xf32, #tpu.memory_space<vmem>>, vector<1x256xf32>
    %8 = vector.broadcast %7 : vector<1x256xf32> to vector<16x256xf32>
    %9 = arith.addf %6, %8 : vector<16x256xf32>
    %cst_6 = arith.constant 0.000000e+00 : f32
    %10 = vector.broadcast %cst_6 : f32 to vector<16x256xf32>
    %11 = arith.maximumf %9, %10 : vector<16x256xf32>
    %12 = arith.truncf %11 : vector<16x256xf32> to vector<16x256xbf16>
    %c0_7 = arith.constant 0 : index
    %c0_8 = arith.constant 0 : index
    %c0_9 = arith.constant 0 : index
    %c0_10 = arith.constant 0 : index
    %13 = vector.load %arg3[%c0_7, %c0_8, %c0_9, %c0_10] : memref<6x3x256x256xbf16, #tpu.memory_space<vmem>>, vector<1x1x256x256xbf16>
    %14 = vector.shape_cast %13 : vector<1x1x256x256xbf16> to vector<256x256xbf16>
    %cst_11 = arith.constant dense<0.000000e+00> : vector<16x256xf32>
    %15 = tpu.matmul %12, %14, %cst_11 {dimension_numbers = #tpu.dot_dimension_numbers<[1], [0], [0], [1], [0, 0, 1, 1], [], []>} : vector<16x256xbf16>, vector<256x256xbf16>, vector<16x256xf32> -> vector<16x256xf32>
    %c1 = arith.constant 1 : index
    %c0_12 = arith.constant 0 : index
    %16 = vector.load %arg4[%c1, %c0_12] : memref<24x256xf32, #tpu.memory_space<vmem>>, vector<1x256xf32>
    %17 = vector.broadcast %16 : vector<1x256xf32> to vector<16x256xf32>
    %18 = arith.addf %15, %17 : vector<16x256xf32>
    %cst_13 = arith.constant 0.000000e+00 : f32
    %19 = vector.broadcast %cst_13 : f32 to vector<16x256xf32>
    %20 = arith.maximumf %18, %19 : vector<16x256xf32>
    %21 = arith.truncf %20 : vector<16x256xf32> to vector<16x256xbf16>
    %c0_14 = arith.constant 0 : index
    %c1_15 = arith.constant 1 : index
    %c0_16 = arith.constant 0 : index
    %c0_17 = arith.constant 0 : index
    %22 = vector.load %arg3[%c0_14, %c1_15, %c0_16, %c0_17] : memref<6x3x256x256xbf16, #tpu.memory_space<vmem>>, vector<1x1x256x256xbf16>
    %23 = vector.shape_cast %22 : vector<1x1x256x256xbf16> to vector<256x256xbf16>
    %cst_18 = arith.constant dense<0.000000e+00> : vector<16x256xf32>
    %24 = tpu.matmul %21, %23, %cst_18 {dimension_numbers = #tpu.dot_dimension_numbers<[1], [0], [0], [1], [0, 0, 1, 1], [], []>} : vector<16x256xbf16>, vector<256x256xbf16>, vector<16x256xf32> -> vector<16x256xf32>
    %c2 = arith.constant 2 : index
    %c0_19 = arith.constant 0 : index
    %25 = vector.load %arg4[%c2, %c0_19] : memref<24x256xf32, #tpu.memory_space<vmem>>, vector<1x256xf32>
    %26 = vector.broadcast %25 : vector<1x256xf32> to vector<16x256xf32>
    %27 = arith.addf %24, %26 : vector<16x256xf32>
    %cst_20 = arith.constant 0.000000e+00 : f32
    %28 = vector.broadcast %cst_20 : f32 to vector<16x256xf32>
    %29 = arith.maximumf %27, %28 : vector<16x256xf32>
    %30 = arith.truncf %29 : vector<16x256xf32> to vector<16x256xbf16>
    %c0_21 = arith.constant 0 : index
    %c2_22 = arith.constant 2 : index
    %c0_23 = arith.constant 0 : index
    %c0_24 = arith.constant 0 : index
    %31 = vector.load %arg3[%c0_21, %c2_22, %c0_23, %c0_24] : memref<6x3x256x256xbf16, #tpu.memory_space<vmem>>, vector<1x1x256x256xbf16>
    %32 = vector.shape_cast %31 : vector<1x1x256x256xbf16> to vector<256x256xbf16>
    %cst_25 = arith.constant dense<0.000000e+00> : vector<16x256xf32>
    %33 = tpu.matmul %30, %32, %cst_25 {dimension_numbers = #tpu.dot_dimension_numbers<[1], [0], [0], [1], [0, 0, 1, 1], [], []>} : vector<16x256xbf16>, vector<256x256xbf16>, vector<16x256xf32> -> vector<16x256xf32>
    %c3 = arith.constant 3 : index
    %c0_26 = arith.constant 0 : index
    %34 = vector.load %arg4[%c3, %c0_26] : memref<24x256xf32, #tpu.memory_space<vmem>>, vector<1x256xf32>
    %35 = vector.broadcast %34 : vector<1x256xf32> to vector<16x256xf32>
    %36 = arith.addf %33, %35 : vector<16x256xf32>
    %cst_27 = arith.constant 0.000000e+00 : f32
    %37 = vector.broadcast %cst_27 : f32 to vector<16x256xf32>
    %38 = arith.maximumf %36, %37 : vector<16x256xf32>
    %c0_28 = arith.constant 0 : index
    %c0_29 = arith.constant 0 : index
    %c0_30 = arith.constant 0 : index
    %39 = vector.load %arg5[%c0_28, %c0_29, %c0_30] : memref<6x256x128xf32, #tpu.memory_space<vmem>>, vector<1x256x128xf32>
    %40 = vector.shape_cast %39 : vector<1x256x128xf32> to vector<256x128xf32>
    %cst_31 = arith.constant dense<0.000000e+00> : vector<16x128xf32>
    %41 = tpu.matmul %38, %40, %cst_31 {dimension_numbers = #tpu.dot_dimension_numbers<[1], [0], [0], [1], [0, 0, 1, 1], [], []>} : vector<16x256xf32>, vector<256x128xf32>, vector<16x128xf32> -> vector<16x128xf32>
    %42 = arith.addf %3, %41 : vector<16x128xf32>
    %c1_32 = arith.constant 1 : index
    %c0_33 = arith.constant 0 : index
    %c0_34 = arith.constant 0 : index
    %43 = vector.load %arg2[%c1_32, %c0_33, %c0_34] : memref<6x128x256xf32, #tpu.memory_space<vmem>>, vector<1x128x256xf32>
    %44 = vector.shape_cast %43 : vector<1x128x256xf32> to vector<128x256xf32>
    %cst_35 = arith.constant dense<0.000000e+00> : vector<16x256xf32>
    %45 = tpu.matmul %42, %44, %cst_35 {dimension_numbers = #tpu.dot_dimension_numbers<[1], [0], [0], [1], [0, 0, 1, 1], [], []>} : vector<16x128xf32>, vector<128x256xf32>, vector<16x256xf32> -> vector<16x256xf32>
    %c4 = arith.constant 4 : index
    %c0_36 = arith.constant 0 : index
    %46 = vector.load %arg4[%c4, %c0_36] : memref<24x256xf32, #tpu.memory_space<vmem>>, vector<1x256xf32>
    %47 = vector.broadcast %46 : vector<1x256xf32> to vector<16x256xf32>
    %48 = arith.addf %45, %47 : vector<16x256xf32>
    %cst_37 = arith.constant 0.000000e+00 : f32
    %49 = vector.broadcast %cst_37 : f32 to vector<16x256xf32>
    %50 = arith.maximumf %48, %49 : vector<16x256xf32>
    %51 = arith.truncf %50 : vector<16x256xf32> to vector<16x256xbf16>
    %c1_38 = arith.constant 1 : index
    %c0_39 = arith.constant 0 : index
    %c0_40 = arith.constant 0 : index
    %c0_41 = arith.constant 0 : index
    %52 = vector.load %arg3[%c1_38, %c0_39, %c0_40, %c0_41] : memref<6x3x256x256xbf16, #tpu.memory_space<vmem>>, vector<1x1x256x256xbf16>
    %53 = vector.shape_cast %52 : vector<1x1x256x256xbf16> to vector<256x256xbf16>
    %cst_42 = arith.constant dense<0.000000e+00> : vector<16x256xf32>
    %54 = tpu.matmul %51, %53, %cst_42 {dimension_numbers = #tpu.dot_dimension_numbers<[1], [0], [0], [1], [0, 0, 1, 1], [], []>} : vector<16x256xbf16>, vector<256x256xbf16>, vector<16x256xf32> -> vector<16x256xf32>
    %c5 = arith.constant 5 : index
    %c0_43 = arith.constant 0 : index
    %55 = vector.load %arg4[%c5, %c0_43] : memref<24x256xf32, #tpu.memory_space<vmem>>, vector<1x256xf32>
    %56 = vector.broadcast %55 : vector<1x256xf32> to vector<16x256xf32>
    %57 = arith.addf %54, %56 : vector<16x256xf32>
    %cst_44 = arith.constant 0.000000e+00 : f32
    %58 = vector.broadcast %cst_44 : f32 to vector<16x256xf32>
    %59 = arith.maximumf %57, %58 : vector<16x256xf32>
    %60 = arith.truncf %59 : vector<16x256xf32> to vector<16x256xbf16>
    %c1_45 = arith.constant 1 : index
    %c1_46 = arith.constant 1 : index
    %c0_47 = arith.constant 0 : index
    %c0_48 = arith.constant 0 : index
    %61 = vector.load %arg3[%c1_45, %c1_46, %c0_47, %c0_48] : memref<6x3x256x256xbf16, #tpu.memory_space<vmem>>, vector<1x1x256x256xbf16>
    %62 = vector.shape_cast %61 : vector<1x1x256x256xbf16> to vector<256x256xbf16>
    %cst_49 = arith.constant dense<0.000000e+00> : vector<16x256xf32>
    %63 = tpu.matmul %60, %62, %cst_49 {dimension_numbers = #tpu.dot_dimension_numbers<[1], [0], [0], [1], [0, 0, 1, 1], [], []>} : vector<16x256xbf16>, vector<256x256xbf16>, vector<16x256xf32> -> vector<16x256xf32>
    %c6 = arith.constant 6 : index
    %c0_50 = arith.constant 0 : index
    %64 = vector.load %arg4[%c6, %c0_50] : memref<24x256xf32, #tpu.memory_space<vmem>>, vector<1x256xf32>
    %65 = vector.broadcast %64 : vector<1x256xf32> to vector<16x256xf32>
    %66 = arith.addf %63, %65 : vector<16x256xf32>
    %cst_51 = arith.constant 0.000000e+00 : f32
    %67 = vector.broadcast %cst_51 : f32 to vector<16x256xf32>
    %68 = arith.maximumf %66, %67 : vector<16x256xf32>
    %69 = arith.truncf %68 : vector<16x256xf32> to vector<16x256xbf16>
    %c1_52 = arith.constant 1 : index
    %c2_53 = arith.constant 2 : index
    %c0_54 = arith.constant 0 : index
    %c0_55 = arith.constant 0 : index
    %70 = vector.load %arg3[%c1_52, %c2_53, %c0_54, %c0_55] : memref<6x3x256x256xbf16, #tpu.memory_space<vmem>>, vector<1x1x256x256xbf16>
    %71 = vector.shape_cast %70 : vector<1x1x256x256xbf16> to vector<256x256xbf16>
    %cst_56 = arith.constant dense<0.000000e+00> : vector<16x256xf32>
    %72 = tpu.matmul %69, %71, %cst_56 {dimension_numbers = #tpu.dot_dimension_numbers<[1], [0], [0], [1], [0, 0, 1, 1], [], []>} : vector<16x256xbf16>, vector<256x256xbf16>, vector<16x256xf32> -> vector<16x256xf32>
    %c7 = arith.constant 7 : index
    %c0_57 = arith.constant 0 : index
    %73 = vector.load %arg4[%c7, %c0_57] : memref<24x256xf32, #tpu.memory_space<vmem>>, vector<1x256xf32>
    %74 = vector.broadcast %73 : vector<1x256xf32> to vector<16x256xf32>
    %75 = arith.addf %72, %74 : vector<16x256xf32>
    %cst_58 = arith.constant 0.000000e+00 : f32
    %76 = vector.broadcast %cst_58 : f32 to vector<16x256xf32>
    %77 = arith.maximumf %75, %76 : vector<16x256xf32>
    %c1_59 = arith.constant 1 : index
    %c0_60 = arith.constant 0 : index
    %c0_61 = arith.constant 0 : index
    %78 = vector.load %arg5[%c1_59, %c0_60, %c0_61] : memref<6x256x128xf32, #tpu.memory_space<vmem>>, vector<1x256x128xf32>
    %79 = vector.shape_cast %78 : vector<1x256x128xf32> to vector<256x128xf32>
    %cst_62 = arith.constant dense<0.000000e+00> : vector<16x128xf32>
    %80 = tpu.matmul %77, %79, %cst_62 {dimension_numbers = #tpu.dot_dimension_numbers<[1], [0], [0], [1], [0, 0, 1, 1], [], []>} : vector<16x256xf32>, vector<256x128xf32>, vector<16x128xf32> -> vector<16x128xf32>
    %81 = arith.addf %42, %80 : vector<16x128xf32>
    %c2_63 = arith.constant 2 : index
    %c0_64 = arith.constant 0 : index
    %c0_65 = arith.constant 0 : index
    %82 = vector.load %arg2[%c2_63, %c0_64, %c0_65] : memref<6x128x256xf32, #tpu.memory_space<vmem>>, vector<1x128x256xf32>
    %83 = vector.shape_cast %82 : vector<1x128x256xf32> to vector<128x256xf32>
    %cst_66 = arith.constant dense<0.000000e+00> : vector<16x256xf32>
    %84 = tpu.matmul %81, %83, %cst_66 {dimension_numbers = #tpu.dot_dimension_numbers<[1], [0], [0], [1], [0, 0, 1, 1], [], []>} : vector<16x128xf32>, vector<128x256xf32>, vector<16x256xf32> -> vector<16x256xf32>
    %c8 = arith.constant 8 : index
    %c0_67 = arith.constant 0 : index
    %85 = vector.load %arg4[%c8, %c0_67] : memref<24x256xf32, #tpu.memory_space<vmem>>, vector<1x256xf32>
    %86 = vector.broadcast %85 : vector<1x256xf32> to vector<16x256xf32>
    %87 = arith.addf %84, %86 : vector<16x256xf32>
    %cst_68 = arith.constant 0.000000e+00 : f32
    %88 = vector.broadcast %cst_68 : f32 to vector<16x256xf32>
    %89 = arith.maximumf %87, %88 : vector<16x256xf32>
    %90 = arith.truncf %89 : vector<16x256xf32> to vector<16x256xbf16>
    %c2_69 = arith.constant 2 : index
    %c0_70 = arith.constant 0 : index
    %c0_71 = arith.constant 0 : index
    %c0_72 = arith.constant 0 : index
    %91 = vector.load %arg3[%c2_69, %c0_70, %c0_71, %c0_72] : memref<6x3x256x256xbf16, #tpu.memory_space<vmem>>, vector<1x1x256x256xbf16>
    %92 = vector.shape_cast %91 : vector<1x1x256x256xbf16> to vector<256x256xbf16>
    %cst_73 = arith.constant dense<0.000000e+00> : vector<16x256xf32>
    %93 = tpu.matmul %90, %92, %cst_73 {dimension_numbers = #tpu.dot_dimension_numbers<[1], [0], [0], [1], [0, 0, 1, 1], [], []>} : vector<16x256xbf16>, vector<256x256xbf16>, vector<16x256xf32> -> vector<16x256xf32>
    %c9 = arith.constant 9 : index
    %c0_74 = arith.constant 0 : index
    %94 = vector.load %arg4[%c9, %c0_74] : memref<24x256xf32, #tpu.memory_space<vmem>>, vector<1x256xf32>
    %95 = vector.broadcast %94 : vector<1x256xf32> to vector<16x256xf32>
    %96 = arith.addf %93, %95 : vector<16x256xf32>
    %cst_75 = arith.constant 0.000000e+00 : f32
    %97 = vector.broadcast %cst_75 : f32 to vector<16x256xf32>
    %98 = arith.maximumf %96, %97 : vector<16x256xf32>
    %99 = arith.truncf %98 : vector<16x256xf32> to vector<16x256xbf16>
    %c2_76 = arith.constant 2 : index
    %c1_77 = arith.constant 1 : index
    %c0_78 = arith.constant 0 : index
    %c0_79 = arith.constant 0 : index
    %100 = vector.load %arg3[%c2_76, %c1_77, %c0_78, %c0_79] : memref<6x3x256x256xbf16, #tpu.memory_space<vmem>>, vector<1x1x256x256xbf16>
    %101 = vector.shape_cast %100 : vector<1x1x256x256xbf16> to vector<256x256xbf16>
    %cst_80 = arith.constant dense<0.000000e+00> : vector<16x256xf32>
    %102 = tpu.matmul %99, %101, %cst_80 {dimension_numbers = #tpu.dot_dimension_numbers<[1], [0], [0], [1], [0, 0, 1, 1], [], []>} : vector<16x256xbf16>, vector<256x256xbf16>, vector<16x256xf32> -> vector<16x256xf32>
    %c10 = arith.constant 10 : index
    %c0_81 = arith.constant 0 : index
    %103 = vector.load %arg4[%c10, %c0_81] : memref<24x256xf32, #tpu.memory_space<vmem>>, vector<1x256xf32>
    %104 = vector.broadcast %103 : vector<1x256xf32> to vector<16x256xf32>
    %105 = arith.addf %102, %104 : vector<16x256xf32>
    %cst_82 = arith.constant 0.000000e+00 : f32
    %106 = vector.broadcast %cst_82 : f32 to vector<16x256xf32>
    %107 = arith.maximumf %105, %106 : vector<16x256xf32>
    %108 = arith.truncf %107 : vector<16x256xf32> to vector<16x256xbf16>
    %c2_83 = arith.constant 2 : index
    %c2_84 = arith.constant 2 : index
    %c0_85 = arith.constant 0 : index
    %c0_86 = arith.constant 0 : index
    %109 = vector.load %arg3[%c2_83, %c2_84, %c0_85, %c0_86] : memref<6x3x256x256xbf16, #tpu.memory_space<vmem>>, vector<1x1x256x256xbf16>
    %110 = vector.shape_cast %109 : vector<1x1x256x256xbf16> to vector<256x256xbf16>
    %cst_87 = arith.constant dense<0.000000e+00> : vector<16x256xf32>
    %111 = tpu.matmul %108, %110, %cst_87 {dimension_numbers = #tpu.dot_dimension_numbers<[1], [0], [0], [1], [0, 0, 1, 1], [], []>} : vector<16x256xbf16>, vector<256x256xbf16>, vector<16x256xf32> -> vector<16x256xf32>
    %c11 = arith.constant 11 : index
    %c0_88 = arith.constant 0 : index
    %112 = vector.load %arg4[%c11, %c0_88] : memref<24x256xf32, #tpu.memory_space<vmem>>, vector<1x256xf32>
    %113 = vector.broadcast %112 : vector<1x256xf32> to vector<16x256xf32>
    %114 = arith.addf %111, %113 : vector<16x256xf32>
    %cst_89 = arith.constant 0.000000e+00 : f32
    %115 = vector.broadcast %cst_89 : f32 to vector<16x256xf32>
    %116 = arith.maximumf %114, %115 : vector<16x256xf32>
    %c2_90 = arith.constant 2 : index
    %c0_91 = arith.constant 0 : index
    %c0_92 = arith.constant 0 : index
    %117 = vector.load %arg5[%c2_90, %c0_91, %c0_92] : memref<6x256x128xf32, #tpu.memory_space<vmem>>, vector<1x256x128xf32>
    %118 = vector.shape_cast %117 : vector<1x256x128xf32> to vector<256x128xf32>
    %cst_93 = arith.constant dense<0.000000e+00> : vector<16x128xf32>
    %119 = tpu.matmul %116, %118, %cst_93 {dimension_numbers = #tpu.dot_dimension_numbers<[1], [0], [0], [1], [0, 0, 1, 1], [], []>} : vector<16x256xf32>, vector<256x128xf32>, vector<16x128xf32> -> vector<16x128xf32>
    %120 = arith.addf %81, %119 : vector<16x128xf32>
    %c3_94 = arith.constant 3 : index
    %c0_95 = arith.constant 0 : index
    %c0_96 = arith.constant 0 : index
    %121 = vector.load %arg2[%c3_94, %c0_95, %c0_96] : memref<6x128x256xf32, #tpu.memory_space<vmem>>, vector<1x128x256xf32>
    %122 = vector.shape_cast %121 : vector<1x128x256xf32> to vector<128x256xf32>
    %cst_97 = arith.constant dense<0.000000e+00> : vector<16x256xf32>
    %123 = tpu.matmul %120, %122, %cst_97 {dimension_numbers = #tpu.dot_dimension_numbers<[1], [0], [0], [1], [0, 0, 1, 1], [], []>} : vector<16x128xf32>, vector<128x256xf32>, vector<16x256xf32> -> vector<16x256xf32>
    %c12 = arith.constant 12 : index
    %c0_98 = arith.constant 0 : index
    %124 = vector.load %arg4[%c12, %c0_98] : memref<24x256xf32, #tpu.memory_space<vmem>>, vector<1x256xf32>
    %125 = vector.broadcast %124 : vector<1x256xf32> to vector<16x256xf32>
    %126 = arith.addf %123, %125 : vector<16x256xf32>
    %cst_99 = arith.constant 0.000000e+00 : f32
    %127 = vector.broadcast %cst_99 : f32 to vector<16x256xf32>
    %128 = arith.maximumf %126, %127 : vector<16x256xf32>
    %129 = arith.truncf %128 : vector<16x256xf32> to vector<16x256xbf16>
    %c3_100 = arith.constant 3 : index
    %c0_101 = arith.constant 0 : index
    %c0_102 = arith.constant 0 : index
    %c0_103 = arith.constant 0 : index
    %130 = vector.load %arg3[%c3_100, %c0_101, %c0_102, %c0_103] : memref<6x3x256x256xbf16, #tpu.memory_space<vmem>>, vector<1x1x256x256xbf16>
    %131 = vector.shape_cast %130 : vector<1x1x256x256xbf16> to vector<256x256xbf16>
    %cst_104 = arith.constant dense<0.000000e+00> : vector<16x256xf32>
    %132 = tpu.matmul %129, %131, %cst_104 {dimension_numbers = #tpu.dot_dimension_numbers<[1], [0], [0], [1], [0, 0, 1, 1], [], []>} : vector<16x256xbf16>, vector<256x256xbf16>, vector<16x256xf32> -> vector<16x256xf32>
    %c13 = arith.constant 13 : index
    %c0_105 = arith.constant 0 : index
    %133 = vector.load %arg4[%c13, %c0_105] : memref<24x256xf32, #tpu.memory_space<vmem>>, vector<1x256xf32>
    %134 = vector.broadcast %133 : vector<1x256xf32> to vector<16x256xf32>
    %135 = arith.addf %132, %134 : vector<16x256xf32>
    %cst_106 = arith.constant 0.000000e+00 : f32
    %136 = vector.broadcast %cst_106 : f32 to vector<16x256xf32>
    %137 = arith.maximumf %135, %136 : vector<16x256xf32>
    %138 = arith.truncf %137 : vector<16x256xf32> to vector<16x256xbf16>
    %c3_107 = arith.constant 3 : index
    %c1_108 = arith.constant 1 : index
    %c0_109 = arith.constant 0 : index
    %c0_110 = arith.constant 0 : index
    %139 = vector.load %arg3[%c3_107, %c1_108, %c0_109, %c0_110] : memref<6x3x256x256xbf16, #tpu.memory_space<vmem>>, vector<1x1x256x256xbf16>
    %140 = vector.shape_cast %139 : vector<1x1x256x256xbf16> to vector<256x256xbf16>
    %cst_111 = arith.constant dense<0.000000e+00> : vector<16x256xf32>
    %141 = tpu.matmul %138, %140, %cst_111 {dimension_numbers = #tpu.dot_dimension_numbers<[1], [0], [0], [1], [0, 0, 1, 1], [], []>} : vector<16x256xbf16>, vector<256x256xbf16>, vector<16x256xf32> -> vector<16x256xf32>
    %c14 = arith.constant 14 : index
    %c0_112 = arith.constant 0 : index
    %142 = vector.load %arg4[%c14, %c0_112] : memref<24x256xf32, #tpu.memory_space<vmem>>, vector<1x256xf32>
    %143 = vector.broadcast %142 : vector<1x256xf32> to vector<16x256xf32>
    %144 = arith.addf %141, %143 : vector<16x256xf32>
    %cst_113 = arith.constant 0.000000e+00 : f32
    %145 = vector.broadcast %cst_113 : f32 to vector<16x256xf32>
    %146 = arith.maximumf %144, %145 : vector<16x256xf32>
    %147 = arith.truncf %146 : vector<16x256xf32> to vector<16x256xbf16>
    %c3_114 = arith.constant 3 : index
    %c2_115 = arith.constant 2 : index
    %c0_116 = arith.constant 0 : index
    %c0_117 = arith.constant 0 : index
    %148 = vector.load %arg3[%c3_114, %c2_115, %c0_116, %c0_117] : memref<6x3x256x256xbf16, #tpu.memory_space<vmem>>, vector<1x1x256x256xbf16>
    %149 = vector.shape_cast %148 : vector<1x1x256x256xbf16> to vector<256x256xbf16>
    %cst_118 = arith.constant dense<0.000000e+00> : vector<16x256xf32>
    %150 = tpu.matmul %147, %149, %cst_118 {dimension_numbers = #tpu.dot_dimension_numbers<[1], [0], [0], [1], [0, 0, 1, 1], [], []>} : vector<16x256xbf16>, vector<256x256xbf16>, vector<16x256xf32> -> vector<16x256xf32>
    %c15 = arith.constant 15 : index
    %c0_119 = arith.constant 0 : index
    %151 = vector.load %arg4[%c15, %c0_119] : memref<24x256xf32, #tpu.memory_space<vmem>>, vector<1x256xf32>
    %152 = vector.broadcast %151 : vector<1x256xf32> to vector<16x256xf32>
    %153 = arith.addf %150, %152 : vector<16x256xf32>
    %cst_120 = arith.constant 0.000000e+00 : f32
    %154 = vector.broadcast %cst_120 : f32 to vector<16x256xf32>
    %155 = arith.maximumf %153, %154 : vector<16x256xf32>
    %c3_121 = arith.constant 3 : index
    %c0_122 = arith.constant 0 : index
    %c0_123 = arith.constant 0 : index
    %156 = vector.load %arg5[%c3_121, %c0_122, %c0_123] : memref<6x256x128xf32, #tpu.memory_space<vmem>>, vector<1x256x128xf32>
    %157 = vector.shape_cast %156 : vector<1x256x128xf32> to vector<256x128xf32>
    %cst_124 = arith.constant dense<0.000000e+00> : vector<16x128xf32>
    %158 = tpu.matmul %155, %157, %cst_124 {dimension_numbers = #tpu.dot_dimension_numbers<[1], [0], [0], [1], [0, 0, 1, 1], [], []>} : vector<16x256xf32>, vector<256x128xf32>, vector<16x128xf32> -> vector<16x128xf32>
    %159 = arith.addf %120, %158 : vector<16x128xf32>
    %c4_125 = arith.constant 4 : index
    %c0_126 = arith.constant 0 : index
    %c0_127 = arith.constant 0 : index
    %160 = vector.load %arg2[%c4_125, %c0_126, %c0_127] : memref<6x128x256xf32, #tpu.memory_space<vmem>>, vector<1x128x256xf32>
    %161 = vector.shape_cast %160 : vector<1x128x256xf32> to vector<128x256xf32>
    %cst_128 = arith.constant dense<0.000000e+00> : vector<16x256xf32>
    %162 = tpu.matmul %159, %161, %cst_128 {dimension_numbers = #tpu.dot_dimension_numbers<[1], [0], [0], [1], [0, 0, 1, 1], [], []>} : vector<16x128xf32>, vector<128x256xf32>, vector<16x256xf32> -> vector<16x256xf32>
    %c16 = arith.constant 16 : index
    %c0_129 = arith.constant 0 : index
    %163 = vector.load %arg4[%c16, %c0_129] : memref<24x256xf32, #tpu.memory_space<vmem>>, vector<1x256xf32>
    %164 = vector.broadcast %163 : vector<1x256xf32> to vector<16x256xf32>
    %165 = arith.addf %162, %164 : vector<16x256xf32>
    %cst_130 = arith.constant 0.000000e+00 : f32
    %166 = vector.broadcast %cst_130 : f32 to vector<16x256xf32>
    %167 = arith.maximumf %165, %166 : vector<16x256xf32>
    %168 = arith.truncf %167 : vector<16x256xf32> to vector<16x256xbf16>
    %c4_131 = arith.constant 4 : index
    %c0_132 = arith.constant 0 : index
    %c0_133 = arith.constant 0 : index
    %c0_134 = arith.constant 0 : index
    %169 = vector.load %arg3[%c4_131, %c0_132, %c0_133, %c0_134] : memref<6x3x256x256xbf16, #tpu.memory_space<vmem>>, vector<1x1x256x256xbf16>
    %170 = vector.shape_cast %169 : vector<1x1x256x256xbf16> to vector<256x256xbf16>
    %cst_135 = arith.constant dense<0.000000e+00> : vector<16x256xf32>
    %171 = tpu.matmul %168, %170, %cst_135 {dimension_numbers = #tpu.dot_dimension_numbers<[1], [0], [0], [1], [0, 0, 1, 1], [], []>} : vector<16x256xbf16>, vector<256x256xbf16>, vector<16x256xf32> -> vector<16x256xf32>
    %c17 = arith.constant 17 : index
    %c0_136 = arith.constant 0 : index
    %172 = vector.load %arg4[%c17, %c0_136] : memref<24x256xf32, #tpu.memory_space<vmem>>, vector<1x256xf32>
    %173 = vector.broadcast %172 : vector<1x256xf32> to vector<16x256xf32>
    %174 = arith.addf %171, %173 : vector<16x256xf32>
    %cst_137 = arith.constant 0.000000e+00 : f32
    %175 = vector.broadcast %cst_137 : f32 to vector<16x256xf32>
    %176 = arith.maximumf %174, %175 : vector<16x256xf32>
    %177 = arith.truncf %176 : vector<16x256xf32> to vector<16x256xbf16>
    %c4_138 = arith.constant 4 : index
    %c1_139 = arith.constant 1 : index
    %c0_140 = arith.constant 0 : index
    %c0_141 = arith.constant 0 : index
    %178 = vector.load %arg3[%c4_138, %c1_139, %c0_140, %c0_141] : memref<6x3x256x256xbf16, #tpu.memory_space<vmem>>, vector<1x1x256x256xbf16>
    %179 = vector.shape_cast %178 : vector<1x1x256x256xbf16> to vector<256x256xbf16>
    %cst_142 = arith.constant dense<0.000000e+00> : vector<16x256xf32>
    %180 = tpu.matmul %177, %179, %cst_142 {dimension_numbers = #tpu.dot_dimension_numbers<[1], [0], [0], [1], [0, 0, 1, 1], [], []>} : vector<16x256xbf16>, vector<256x256xbf16>, vector<16x256xf32> -> vector<16x256xf32>
    %c18 = arith.constant 18 : index
    %c0_143 = arith.constant 0 : index
    %181 = vector.load %arg4[%c18, %c0_143] : memref<24x256xf32, #tpu.memory_space<vmem>>, vector<1x256xf32>
    %182 = vector.broadcast %181 : vector<1x256xf32> to vector<16x256xf32>
    %183 = arith.addf %180, %182 : vector<16x256xf32>
    %cst_144 = arith.constant 0.000000e+00 : f32
    %184 = vector.broadcast %cst_144 : f32 to vector<16x256xf32>
    %185 = arith.maximumf %183, %184 : vector<16x256xf32>
    %186 = arith.truncf %185 : vector<16x256xf32> to vector<16x256xbf16>
    %c4_145 = arith.constant 4 : index
    %c2_146 = arith.constant 2 : index
    %c0_147 = arith.constant 0 : index
    %c0_148 = arith.constant 0 : index
    %187 = vector.load %arg3[%c4_145, %c2_146, %c0_147, %c0_148] : memref<6x3x256x256xbf16, #tpu.memory_space<vmem>>, vector<1x1x256x256xbf16>
    %188 = vector.shape_cast %187 : vector<1x1x256x256xbf16> to vector<256x256xbf16>
    %cst_149 = arith.constant dense<0.000000e+00> : vector<16x256xf32>
    %189 = tpu.matmul %186, %188, %cst_149 {dimension_numbers = #tpu.dot_dimension_numbers<[1], [0], [0], [1], [0, 0, 1, 1], [], []>} : vector<16x256xbf16>, vector<256x256xbf16>, vector<16x256xf32> -> vector<16x256xf32>
    %c19 = arith.constant 19 : index
    %c0_150 = arith.constant 0 : index
    %190 = vector.load %arg4[%c19, %c0_150] : memref<24x256xf32, #tpu.memory_space<vmem>>, vector<1x256xf32>
    %191 = vector.broadcast %190 : vector<1x256xf32> to vector<16x256xf32>
    %192 = arith.addf %189, %191 : vector<16x256xf32>
    %cst_151 = arith.constant 0.000000e+00 : f32
    %193 = vector.broadcast %cst_151 : f32 to vector<16x256xf32>
    %194 = arith.maximumf %192, %193 : vector<16x256xf32>
    %c4_152 = arith.constant 4 : index
    %c0_153 = arith.constant 0 : index
    %c0_154 = arith.constant 0 : index
    %195 = vector.load %arg5[%c4_152, %c0_153, %c0_154] : memref<6x256x128xf32, #tpu.memory_space<vmem>>, vector<1x256x128xf32>
    %196 = vector.shape_cast %195 : vector<1x256x128xf32> to vector<256x128xf32>
    %cst_155 = arith.constant dense<0.000000e+00> : vector<16x128xf32>
    %197 = tpu.matmul %194, %196, %cst_155 {dimension_numbers = #tpu.dot_dimension_numbers<[1], [0], [0], [1], [0, 0, 1, 1], [], []>} : vector<16x256xf32>, vector<256x128xf32>, vector<16x128xf32> -> vector<16x128xf32>
    %198 = arith.addf %159, %197 : vector<16x128xf32>
    %c5_156 = arith.constant 5 : index
    %c0_157 = arith.constant 0 : index
    %c0_158 = arith.constant 0 : index
    %199 = vector.load %arg2[%c5_156, %c0_157, %c0_158] : memref<6x128x256xf32, #tpu.memory_space<vmem>>, vector<1x128x256xf32>
    %200 = vector.shape_cast %199 : vector<1x128x256xf32> to vector<128x256xf32>
    %cst_159 = arith.constant dense<0.000000e+00> : vector<16x256xf32>
    %201 = tpu.matmul %198, %200, %cst_159 {dimension_numbers = #tpu.dot_dimension_numbers<[1], [0], [0], [1], [0, 0, 1, 1], [], []>} : vector<16x128xf32>, vector<128x256xf32>, vector<16x256xf32> -> vector<16x256xf32>
    %c20 = arith.constant 20 : index
    %c0_160 = arith.constant 0 : index
    %202 = vector.load %arg4[%c20, %c0_160] : memref<24x256xf32, #tpu.memory_space<vmem>>, vector<1x256xf32>
    %203 = vector.broadcast %202 : vector<1x256xf32> to vector<16x256xf32>
    %204 = arith.addf %201, %203 : vector<16x256xf32>
    %cst_161 = arith.constant 0.000000e+00 : f32
    %205 = vector.broadcast %cst_161 : f32 to vector<16x256xf32>
    %206 = arith.maximumf %204, %205 : vector<16x256xf32>
    %207 = arith.truncf %206 : vector<16x256xf32> to vector<16x256xbf16>
    %c5_162 = arith.constant 5 : index
    %c0_163 = arith.constant 0 : index
    %c0_164 = arith.constant 0 : index
    %c0_165 = arith.constant 0 : index
    %208 = vector.load %arg3[%c5_162, %c0_163, %c0_164, %c0_165] : memref<6x3x256x256xbf16, #tpu.memory_space<vmem>>, vector<1x1x256x256xbf16>
    %209 = vector.shape_cast %208 : vector<1x1x256x256xbf16> to vector<256x256xbf16>
    %cst_166 = arith.constant dense<0.000000e+00> : vector<16x256xf32>
    %210 = tpu.matmul %207, %209, %cst_166 {dimension_numbers = #tpu.dot_dimension_numbers<[1], [0], [0], [1], [0, 0, 1, 1], [], []>} : vector<16x256xbf16>, vector<256x256xbf16>, vector<16x256xf32> -> vector<16x256xf32>
    %c21 = arith.constant 21 : index
    %c0_167 = arith.constant 0 : index
    %211 = vector.load %arg4[%c21, %c0_167] : memref<24x256xf32, #tpu.memory_space<vmem>>, vector<1x256xf32>
    %212 = vector.broadcast %211 : vector<1x256xf32> to vector<16x256xf32>
    %213 = arith.addf %210, %212 : vector<16x256xf32>
    %cst_168 = arith.constant 0.000000e+00 : f32
    %214 = vector.broadcast %cst_168 : f32 to vector<16x256xf32>
    %215 = arith.maximumf %213, %214 : vector<16x256xf32>
    %216 = arith.truncf %215 : vector<16x256xf32> to vector<16x256xbf16>
    %c5_169 = arith.constant 5 : index
    %c1_170 = arith.constant 1 : index
    %c0_171 = arith.constant 0 : index
    %c0_172 = arith.constant 0 : index
    %217 = vector.load %arg3[%c5_169, %c1_170, %c0_171, %c0_172] : memref<6x3x256x256xbf16, #tpu.memory_space<vmem>>, vector<1x1x256x256xbf16>
    %218 = vector.shape_cast %217 : vector<1x1x256x256xbf16> to vector<256x256xbf16>
    %cst_173 = arith.constant dense<0.000000e+00> : vector<16x256xf32>
    %219 = tpu.matmul %216, %218, %cst_173 {dimension_numbers = #tpu.dot_dimension_numbers<[1], [0], [0], [1], [0, 0, 1, 1], [], []>} : vector<16x256xbf16>, vector<256x256xbf16>, vector<16x256xf32> -> vector<16x256xf32>
    %c22 = arith.constant 22 : index
    %c0_174 = arith.constant 0 : index
    %220 = vector.load %arg4[%c22, %c0_174] : memref<24x256xf32, #tpu.memory_space<vmem>>, vector<1x256xf32>
    %221 = vector.broadcast %220 : vector<1x256xf32> to vector<16x256xf32>
    %222 = arith.addf %219, %221 : vector<16x256xf32>
    %cst_175 = arith.constant 0.000000e+00 : f32
    %223 = vector.broadcast %cst_175 : f32 to vector<16x256xf32>
    %224 = arith.maximumf %222, %223 : vector<16x256xf32>
    %225 = arith.truncf %224 : vector<16x256xf32> to vector<16x256xbf16>
    %c5_176 = arith.constant 5 : index
    %c2_177 = arith.constant 2 : index
    %c0_178 = arith.constant 0 : index
    %c0_179 = arith.constant 0 : index
    %226 = vector.load %arg3[%c5_176, %c2_177, %c0_178, %c0_179] : memref<6x3x256x256xbf16, #tpu.memory_space<vmem>>, vector<1x1x256x256xbf16>
    %227 = vector.shape_cast %226 : vector<1x1x256x256xbf16> to vector<256x256xbf16>
    %cst_180 = arith.constant dense<0.000000e+00> : vector<16x256xf32>
    %228 = tpu.matmul %225, %227, %cst_180 {dimension_numbers = #tpu.dot_dimension_numbers<[1], [0], [0], [1], [0, 0, 1, 1], [], []>} : vector<16x256xbf16>, vector<256x256xbf16>, vector<16x256xf32> -> vector<16x256xf32>
    %c23 = arith.constant 23 : index
    %c0_181 = arith.constant 0 : index
    %229 = vector.load %arg4[%c23, %c0_181] : memref<24x256xf32, #tpu.memory_space<vmem>>, vector<1x256xf32>
    %230 = vector.broadcast %229 : vector<1x256xf32> to vector<16x256xf32>
    %231 = arith.addf %228, %230 : vector<16x256xf32>
    %cst_182 = arith.constant 0.000000e+00 : f32
    %232 = vector.broadcast %cst_182 : f32 to vector<16x256xf32>
    %233 = arith.maximumf %231, %232 : vector<16x256xf32>
    %c5_183 = arith.constant 5 : index
    %c0_184 = arith.constant 0 : index
    %c0_185 = arith.constant 0 : index
    %234 = vector.load %arg5[%c5_183, %c0_184, %c0_185] : memref<6x256x128xf32, #tpu.memory_space<vmem>>, vector<1x256x128xf32>
    %235 = vector.shape_cast %234 : vector<1x256x128xf32> to vector<256x128xf32>
    %cst_186 = arith.constant dense<0.000000e+00> : vector<16x128xf32>
    %236 = tpu.matmul %233, %235, %cst_186 {dimension_numbers = #tpu.dot_dimension_numbers<[1], [0], [0], [1], [0, 0, 1, 1], [], []>} : vector<16x256xf32>, vector<256x128xf32>, vector<16x128xf32> -> vector<16x128xf32>
    %237 = arith.addf %198, %236 : vector<16x128xf32>
    %c0_187 = arith.constant 0 : index
    %c0_188 = arith.constant 0 : index
    %238 = vector.load %arg6[%c0_187, %c0_188] : memref<16x128xf32, #tpu.memory_space<vmem>>, vector<16x128xf32>
    tpu.vector_store %arg6[%c0_187, %c0_188], %237 {strides = array<i32>} : memref<16x128xf32, #tpu.memory_space<vmem>>, vector<16x128xf32>,
    return
  }
  func.func @transform_0(%arg0: i32) -> (i32, i32) {
    %c0_i32 = arith.constant 0 : i32
    %c0_i32_0 = arith.constant 0 : i32
    return %arg0, %c0_i32 : i32, i32
  }
  func.func @transform_1(%arg0: i32) -> (i32, i32, i32) {
    %c0_i32 = arith.constant 0 : i32
    %c0_i32_0 = arith.constant 0 : i32
    %c0_i32_1 = arith.constant 0 : i32
    %c0_i32_2 = arith.constant 0 : i32
    return %c0_i32, %c0_i32_0, %c0_i32_1 : i32, i32, i32
  }
  func.func @transform_2(%arg0: i32) -> (i32, i32, i32, i32) {
    %c0_i32 = arith.constant 0 : i32
    %c0_i32_0 = arith.constant 0 : i32
    %c0_i32_1 = arith.constant 0 : i32
    %c0_i32_2 = arith.constant 0 : i32
    %c0_i32_3 = arith.constant 0 : i32
    return %c0_i32, %c0_i32_0, %c0_i32_1, %c0_i32_2 : i32, i32, i32, i32
  }
  func.func @transform_3(%arg0: i32) -> (i32, i32) {
    %c0_i32 = arith.constant 0 : i32
    %c0_i32_0 = arith.constant 0 : i32
    %c0_i32_1 = arith.constant 0 : i32
    return %c0_i32, %c0_i32_0 : i32, i32
  }
  func.func @transform_4(%arg0: i32) -> (i32, i32, i32) {
    %c0_i32 = arith.constant 0 : i32
    %c0_i32_0 = arith.constant 0 : i32
    %c0_i32_1 = arith.constant 0 : i32
    %c0_i32_2 = arith.constant 0 : i32
    return %c0_i32, %c0_i32_0, %c0_i32_1 : i32, i32, i32
  }
  func.func @transform_5(%arg0: i32) -> (i32, i32) {
    %c0_i32 = arith.constant 0 : i32
    %c0_i32_0 = arith.constant 0 : i32
    return %arg0, %c0_i32 : i32, i32
  }
}

</mosaic_0001>

<llo_original>
// kernel: tpu_custom_call.1
$region0: #{tpu_custom_call.1}
  #allocation0 [shape = 'u32[]', space=smem, size = 0x4, offset = 0x4, fixed_abs, tag = 'smem constant byte address 0x4 - core index']
  #allocation1 [shape = 'u32[144,128]{1,0:T(1,128)}', space=vmem, size = 0x12000, scoped, tag = 'internal scratch']
  %s0 = inlined_call_operand.hbm [shape: f32[16,10], index: 0, kind: input, shape index: {}]
  %s1 = inlined_call_operand.hbm [shape: f32[6,128,256], index: 1, kind: input, shape index: {}]
  %s2 = inlined_call_operand.hbm [shape: bf16[6,3,256,256], index: 2, kind: input, shape index: {}]
  %s3 = inlined_call_operand.hbm [shape: f32[24,256], index: 3, kind: input, shape index: {}]
  %s4 = inlined_call_operand.hbm [shape: f32[6,256,128], index: 4, kind: input, shape index: {}]
  %s5 = inlined_call_operand.hbm [shape: f32[16,128], index: 5, kind: output, shape index: {}]
  %s6 = sld [smem:[#allocation0]]
  $region50: #{tpu_custom_call.1} parent=0
    _
  %s8 = ssub.s32 1, %s6
  %s9 = scalar_select 0, %s8, %s6
  $region1: #{tpu_custom_call.1} parent=0
    #allocation2 [shape = 'u8[8192]{0}', space=vmem, size = 0x2000, scoped, tag = 'input window, operand 0, single buffered']
    #allocation3 [shape = 's32[1]{0}', space=sflag, size = 0x4, scoped, tag = 'scoped memory for tpu_custom_call.1']
    #allocation4 [shape = 's32[1]{0}', space=sflag, size = 0x4, scoped, tag = 'scoped memory for tpu_custom_call.1']
    #allocation5 [shape = 'u8[786432]{0}', space=vmem, size = 0xc0000, scoped, tag = 'input window, operand 1, single buffered']
    #allocation6 [shape = 's32[1]{0}', space=sflag, size = 0x4, scoped, tag = 'scoped memory for tpu_custom_call.1']
    #allocation7 [shape = 'u8[2359296]{0}', space=vmem, size = 0x240000, scoped, tag = 'input window, operand 2, single buffered']
    #allocation8 [shape = 'u8[24576]{0}', space=vmem, size = 0x6000, scoped, tag = 'input window, operand 3, single buffered']
    #allocation9 [shape = 's32[1]{0}', space=sflag, size = 0x4, scoped, tag = 'scoped memory for tpu_custom_call.1']
    #allocation10 [shape = 'u8[786432]{0}', space=vmem, size = 0xc0000, scoped, tag = 'input window, operand 4, single buffered']
    #allocation11 [shape = 'u8[8192]{0}', space=vmem, size = 0x2000, scoped, tag = 'output window, operand 0, single buffered']
    %10 = vsyncpa [#allocation3], 0
    %11 = vsyncpa [#allocation6], 0
    %12 = vsyncpa [#allocation9], 0
    %13 = vsyncpa [#allocation4], 0
    // Predicated region
    $region2: #{tpu_custom_call.1} parent=1 // pred_check
      _
    $region3: #{tpu_custom_call.1} parent=1 // pred_check_branch
      %15 = sbr.rel (0) target = $region5
    $region4: #{tpu_custom_call.1} parent=1 // pred_region
      %s17 = ssub.s32 256, 256
      %18 = vsyncadd [#allocation3], %s17
      %s19 = sshll.u32 [#allocation2], 4
      %s20 = int_to_ptr.vmem [resolvable:$true] %s19
      %25 = dma.hbm_to_vmem [thread:$0]  %s0, 256, %s20, [#allocation3], 128, 128, 8
    $region5: #{tpu_custom_call.1} parent=1 // pred_fallthru
      _
    // Predicated region
    $region6: #{tpu_custom_call.1} parent=1 // pred_check
      _
    $region7: #{tpu_custom_call.1} parent=1 // pred_check_branch
      %27 = sbr.rel (0) target = $region9
    $region8: #{tpu_custom_call.1} parent=1 // pred_region
      %s29 = ssub.s32 24576, 24576
      %30 = vsyncadd [#allocation6], %s29
      %s31 = sshll.u32 [#allocation5], 4
      %s32 = int_to_ptr.vmem [resolvable:$true] %s31
      %37 = dma.hbm_to_vmem [thread:$0]  %s1, 24576, %s32, [#allocation6], 256, 256, 16
    $region9: #{tpu_custom_call.1} parent=1 // pred_fallthru
      _
    // Predicated region
    $region10: #{tpu_custom_call.1} parent=1 // pred_check
      _
    $region11: #{tpu_custom_call.1} parent=1 // pred_check_branch
      %39 = sbr.rel (0) target = $region13
    $region12: #{tpu_custom_call.1} parent=1 // pred_region
      %s41 = ssub.s32 73728, 73728
      %42 = vsyncadd [#allocation6], %s41
      %s43 = sshll.u32 [#allocation7], 4
      %s44 = int_to_ptr.vmem [resolvable:$true] %s43
      %49 = dma.hbm_to_vmem [thread:$0]  %s2, 73728, %s44, [#allocation6], 128, 128, 8
    $region13: #{tpu_custom_call.1} parent=1 // pred_fallthru
      _
    // Predicated region
    $region14: #{tpu_custom_call.1} parent=1 // pred_check
      _
    $region15: #{tpu_custom_call.1} parent=1 // pred_check_branch
      %51 = sbr.rel (0) target = $region17
    $region16: #{tpu_custom_call.1} parent=1 // pred_region
      %s53 = ssub.s32 768, 768
      %54 = vsyncadd [#allocation9], %s53
      %s55 = sshll.u32 [#allocation8], 4
      %s56 = int_to_ptr.vmem [resolvable:$true] %s55
      %61 = dma.hbm_to_vmem [thread:$0]  %s3, 768, %s56, [#allocation9], 256, 256, 16
    $region17: #{tpu_custom_call.1} parent=1 // pred_fallthru
      _
    // Predicated region
    $region18: #{tpu_custom_call.1} parent=1 // pred_check
      _
    $region19: #{tpu_custom_call.1} parent=1 // pred_check_branch
      %63 = sbr.rel (0) target = $region21
    $region20: #{tpu_custom_call.1} parent=1 // pred_region
      %s65 = ssub.s32 24576, 24576
      %66 = vsyncadd [#allocation9], %s65
      %s67 = sshll.u32 [#allocation10], 4
      %s68 = int_to_ptr.vmem [resolvable:$true] %s67
      %73 = dma.hbm_to_vmem [thread:$0]  %s4, 24576, %s68, [#allocation9], 128, 128, 8
    $region21: #{tpu_custom_call.1} parent=1 // pred_fallthru
      _
    // Predicated region
    $region22: #{tpu_custom_call.1} parent=1 // pred_check
      _
    $region23: #{tpu_custom_call.1} parent=1 // pred_check_branch
      %75 = sbr.rel (0) target = $region25
    $region24: #{tpu_custom_call.1} parent=1 // pred_region
      %76 = dma.done [#allocation3], 256
    $region25: #{tpu_custom_call.1} parent=1 // pred_fallthru
      _
    // Predicated region
    $region26: #{tpu_custom_call.1} parent=1 // pred_check
      _
    $region27: #{tpu_custom_call.1} parent=1 // pred_check_branch
      %78 = sbr.rel (0) target = $region29
    $region28: #{tpu_custom_call.1} parent=1 // pred_region
      %79 = dma.done [#allocation6], 24576
    $region29: #{tpu_custom_call.1} parent=1 // pred_fallthru
      _
    // Predicated region
    $region30: #{tpu_custom_call.1} parent=1 // pred_check
      _
    $region31: #{tpu_custom_call.1} parent=1 // pred_check_branch
      %81 = sbr.rel (0) target = $region33
    $region32: #{tpu_custom_call.1} parent=1 // pred_region
      %82 = dma.done [#allocation6], 73728
    $region33: #{tpu_custom_call.1} parent=1 // pred_fallthru
      _
    // Predicated region
    $region34: #{tpu_custom_call.1} parent=1 // pred_check
      _
    $region35: #{tpu_custom_call.1} parent=1 // pred_check_branch
      %84 = sbr.rel (0) target = $region37
    $region36: #{tpu_custom_call.1} parent=1 // pred_region
      %85 = dma.done [#allocation9], 768
    $region37: #{tpu_custom_call.1} parent=1 // pred_fallthru
      _
    // Predicated region
    $region38: #{tpu_custom_call.1} parent=1 // pred_check
      _
    $region39: #{tpu_custom_call.1} parent=1 // pred_check_branch
      %87 = sbr.rel (0) target = $region41
    $region40: #{tpu_custom_call.1} parent=1 // pred_region
      %88 = dma.done [#allocation9], 24576
    $region41: #{tpu_custom_call.1} parent=1 // pred_fallthru
      _
    %v89 = vld [vmem:[#allocation2] sm:$0xff]
    %v90 = vld [vmem:[#allocation2 + $0x8] sm:$0xff]
    %vm91 = vcmask 80896
    %v92 = vsel %vm91, %v89, 0.0
    %v93 = vsel %vm91, %v90, 0.0
    %v94 = vld [vmem:[#allocation5] sm:$0xff]
    %v95 = vld [vmem:[#allocation5 + $0x8] sm:$0xff]
    %v96 = vld [vmem:[#allocation5 + $0x10] sm:$0xff]
    %v97 = vld [vmem:[#allocation5 + $0x18] sm:$0xff]
    %v98 = vld [vmem:[#allocation5 + $0x20] sm:$0xff]
    %v99 = vld [vmem:[#allocation5 + $0x28] sm:$0xff]
    %v100 = vld [vmem:[#allocation5 + $0x30] sm:$0xff]
    %v101 = vld [vmem:[#allocation5 + $0x38] sm:$0xff]
    %v102 = vld [vmem:[#allocation5 + $0x40] sm:$0xff]
    %v103 = vld [vmem:[#allocation5 + $0x48] sm:$0xff]
    %v104 = vld [vmem:[#allocation5 + $0x50] sm:$0xff]
    %v105 = vld [vmem:[#allocation5 + $0x58] sm:$0xff]
    %v106 = vld [vmem:[#allocation5 + $0x60] sm:$0xff]
    %v107 = vld [vmem:[#allocation5 + $0x68] sm:$0xff]
    %v108 = vld [vmem:[#allocation5 + $0x70] sm:$0xff]
    %v109 = vld [vmem:[#allocation5 + $0x78] sm:$0xff]
    %v110 = vld [vmem:[#allocation5 + $0x80] sm:$0xff]
    %v111 = vld [vmem:[#allocation5 + $0x88] sm:$0xff]
    %v112 = vld [vmem:[#allocation5 + $0x90] sm:$0xff]
    %v113 = vld [vmem:[#allocation5 + $0x98] sm:$0xff]
    %v114 = vld [vmem:[#allocation5 + $0xa0] sm:$0xff]
    %v115 = vld [vmem:[#allocation5 + $0xa8] sm:$0xff]
    %v116 = vld [vmem:[#allocation5 + $0xb0] sm:$0xff]
    %v117 = vld [vmem:[#allocation5 + $0xb8] sm:$0xff]
    %v118 = vld [vmem:[#allocation5 + $0xc0] sm:$0xff]
    %v119 = vld [vmem:[#allocation5 + $0xc8] sm:$0xff]
    %v120 = vld [vmem:[#allocation5 + $0xd0] sm:$0xff]
    %v121 = vld [vmem:[#allocation5 + $0xd8] sm:$0xff]
    %v122 = vld [vmem:[#allocation5 + $0xe0] sm:$0xff]
    %v123 = vld [vmem:[#allocation5 + $0xe8] sm:$0xff]
    %v124 = vld [vmem:[#allocation5 + $0xf0] sm:$0xff]
    %v125 = vld [vmem:[#allocation5 + $0xf8] sm:$0xff]
    %v126 = vld [vmem:[#allocation8] ss:$8 sm:$0x3]
    %v128 = vlaneseq
    %v129 = vshrl.u32 %v128, 7
    %v130 = vsub.s32 0, %v129
    %v131 = vrot.slane %v126, %v130
    %v132 = vlaneseq
    %v133 = vshrl.u32 %v132, 7
    %v134 = vsub.s32 1, %v133
    %v135 = vrot.slane %v126, %v134
    %138 = vmatprep.subr.mxu0 %v95
    %139 = vmatpush1.msra.mxu0 %v94
    %140 = vmatprep.subr.mxu0 %v97
    %141 = vmatpush1.msra.mxu0 %v96
    %142 = vmatprep.subr.mxu0 %v99
    %143 = vmatpush1.msra.mxu0 %v98
    %144 = vmatprep.subr.mxu0 %v101
    %145 = vmatpush1.msra.mxu0 %v100
    %146 = vmatprep.subr.mxu0 %v103
    %147 = vmatpush1.msra.mxu0 %v102
    %148 = vmatprep.subr.mxu0 %v105
    %149 = vmatpush1.msra.mxu0 %v104
    %150 = vmatprep.subr.mxu0 %v107
    %151 = vmatpush1.msra.mxu0 %v106
    %152 = vmatprep.subr.mxu0 %v109
    %153 = vmatpush1.msra.mxu0 %v108
    %154 = vmatprep.subr.mxu0 %v111
    %155 = vmatpush1.msra.mxu0 %v110
    %156 = vmatprep.subr.mxu0 %v113
    %157 = vmatpush1.msra.mxu0 %v112
    %158 = vmatprep.subr.mxu0 %v115
    %159 = vmatpush1.msra.mxu0 %v114
    %160 = vmatprep.subr.mxu0 %v117
    %161 = vmatpush1.msra.mxu0 %v116
    %162 = vmatprep.subr.mxu0 %v119
    %163 = vmatpush1.msra.mxu0 %v118
    %164 = vmatprep.subr.mxu0 %v121
    %165 = vmatpush1.msra.mxu0 %v120
    %166 = vmatprep.subr.mxu0 %v123
    %167 = vmatpush1.msra.mxu0 %v122
    %168 = vmatprep.subr.mxu0 %v125
    %169 = vmatpush1.msra.mxu0 %v124
    %170 = vmatprep.subr.mxu0 0.0
    %171 = vmatpush1.msra.mxu0 0.0
    %172 = vmatprep.subr.mxu0 0.0
    %173 = vmatpush1.msra.mxu0 0.0
    %174 = vmatprep.subr.mxu0 0.0
    %175 = vmatpush1.msra.mxu0 0.0
    %176 = vmatprep.subr.mxu0 0.0
    %177 = vmatpush1.msra.mxu0 0.0
    %178 = vmatprep.subr.mxu0 0.0
    %179 = vmatpush1.msra.mxu0 0.0
    %180 = vmatprep.subr.mxu0 0.0
    %181 = vmatpush1.msra.mxu0 0.0
    %182 = vmatprep.subr.mxu0 0.0
    %183 = vmatpush1.msra.mxu0 0.0
    %184 = vmatprep.subr.mxu0 0.0
    %185 = vmatpush1.msra.mxu0 0.0
    %186 = vmatprep.subr.mxu0 0.0
    %187 = vmatpush1.msra.mxu0 0.0
    %188 = vmatprep.subr.mxu0 0.0
    %189 = vmatpush1.msra.mxu0 0.0
    %190 = vmatprep.subr.mxu0 0.0
    %191 = vmatpush1.msra.mxu0 0.0
    %192 = vmatprep.subr.mxu0 0.0
    %193 = vmatpush1.msra.mxu0 0.0
    %194 = vmatprep.subr.mxu0 0.0
    %195 = vmatpush1.msra.mxu0 0.0
    %196 = vmatprep.subr.mxu0 0.0
    %197 = vmatpush1.msra.mxu0 0.0
    %198 = vmatprep.subr.mxu0 0.0
    %199 = vmatpush1.msra.mxu0 0.0
    %200 = vmatprep.subr.mxu0 0.0
    %201 = vmatpush1.msra.mxu0 0.0
    %202 = vmatprep.mubr.f32.mxu0 0.0
    %203 = vmatmul.mubr.f32.gmra.mrb[0].mxu0 %v92
    %v204 = vpop.f32.mrb[0].mxu0
    %v205 = vadd.f32 %v131, %v204
    %v206 = vpop.f32.mrb[0].mxu0
    %v207 = vadd.f32 %v135, %v206
    %208 = vmatprep.mubr.f32.mxu0 0.0
    %209 = vmatmul.mubr.f32.gmra.mrb[0].mxu0 %v93
    %v210 = vpop.f32.mrb[0].mxu0
    %v211 = vadd.f32 %v131, %v210
    %v212 = vpop.f32.mrb[0].mxu0
    %v213 = vadd.f32 %v135, %v212
    %214 = vdwg.mxu0
    %v215 = vmax.f32 %v205, 0.0
    %v216 = vmax.f32 %v207, 0.0
    %v217 = vmax.f32 %v211, 0.0
    %v218 = vmax.f32 %v213, 0.0
    %v219 = vpack.c.bf16 %v217, %v215
    %v220 = vpack.c.bf16 %v218, %v216
    %v221 = vld [vmem:[#allocation7] sm:$0xff]
    %v222 = vld [vmem:[#allocation7 + $0x8] sm:$0xff]
    %v223 = vld [vmem:[#allocation7 + $0x10] sm:$0xff]
    %v224 = vld [vmem:[#allocation7 + $0x18] sm:$0xff]
    %v225 = vld [vmem:[#allocation7 + $0x20] sm:$0xff]
    %v226 = vld [vmem:[#allocation7 + $0x28] sm:$0xff]
    %v227 = vld [vmem:[#allocation7 + $0x30] sm:$0xff]
    %v228 = vld [vmem:[#allocation7 + $0x38] sm:$0xff]
    %v229 = vld [vmem:[#allocation7 + $0x40] sm:$0xff]
    %v230 = vld [vmem:[#allocation7 + $0x48] sm:$0xff]
    %v231 = vld [vmem:[#allocation7 + $0x50] sm:$0xff]
    %v232 = vld [vmem:[#allocation7 + $0x58] sm:$0xff]
    %v233 = vld [vmem:[#allocation7 + $0x60] sm:$0xff]
    %v234 = vld [vmem:[#allocation7 + $0x68] sm:$0xff]
    %v235 = vld [vmem:[#allocation7 + $0x70] sm:$0xff]
    %v236 = vld [vmem:[#allocation7 + $0x78] sm:$0xff]
    %v237 = vld [vmem:[#allocation7 + $0x80] sm:$0xff]
    %v238 = vld [vmem:[#allocation7 + $0x88] sm:$0xff]
    %v239 = vld [vmem:[#allocation7 + $0x90] sm:$0xff]
    %v240 = vld [vmem:[#allocation7 + $0x98] sm:$0xff]
    %v241 = vld [vmem:[#allocation7 + $0xa0] sm:$0xff]
    %v242 = vld [vmem:[#allocation7 + $0xa8] sm:$0xff]
    %v243 = vld [vmem:[#allocation7 + $0xb0] sm:$0xff]
    %v244 = vld [vmem:[#allocation7 + $0xb8] sm:$0xff]
    %v245 = vld [vmem:[#allocation7 + $0xc0] sm:$0xff]
    %v246 = vld [vmem:[#allocation7 + $0xc8] sm:$0xff]
    %v247 = vld [vmem:[#allocation7 + $0xd0] sm:$0xff]
    %v248 = vld [vmem:[#allocation7 + $0xd8] sm:$0xff]
    %v249 = vld [vmem:[#allocation7 + $0xe0] sm:$0xff]
    %v250 = vld [vmem:[#allocation7 + $0xe8] sm:$0xff]
    %v251 = vld [vmem:[#allocation7 + $0xf0] sm:$0xff]
    %v252 = vld [vmem:[#allocation7 + $0xf8] sm:$0xff]
    %s253 = scalar_lea.vmem [#allocation8], 1
    %v254 = vld [vmem:[%s253] ss:$8 sm:$0x3]
    %v256 = vlaneseq
    %v257 = vshrl.u32 %v256, 7
    %v258 = vsub.s32 0, %v257
    %v259 = vrot.slane %v254, %v258
    %v260 = vlaneseq
    %v261 = vshrl.u32 %v260, 7
    %v262 = vsub.s32 1, %v261
    %v263 = vrot.slane %v254, %v262
    %v298 = vunpack.c.l.b16 %v221
    %v299 = vunpack.c.h.b16 %v221
    %v300 = vunpack.c.l.b16 %v222
    %v301 = vunpack.c.h.b16 %v222
    %v302 = vunpack.c.l.b16 %v223
    %v303 = vunpack.c.h.b16 %v223
    %v304 = vunpack.c.l.b16 %v224
    %v305 = vunpack.c.h.b16 %v224
    %v306 = vunpack.c.l.b16 %v225
    %v307 = vunpack.c.h.b16 %v225
    %v308 = vunpack.c.l.b16 %v226
    %v309 = vunpack.c.h.b16 %v226
    %v310 = vunpack.c.l.b16 %v227
    %v311 = vunpack.c.h.b16 %v227
    %v312 = vunpack.c.l.b16 %v228
    %v313 = vunpack.c.h.b16 %v228
    %v314 = vunpack.c.l.b16 %v229
    %v315 = vunpack.c.h.b16 %v229
    %v316 = vunpack.c.l.b16 %v230
    %v317 = vunpack.c.h.b16 %v230
    %v318 = vunpack.c.l.b16 %v231
    %v319 = vunpack.c.h.b16 %v231
    %v320 = vunpack.c.l.b16 %v232
    %v321 = vunpack.c.h.b16 %v232
    %v322 = vunpack.c.l.b16 %v233
    %v323 = vunpack.c.h.b16 %v233
    %v324 = vunpack.c.l.b16 %v234
    %v325 = vunpack.c.h.b16 %v234
    %v326 = vunpack.c.l.b16 %v235
    %v327 = vunpack.c.h.b16 %v235
    %v328 = vunpack.c.l.b16 %v236
    %v329 = vunpack.c.h.b16 %v236
    %v330 = vunpack.c.l.b16 %v237
    %v331 = vunpack.c.h.b16 %v237
    %v332 = vunpack.c.l.b16 %v238
    %v333 = vunpack.c.h.b16 %v238
    %v334 = vunpack.c.l.b16 %v239
    %v335 = vunpack.c.h.b16 %v239
    %v336 = vunpack.c.l.b16 %v240
    %v337 = vunpack.c.h.b16 %v240
    %v338 = vunpack.c.l.b16 %v241
    %v339 = vunpack.c.h.b16 %v241
    %v340 = vunpack.c.l.b16 %v242
    %v341 = vunpack.c.h.b16 %v242
    %v342 = vunpack.c.l.b16 %v243
    %v343 = vunpack.c.h.b16 %v243
    %v344 = vunpack.c.l.b16 %v244
    %v345 = vunpack.c.h.b16 %v244
    %v346 = vunpack.c.l.b16 %v245
    %v347 = vunpack.c.h.b16 %v245
    %v348 = vunpack.c.l.b16 %v246
    %v349 = vunpack.c.h.b16 %v246
    %v350 = vunpack.c.l.b16 %v247
    %v351 = vunpack.c.h.b16 %v247
    %v352 = vunpack.c.l.b16 %v248
    %v353 = vunpack.c.h.b16 %v248
    %v354 = vunpack.c.l.b16 %v249
    %v355 = vunpack.c.h.b16 %v249
    %v356 = vunpack.c.l.b16 %v250
    %v357 = vunpack.c.h.b16 %v250
    %v358 = vunpack.c.l.b16 %v251
    %v359 = vunpack.c.h.b16 %v251
    %v360 = vunpack.c.l.b16 %v252
    %v361 = vunpack.c.h.b16 %v252
    %v362 = vpack.c.b16 %v300, %v298
    %v363 = vpack.c.b16 %v301, %v299
    %v364 = vpack.c.b16 %v304, %v302
    %v365 = vpack.c.b16 %v305, %v303
    %v366 = vpack.c.b16 %v308, %v306
    %v367 = vpack.c.b16 %v309, %v307
    %v368 = vpack.c.b16 %v312, %v310
    %v369 = vpack.c.b16 %v313, %v311
    %v370 = vpack.c.b16 %v316, %v314
    %v371 = vpack.c.b16 %v317, %v315
    %v372 = vpack.c.b16 %v320, %v318
    %v373 = vpack.c.b16 %v321, %v319
    %v374 = vpack.c.b16 %v324, %v322
    %v375 = vpack.c.b16 %v325, %v323
    %v376 = vpack.c.b16 %v328, %v326
    %v377 = vpack.c.b16 %v329, %v327
    %v378 = vpack.c.b16 %v332, %v330
    %v379 = vpack.c.b16 %v333, %v331
    %v380 = vpack.c.b16 %v336, %v334
    %v381 = vpack.c.b16 %v337, %v335
    %v382 = vpack.c.b16 %v340, %v338
    %v383 = vpack.c.b16 %v341, %v339
    %v384 = vpack.c.b16 %v344, %v342
    %v385 = vpack.c.b16 %v345, %v343
    %v386 = vpack.c.b16 %v348, %v346
    %v387 = vpack.c.b16 %v349, %v347
    %v388 = vpack.c.b16 %v352, %v350
    %v389 = vpack.c.b16 %v353, %v351
    %v390 = vpack.c.b16 %v356, %v354
    %v391 = vpack.c.b16 %v357, %v355
    %v392 = vpack.c.b16 %v360, %v358
    %v393 = vpack.c.b16 %v361, %v359
    %426 = vmatprep.subr.bf16.mxu0 %v363
    %427 = vmatpush1.bf16.msra.mxu0 %v362
    %428 = vmatprep.subr.bf16.mxu0 %v365
    %429 = vmatpush1.bf16.msra.mxu0 %v364
    %430 = vmatprep.subr.bf16.mxu0 %v367
    %431 = vmatpush1.bf16.msra.mxu0 %v366
    %432 = vmatprep.subr.bf16.mxu0 %v369
    %433 = vmatpush1.bf16.msra.mxu0 %v368
    %434 = vmatprep.subr.bf16.mxu0 %v371
    %435 = vmatpush1.bf16.msra.mxu0 %v370
    %436 = vmatprep.subr.bf16.mxu0 %v373
    %437 = vmatpush1.bf16.msra.mxu0 %v372
    %438 = vmatprep.subr.bf16.mxu0 %v375
    %439 = vmatpush1.bf16.msra.mxu0 %v374
    %440 = vmatprep.subr.bf16.mxu0 %v377
    %441 = vmatpush1.bf16.msra.mxu0 %v376
    %442 = vmatprep.subr.bf16.mxu0 %v379
    %443 = vmatpush1.bf16.msra.mxu0 %v378
    %444 = vmatprep.subr.bf16.mxu0 %v381
    %445 = vmatpush1.bf16.msra.mxu0 %v380
    %446 = vmatprep.subr.bf16.mxu0 %v383
    %447 = vmatpush1.bf16.msra.mxu0 %v382
    %448 = vmatprep.subr.bf16.mxu0 %v385
    %449 = vmatpush1.bf16.msra.mxu0 %v384
    %450 = vmatprep.subr.bf16.mxu0 %v387
    %451 = vmatpush1.bf16.msra.mxu0 %v386
    %452 = vmatprep.subr.bf16.mxu0 %v389
    %453 = vmatpush1.bf16.msra.mxu0 %v388
    %454 = vmatprep.subr.bf16.mxu0 %v391
    %455 = vmatpush1.bf16.msra.mxu0 %v390
    %456 = vmatprep.subr.bf16.mxu0 %v393
    %457 = vmatpush1.bf16.msra.mxu0 %v392
    %458 = vmatprep.mubr.bf16.mxu0 %v220
    %459 = vmatmul.mubr.bf16.gmra.mrb[0].mxu0 %v219
    %v460 = vpop.f32.mrb[0].mxu0
    %v461 = vadd.f32 %v259, %v460
    %v462 = vpop.f32.mrb[0].mxu0
    %v463 = vadd.f32 %v263, %v462
    %v464 = vpop.f32.mrb[0].mxu0
    %v465 = vadd.f32 %v259, %v464
    %v466 = vpop.f32.mrb[0].mxu0
    %v467 = vadd.f32 %v263, %v466
    %468 = vdwg.mxu0
    %v469 = vmax.f32 %v461, 0.0
    %v470 = vmax.f32 %v463, 0.0
    %v471 = vmax.f32 %v465, 0.0
    %v472 = vmax.f32 %v467, 0.0
    %v473 = vpack.c.bf16 %v471, %v469
    %v474 = vpack.c.bf16 %v472, %v470
    %s475 = scalar_lea.vmem [#allocation7], 256
    %v476 = vld [vmem:[%s475] sm:$0xff]
    %v477 = vld [vmem:[%s475 + $0x8] sm:$0xff]
    %v478 = vld [vmem:[%s475 + $0x10] sm:$0xff]
    %v479 = vld [vmem:[%s475 + $0x18] sm:$0xff]
    %v480 = vld [vmem:[%s475 + $0x20] sm:$0xff]
    %v481 = vld [vmem:[%s475 + $0x28] sm:$0xff]
    %v482 = vld [vmem:[%s475 + $0x30] sm:$0xff]
    %v483 = vld [vmem:[%s475 + $0x38] sm:$0xff]
    %v484 = vld [vmem:[%s475 + $0x40] sm:$0xff]
    %v485 = vld [vmem:[%s475 + $0x48] sm:$0xff]
    %v486 = vld [vmem:[%s475 + $0x50] sm:$0xff]
    %v487 = vld [vmem:[%s475 + $0x58] sm:$0xff]
    %v488 = vld [vmem:[%s475 + $0x60] sm:$0xff]
    %v489 = vld [vmem:[%s475 + $0x68] sm:$0xff]
    %v490 = vld [vmem:[%s475 + $0x70] sm:$0xff]
    %v491 = vld [vmem:[%s475 + $0x78] sm:$0xff]
    %v492 = vld [vmem:[%s475 + $0x80] sm:$0xff]
    %v493 = vld [vmem:[%s475 + $0x88] sm:$0xff]
    %v494 = vld [vmem:[%s475 + $0x90] sm:$0xff]
    %v495 = vld [vmem:[%s475 + $0x98] sm:$0xff]
    %v496 = vld [vmem:[%s475 + $0xa0] sm:$0xff]
    %v497 = vld [vmem:[%s475 + $0xa8] sm:$0xff]
    %v498 = vld [vmem:[%s475 + $0xb0] sm:$0xff]
    %v499 = vld [vmem:[%s475 + $0xb8] sm:$0xff]
    %v500 = vld [vmem:[%s475 + $0xc0] sm:$0xff]
    %v501 = vld [vmem:[%s475 + $0xc8] sm:$0xff]
    %v502 = vld [vmem:[%s475 + $0xd0] sm:$0xff]
    %v503 = vld [vmem:[%s475 + $0xd8] sm:$0xff]
    %v504 = vld [vmem:[%s475 + $0xe0] sm:$0xff]
    %v505 = vld [vmem:[%s475 + $0xe8] sm:$0xff]
    %v506 = vld [vmem:[%s475 + $0xf0] sm:$0xff]
    %v507 = vld [vmem:[%s475 + $0xf8] sm:$0xff]
    %s508 = scalar_lea.vmem [#allocation8], 2
    %v509 = vld [vmem:[%s508] ss:$8 sm:$0x3]
    %v511 = vlaneseq
    %v512 = vshrl.u32 %v511, 7
    %v513 = vsub.s32 0, %v512
    %v514 = vrot.slane %v509, %v513
    %v515 = vlaneseq
    %v516 = vshrl.u32 %v515, 7
    %v517 = vsub.s32 1, %v516
    %v518 = vrot.slane %v509, %v517
    %v553 = vunpack.c.l.b16 %v476
    %v554 = vunpack.c.h.b16 %v476
    %v555 = vunpack.c.l.b16 %v477
    %v556 = vunpack.c.h.b16 %v477
    %v557 = vunpack.c.l.b16 %v478
    %v558 = vunpack.c.h.b16 %v478
    %v559 = vunpack.c.l.b16 %v479
    %v560 = vunpack.c.h.b16 %v479
    %v561 = vunpack.c.l.b16 %v480
    %v562 = vunpack.c.h.b16 %v480
    %v563 = vunpack.c.l.b16 %v481
    %v564 = vunpack.c.h.b16 %v481
    %v565 = vunpack.c.l.b16 %v482
    %v566 = vunpack.c.h.b16 %v482
    %v567 = vunpack.c.l.b16 %v483
    %v568 = vunpack.c.h.b16 %v483
    %v569 = vunpack.c.l.b16 %v484
    %v570 = vunpack.c.h.b16 %v484
    %v571 = vunpack.c.l.b16 %v485
    %v572 = vunpack.c.h.b16 %v485
    %v573 = vunpack.c.l.b16 %v486
    %v574 = vunpack.c.h.b16 %v486
    %v575 = vunpack.c.l.b16 %v487
    %v576 = vunpack.c.h.b16 %v487
    %v577 = vunpack.c.l.b16 %v488
    %v578 = vunpack.c.h.b16 %v488
    %v579 = vunpack.c.l.b16 %v489
    %v580 = vunpack.c.h.b16 %v489
    %v581 = vunpack.c.l.b16 %v490
    %v582 = vunpack.c.h.b16 %v490
    %v583 = vunpack.c.l.b16 %v491
    %v584 = vunpack.c.h.b16 %v491
    %v585 = vunpack.c.l.b16 %v492
    %v586 = vunpack.c.h.b16 %v492
    %v587 = vunpack.c.l.b16 %v493
    %v588 = vunpack.c.h.b16 %v493
    %v589 = vunpack.c.l.b16 %v494
    %v590 = vunpack.c.h.b16 %v494
    %v591 = vunpack.c.l.b16 %v495
    %v592 = vunpack.c.h.b16 %v495
    %v593 = vunpack.c.l.b16 %v496
    %v594 = vunpack.c.h.b16 %v496
    %v595 = vunpack.c.l.b16 %v497
    %v596 = vunpack.c.h.b16 %v497
    %v597 = vunpack.c.l.b16 %v498
    %v598 = vunpack.c.h.b16 %v498
    %v599 = vunpack.c.l.b16 %v499
    %v600 = vunpack.c.h.b16 %v499
    %v601 = vunpack.c.l.b16 %v500
    %v602 = vunpack.c.h.b16 %v500
    %v603 = vunpack.c.l.b16 %v501
    %v604 = vunpack.c.h.b16 %v501
    %v605 = vunpack.c.l.b16 %v502
    %v606 = vunpack.c.h.b16 %v502
    %v607 = vunpack.c.l.b16 %v503
    %v608 = vunpack.c.h.b16 %v503
    %v609 = vunpack.c.l.b16 %v504
    %v610 = vunpack.c.h.b16 %v504
    %v611 = vunpack.c.l.b16 %v505
    %v612 = vunpack.c.h.b16 %v505
    %v613 = vunpack.c.l.b16 %v506
    %v614 = vunpack.c.h.b16 %v506
    %v615 = vunpack.c.l.b16 %v507
    %v616 = vunpack.c.h.b16 %v507
    %v617 = vpack.c.b16 %v555, %v553
    %v618 = vpack.c.b16 %v556, %v554
    %v619 = vpack.c.b16 %v559, %v557
    %v620 = vpack.c.b16 %v560, %v558
    %v621 = vpack.c.b16 %v563, %v561
    %v622 = vpack.c.b16 %v564, %v562
    %v623 = vpack.c.b16 %v567, %v565
    %v624 = vpack.c.b16 %v568, %v566
    %v625 = vpack.c.b16 %v571, %v569
    %v626 = vpack.c.b16 %v572, %v570
    %v627 = vpack.c.b16 %v575, %v573
    %v628 = vpack.c.b16 %v576, %v574
    %v629 = vpack.c.b16 %v579, %v577
    %v630 = vpack.c.b16 %v580, %v578
    %v631 = vpack.c.b16 %v583, %v581
    %v632 = vpack.c.b16 %v584, %v582
    %v633 = vpack.c.b16 %v587, %v585
    %v634 = vpack.c.b16 %v588, %v586
    %v635 = vpack.c.b16 %v591, %v589
    %v636 = vpack.c.b16 %v592, %v590
    %v637 = vpack.c.b16 %v595, %v593
    %v638 = vpack.c.b16 %v596, %v594
    %v639 = vpack.c.b16 %v599, %v597
    %v640 = vpack.c.b16 %v600, %v598
    %v641 = vpack.c.b16 %v603, %v601
    %v642 = vpack.c.b16 %v604, %v602
    %v643 = vpack.c.b16 %v607, %v605
    %v644 = vpack.c.b16 %v608, %v606
    %v645 = vpack.c.b16 %v611, %v609
    %v646 = vpack.c.b16 %v612, %v610
    %v647 = vpack.c.b16 %v615, %v613
    %v648 = vpack.c.b16 %v616, %v614
    %681 = vmatprep.subr.bf16.mxu0 %v618
    %682 = vmatpush1.bf16.msra.mxu0 %v617
    %683 = vmatprep.subr.bf16.mxu0 %v620
    %684 = vmatpush1.bf16.msra.mxu0 %v619
    %685 = vmatprep.subr.bf16.mxu0 %v622
    %686 = vmatpush1.bf16.msra.mxu0 %v621
    %687 = vmatprep.subr.bf16.mxu0 %v624
    %688 = vmatpush1.bf16.msra.mxu0 %v623
    %689 = vmatprep.subr.bf16.mxu0 %v626
    %690 = vmatpush1.bf16.msra.mxu0 %v625
    %691 = vmatprep.subr.bf16.mxu0 %v628
    %692 = vmatpush1.bf16.msra.mxu0 %v627
    %693 = vmatprep.subr.bf16.mxu0 %v630
    %694 = vmatpush1.bf16.msra.mxu0 %v629
    %695 = vmatprep.subr.bf16.mxu0 %v632
    %696 = vmatpush1.bf16.msra.mxu0 %v631
    %697 = vmatprep.subr.bf16.mxu0 %v634
    %698 = vmatpush1.bf16.msra.mxu0 %v633
    %699 = vmatprep.subr.bf16.mxu0 %v636
    %700 = vmatpush1.bf16.msra.mxu0 %v635
    %701 = vmatprep.subr.bf16.mxu0 %v638
    %702 = vmatpush1.bf16.msra.mxu0 %v637
    %703 = vmatprep.subr.bf16.mxu0 %v640
    %704 = vmatpush1.bf16.msra.mxu0 %v639
    %705 = vmatprep.subr.bf16.mxu0 %v642
    %706 = vmatpush1.bf16.msra.mxu0 %v641
    %707 = vmatprep.subr.bf16.mxu0 %v644
    %708 = vmatpush1.bf16.msra.mxu0 %v643
    %709 = vmatprep.subr.bf16.mxu0 %v646
    %710 = vmatpush1.bf16.msra.mxu0 %v645
    %711 = vmatprep.subr.bf16.mxu0 %v648
    %712 = vmatpush1.bf16.msra.mxu0 %v647
    %713 = vmatprep.mubr.bf16.mxu0 %v474
    %714 = vmatmul.mubr.bf16.gmra.mrb[0].mxu0 %v473
    %v715 = vpop.f32.mrb[0].mxu0
    %v716 = vadd.f32 %v514, %v715
    %v717 = vpop.f32.mrb[0].mxu0
    %v718 = vadd.f32 %v518, %v717
    %v719 = vpop.f32.mrb[0].mxu0
    %v720 = vadd.f32 %v514, %v719
    %v721 = vpop.f32.mrb[0].mxu0
    %v722 = vadd.f32 %v518, %v721
    %723 = vdwg.mxu0
    %v724 = vmax.f32 %v716, 0.0
    %v725 = vmax.f32 %v718, 0.0
    %v726 = vmax.f32 %v720, 0.0
    %v727 = vmax.f32 %v722, 0.0
    %v728 = vpack.c.bf16 %v726, %v724
    %v729 = vpack.c.bf16 %v727, %v725
    %s730 = scalar_lea.vmem [#allocation7], 512
    %v731 = vld [vmem:[%s730] sm:$0xff]
    %v732 = vld [vmem:[%s730 + $0x8] sm:$0xff]
    %v733 = vld [vmem:[%s730 + $0x10] sm:$0xff]
    %v734 = vld [vmem:[%s730 + $0x18] sm:$0xff]
    %v735 = vld [vmem:[%s730 + $0x20] sm:$0xff]
    %v736 = vld [vmem:[%s730 + $0x28] sm:$0xff]
    %v737 = vld [vmem:[%s730 + $0x30] sm:$0xff]
    %v738 = vld [vmem:[%s730 + $0x38] sm:$0xff]
    %v739 = vld [vmem:[%s730 + $0x40] sm:$0xff]
    %v740 = vld [vmem:[%s730 + $0x48] sm:$0xff]
    %v741 = vld [vmem:[%s730 + $0x50] sm:$0xff]
    %v742 = vld [vmem:[%s730 + $0x58] sm:$0xff]
    %v743 = vld [vmem:[%s730 + $0x60] sm:$0xff]
    %v744 = vld [vmem:[%s730 + $0x68] sm:$0xff]
    %v745 = vld [vmem:[%s730 + $0x70] sm:$0xff]
    %v746 = vld [vmem:[%s730 + $0x78] sm:$0xff]
    %v747 = vld [vmem:[%s730 + $0x80] sm:$0xff]
    %v748 = vld [vmem:[%s730 + $0x88] sm:$0xff]
    %v749 = vld [vmem:[%s730 + $0x90] sm:$0xff]
    %v750 = vld [vmem:[%s730 + $0x98] sm:$0xff]
    %v751 = vld [vmem:[%s730 + $0xa0] sm:$0xff]
    %v752 = vld [vmem:[%s730 + $0xa8] sm:$0xff]
    %v753 = vld [vmem:[%s730 + $0xb0] sm:$0xff]
    %v754 = vld [vmem:[%s730 + $0xb8] sm:$0xff]
    %v755 = vld [vmem:[%s730 + $0xc0] sm:$0xff]
    %v756 = vld [vmem:[%s730 + $0xc8] sm:$0xff]
    %v757 = vld [vmem:[%s730 + $0xd0] sm:$0xff]
    %v758 = vld [vmem:[%s730 + $0xd8] sm:$0xff]
    %v759 = vld [vmem:[%s730 + $0xe0] sm:$0xff]
    %v760 = vld [vmem:[%s730 + $0xe8] sm:$0xff]
    %v761 = vld [vmem:[%s730 + $0xf0] sm:$0xff]
    %v762 = vld [vmem:[%s730 + $0xf8] sm:$0xff]
    %s763 = scalar_lea.vmem [#allocation8], 3
    %v764 = vld [vmem:[%s763] ss:$8 sm:$0x3]
    %v766 = vlaneseq
    %v767 = vshrl.u32 %v766, 7
    %v768 = vsub.s32 0, %v767
    %v769 = vrot.slane %v764, %v768
    %v770 = vlaneseq
    %v771 = vshrl.u32 %v770, 7
    %v772 = vsub.s32 1, %v771
    %v773 = vrot.slane %v764, %v772
    %v808 = vunpack.c.l.b16 %v731
    %v809 = vunpack.c.h.b16 %v731
    %v810 = vunpack.c.l.b16 %v732
    %v811 = vunpack.c.h.b16 %v732
    %v812 = vunpack.c.l.b16 %v733
    %v813 = vunpack.c.h.b16 %v733
    %v814 = vunpack.c.l.b16 %v734
    %v815 = vunpack.c.h.b16 %v734
    %v816 = vunpack.c.l.b16 %v735
    %v817 = vunpack.c.h.b16 %v735
    %v818 = vunpack.c.l.b16 %v736
    %v819 = vunpack.c.h.b16 %v736
    %v820 = vunpack.c.l.b16 %v737
    %v821 = vunpack.c.h.b16 %v737
    %v822 = vunpack.c.l.b16 %v738
    %v823 = vunpack.c.h.b16 %v738
    %v824 = vunpack.c.l.b16 %v739
    %v825 = vunpack.c.h.b16 %v739
    %v826 = vunpack.c.l.b16 %v740
    %v827 = vunpack.c.h.b16 %v740
    %v828 = vunpack.c.l.b16 %v741
    %v829 = vunpack.c.h.b16 %v741
    %v830 = vunpack.c.l.b16 %v742
    %v831 = vunpack.c.h.b16 %v742
    %v832 = vunpack.c.l.b16 %v743
    %v833 = vunpack.c.h.b16 %v743
    %v834 = vunpack.c.l.b16 %v744
    %v835 = vunpack.c.h.b16 %v744
    %v836 = vunpack.c.l.b16 %v745
    %v837 = vunpack.c.h.b16 %v745
    %v838 = vunpack.c.l.b16 %v746
    %v839 = vunpack.c.h.b16 %v746
    %v840 = vunpack.c.l.b16 %v747
    %v841 = vunpack.c.h.b16 %v747
    %v842 = vunpack.c.l.b16 %v748
    %v843 = vunpack.c.h.b16 %v748
    %v844 = vunpack.c.l.b16 %v749
    %v845 = vunpack.c.h.b16 %v749
    %v846 = vunpack.c.l.b16 %v750
    %v847 = vunpack.c.h.b16 %v750
    %v848 = vunpack.c.l.b16 %v751
    %v849 = vunpack.c.h.b16 %v751
    %v850 = vunpack.c.l.b16 %v752
    %v851 = vunpack.c.h.b16 %v752
    %v852 = vunpack.c.l.b16 %v753
    %v853 = vunpack.c.h.b16 %v753
    %v854 = vunpack.c.l.b16 %v754
    %v855 = vunpack.c.h.b16 %v754
    %v856 = vunpack.c.l.b16 %v755
    %v857 = vunpack.c.h.b16 %v755
    %v858 = vunpack.c.l.b16 %v756
    %v859 = vunpack.c.h.b16 %v756
    %v860 = vunpack.c.l.b16 %v757
    %v861 = vunpack.c.h.b16 %v757
    %v862 = vunpack.c.l.b16 %v758
    %v863 = vunpack.c.h.b16 %v758
    %v864 = vunpack.c.l.b16 %v759
    %v865 = vunpack.c.h.b16 %v759
    %v866 = vunpack.c.l.b16 %v760
    %v867 = vunpack.c.h.b16 %v760
    %v868 = vunpack.c.l.b16 %v761
    %v869 = vunpack.c.h.b16 %v761
    %v870 = vunpack.c.l.b16 %v762
    %v871 = vunpack.c.h.b16 %v762
    %v872 = vpack.c.b16 %v810, %v808
    %v873 = vpack.c.b16 %v811, %v809
    %v874 = vpack.c.b16 %v814, %v812
    %v875 = vpack.c.b16 %v815, %v813
    %v876 = vpack.c.b16 %v818, %v816
    %v877 = vpack.c.b16 %v819, %v817
    %v878 = vpack.c.b16 %v822, %v820
    %v879 = vpack.c.b16 %v823, %v821
    %v880 = vpack.c.b16 %v826, %v824
    %v881 = vpack.c.b16 %v827, %v825
    %v882 = vpack.c.b16 %v830, %v828
    %v883 = vpack.c.b16 %v831, %v829
    %v884 = vpack.c.b16 %v834, %v832
    %v885 = vpack.c.b16 %v835, %v833
    %v886 = vpack.c.b16 %v838, %v836
    %v887 = vpack.c.b16 %v839, %v837
    %v888 = vpack.c.b16 %v842, %v840
    %v889 = vpack.c.b16 %v843, %v841
    %v890 = vpack.c.b16 %v846, %v844
    %v891 = vpack.c.b16 %v847, %v845
    %v892 = vpack.c.b16 %v850, %v848
    %v893 = vpack.c.b16 %v851, %v849
    %v894 = vpack.c.b16 %v854, %v852
    %v895 = vpack.c.b16 %v855, %v853
    %v896 = vpack.c.b16 %v858, %v856
    %v897 = vpack.c.b16 %v859, %v857
    %v898 = vpack.c.b16 %v862, %v860
    %v899 = vpack.c.b16 %v863, %v861
    %v900 = vpack.c.b16 %v866, %v864
    %v901 = vpack.c.b16 %v867, %v865
    %v902 = vpack.c.b16 %v870, %v868
    %v903 = vpack.c.b16 %v871, %v869
    %936 = vmatprep.subr.bf16.mxu0 %v873
    %937 = vmatpush1.bf16.msra.mxu0 %v872
    %938 = vmatprep.subr.bf16.mxu0 %v875
    %939 = vmatpush1.bf16.msra.mxu0 %v874
    %940 = vmatprep.subr.bf16.mxu0 %v877
    %941 = vmatpush1.bf16.msra.mxu0 %v876
    %942 = vmatprep.subr.bf16.mxu0 %v879
    %943 = vmatpush1.bf16.msra.mxu0 %v878
    %944 = vmatprep.subr.bf16.mxu0 %v881
    %945 = vmatpush1.bf16.msra.mxu0 %v880
    %946 = vmatprep.subr.bf16.mxu0 %v883
    %947 = vmatpush1.bf16.msra.mxu0 %v882
    %948 = vmatprep.subr.bf16.mxu0 %v885
    %949 = vmatpush1.bf16.msra.mxu0 %v884
    %950 = vmatprep.subr.bf16.mxu0 %v887
    %951 = vmatpush1.bf16.msra.mxu0 %v886
    %952 = vmatprep.subr.bf16.mxu0 %v889
    %953 = vmatpush1.bf16.msra.mxu0 %v888
    %954 = vmatprep.subr.bf16.mxu0 %v891
    %955 = vmatpush1.bf16.msra.mxu0 %v890
    %956 = vmatprep.subr.bf16.mxu0 %v893
    %957 = vmatpush1.bf16.msra.mxu0 %v892
    %958 = vmatprep.subr.bf16.mxu0 %v895
    %959 = vmatpush1.bf16.msra.mxu0 %v894
    %960 = vmatprep.subr.bf16.mxu0 %v897
    %961 = vmatpush1.bf16.msra.mxu0 %v896
    %962 = vmatprep.subr.bf16.mxu0 %v899
    %963 = vmatpush1.bf16.msra.mxu0 %v898
    %964 = vmatprep.subr.bf16.mxu0 %v901
    %965 = vmatpush1.bf16.msra.mxu0 %v900
    %966 = vmatprep.subr.bf16.mxu0 %v903
    %967 = vmatpush1.bf16.msra.mxu0 %v902
    %968 = vmatprep.mubr.bf16.mxu0 %v729
    %969 = vmatmul.mubr.bf16.gmra.mrb[0].mxu0 %v728
    %v970 = vpop.f32.mrb[0].mxu0
    %v971 = vadd.f32 %v769, %v970
    %v972 = vpop.f32.mrb[0].mxu0
    %v973 = vadd.f32 %v773, %v972
    %v974 = vpop.f32.mrb[0].mxu0
    %v975 = vadd.f32 %v769, %v974
    %v976 = vpop.f32.mrb[0].mxu0
    %v977 = vadd.f32 %v773, %v976
    %978 = vdwg.mxu0
    %v979 = vmax.f32 %v971, 0.0
    %v980 = vmax.f32 %v973, 0.0
    %v981 = vmax.f32 %v975, 0.0
    %v982 = vmax.f32 %v977, 0.0
    %v983 = vld [vmem:[#allocation10] sm:$0xff]
    %v984 = vld [vmem:[#allocation10 + $0x8] sm:$0xff]
    %v985 = vld [vmem:[#allocation10 + $0x10] sm:$0xff]
    %v986 = vld [vmem:[#allocation10 + $0x18] sm:$0xff]
    %v987 = vld [vmem:[#allocation10 + $0x20] sm:$0xff]
    %v988 = vld [vmem:[#allocation10 + $0x28] sm:$0xff]
    %v989 = vld [vmem:[#allocation10 + $0x30] sm:$0xff]
    %v990 = vld [vmem:[#allocation10 + $0x38] sm:$0xff]
    %v991 = vld [vmem:[#allocation10 + $0x40] sm:$0xff]
    %v992 = vld [vmem:[#allocation10 + $0x48] sm:$0xff]
    %v993 = vld [vmem:[#allocation10 + $0x50] sm:$0xff]
    %v994 = vld [vmem:[#allocation10 + $0x58] sm:$0xff]
    %v995 = vld [vmem:[#allocation10 + $0x60] sm:$0xff]
    %v996 = vld [vmem:[#allocation10 + $0x68] sm:$0xff]
    %v997 = vld [vmem:[#allocation10 + $0x70] sm:$0xff]
    %v998 = vld [vmem:[#allocation10 + $0x78] sm:$0xff]
    %v999 = vld [vmem:[#allocation10 + $0x80] sm:$0xff]
    %v1000 = vld [vmem:[#allocation10 + $0x88] sm:$0xff]
    %v1001 = vld [vmem:[#allocation10 + $0x90] sm:$0xff]
    %v1002 = vld [vmem:[#allocation10 + $0x98] sm:$0xff]
    %v1003 = vld [vmem:[#allocation10 + $0xa0] sm:$0xff]
    %v1004 = vld [vmem:[#allocation10 + $0xa8] sm:$0xff]
    %v1005 = vld [vmem:[#allocation10 + $0xb0] sm:$0xff]
    %v1006 = vld [vmem:[#allocation10 + $0xb8] sm:$0xff]
    %v1007 = vld [vmem:[#allocation10 + $0xc0] sm:$0xff]
    %v1008 = vld [vmem:[#allocation10 + $0xc8] sm:$0xff]
    %v1009 = vld [vmem:[#allocation10 + $0xd0] sm:$0xff]
    %v1010 = vld [vmem:[#allocation10 + $0xd8] sm:$0xff]
    %v1011 = vld [vmem:[#allocation10 + $0xe0] sm:$0xff]
    %v1012 = vld [vmem:[#allocation10 + $0xe8] sm:$0xff]
    %v1013 = vld [vmem:[#allocation10 + $0xf0] sm:$0xff]
    %v1014 = vld [vmem:[#allocation10 + $0xf8] sm:$0xff]
    %1015 = vmatprep.subr.mxu0 0.0
    %1016 = vmatpush1.msra.mxu0 %v983
    %1017 = vmatprep.subr.mxu0 0.0
    %1018 = vmatpush1.msra.mxu0 %v984
    %1019 = vmatprep.subr.mxu0 0.0
    %1020 = vmatpush1.msra.mxu0 %v985
    %1021 = vmatprep.subr.mxu0 0.0
    %1022 = vmatpush1.msra.mxu0 %v986
    %1023 = vmatprep.subr.mxu0 0.0
    %1024 = vmatpush1.msra.mxu0 %v987
    %1025 = vmatprep.subr.mxu0 0.0
    %1026 = vmatpush1.msra.mxu0 %v988
    %1027 = vmatprep.subr.mxu0 0.0
    %1028 = vmatpush1.msra.mxu0 %v989
    %1029 = vmatprep.subr.mxu0 0.0
    %1030 = vmatpush1.msra.mxu0 %v990
    %1031 = vmatprep.subr.mxu0 0.0
    %1032 = vmatpush1.msra.mxu0 %v991
    %1033 = vmatprep.subr.mxu0 0.0
    %1034 = vmatpush1.msra.mxu0 %v992
    %1035 = vmatprep.subr.mxu0 0.0
    %1036 = vmatpush1.msra.mxu0 %v993
    %1037 = vmatprep.subr.mxu0 0.0
    %1038 = vmatpush1.msra.mxu0 %v994
    %1039 = vmatprep.subr.mxu0 0.0
    %1040 = vmatpush1.msra.mxu0 %v995
    %1041 = vmatprep.subr.mxu0 0.0
    %1042 = vmatpush1.msra.mxu0 %v996
    %1043 = vmatprep.subr.mxu0 0.0
    %1044 = vmatpush1.msra.mxu0 %v997
    %1045 = vmatprep.subr.mxu0 0.0
    %1046 = vmatpush1.msra.mxu0 %v998
    %1047 = vmatprep.subr.mxu0 0.0
    %1048 = vmatpush1.msra.mxu0 %v999
    %1049 = vmatprep.subr.mxu0 0.0
    %1050 = vmatpush1.msra.mxu0 %v1000
    %1051 = vmatprep.subr.mxu0 0.0
    %1052 = vmatpush1.msra.mxu0 %v1001
    %1053 = vmatprep.subr.mxu0 0.0
    %1054 = vmatpush1.msra.mxu0 %v1002
    %1055 = vmatprep.subr.mxu0 0.0
    %1056 = vmatpush1.msra.mxu0 %v1003
    %1057 = vmatprep.subr.mxu0 0.0
    %1058 = vmatpush1.msra.mxu0 %v1004
    %1059 = vmatprep.subr.mxu0 0.0
    %1060 = vmatpush1.msra.mxu0 %v1005
    %1061 = vmatprep.subr.mxu0 0.0
    %1062 = vmatpush1.msra.mxu0 %v1006
    %1063 = vmatprep.subr.mxu0 0.0
    %1064 = vmatpush1.msra.mxu0 %v1007
    %1065 = vmatprep.subr.mxu0 0.0
    %1066 = vmatpush1.msra.mxu0 %v1008
    %1067 = vmatprep.subr.mxu0 0.0
    %1068 = vmatpush1.msra.mxu0 %v1009
    %1069 = vmatprep.subr.mxu0 0.0
    %1070 = vmatpush1.msra.mxu0 %v1010
    %1071 = vmatprep.subr.mxu0 0.0
    %1072 = vmatpush1.msra.mxu0 %v1011
    %1073 = vmatprep.subr.mxu0 0.0
    %1074 = vmatpush1.msra.mxu0 %v1012
    %1075 = vmatprep.subr.mxu0 0.0
    %1076 = vmatpush1.msra.mxu0 %v1013
    %1077 = vmatprep.subr.mxu0 0.0
    %1078 = vmatpush1.msra.mxu0 %v1014
    %1079 = vmatprep.mubr.f32.mxu0 %v980
    %1080 = vmatmul.mubr.f32.gmra.mrb[0].mxu0 %v979
    %v1081 = vpop.f32.mrb[0].mxu0
    %v1082 = vadd.f32 0.0, %v1081
    %v1083 = vpop.f32.mrb[0].mxu0
    %1084 = vmatprep.mubr.f32.mxu0 %v982
    %1085 = vmatmul.mubr.f32.gmra.mrb[0].mxu0 %v981
    %v1086 = vpop.f32.mrb[0].mxu0
    %v1087 = vadd.f32 0.0, %v1086
    %v1088 = vpop.f32.mrb[0].mxu0
    %1089 = vdwg.mxu0
    %v1090 = vadd.f32 %v92, %v1082
    %v1091 = vadd.f32 %v93, %v1087
    %s1092 = scalar_lea.vmem [#allocation5], 256
    %v1093 = vld [vmem:[%s1092] sm:$0xff]
    %v1094 = vld [vmem:[%s1092 + $0x8] sm:$0xff]
    %v1095 = vld [vmem:[%s1092 + $0x10] sm:$0xff]
    %v1096 = vld [vmem:[%s1092 + $0x18] sm:$0xff]
    %v1097 = vld [vmem:[%s1092 + $0x20] sm:$0xff]
    %v1098 = vld [vmem:[%s1092 + $0x28] sm:$0xff]
    %v1099 = vld [vmem:[%s1092 + $0x30] sm:$0xff]
    %v1100 = vld [vmem:[%s1092 + $0x38] sm:$0xff]
    %v1101 = vld [vmem:[%s1092 + $0x40] sm:$0xff]
    %v1102 = vld [vmem:[%s1092 + $0x48] sm:$0xff]
    %v1103 = vld [vmem:[%s1092 + $0x50] sm:$0xff]
    %v1104 = vld [vmem:[%s1092 + $0x58] sm:$0xff]
    %v1105 = vld [vmem:[%s1092 + $0x60] sm:$0xff]
    %v1106 = vld [vmem:[%s1092 + $0x68] sm:$0xff]
    %v1107 = vld [vmem:[%s1092 + $0x70] sm:$0xff]
    %v1108 = vld [vmem:[%s1092 + $0x78] sm:$0xff]
    %v1109 = vld [vmem:[%s1092 + $0x80] sm:$0xff]
    %v1110 = vld [vmem:[%s1092 + $0x88] sm:$0xff]
    %v1111 = vld [vmem:[%s1092 + $0x90] sm:$0xff]
    %v1112 = vld [vmem:[%s1092 + $0x98] sm:$0xff]
    %v1113 = vld [vmem:[%s1092 + $0xa0] sm:$0xff]
    %v1114 = vld [vmem:[%s1092 + $0xa8] sm:$0xff]
    %v1115 = vld [vmem:[%s1092 + $0xb0] sm:$0xff]
    %v1116 = vld [vmem:[%s1092 + $0xb8] sm:$0xff]
    %v1117 = vld [vmem:[%s1092 + $0xc0] sm:$0xff]
    %v1118 = vld [vmem:[%s1092 + $0xc8] sm:$0xff]
    %v1119 = vld [vmem:[%s1092 + $0xd0] sm:$0xff]
    %v1120 = vld [vmem:[%s1092 + $0xd8] sm:$0xff]
    %v1121 = vld [vmem:[%s1092 + $0xe0] sm:$0xff]
    %v1122 = vld [vmem:[%s1092 + $0xe8] sm:$0xff]
    %v1123 = vld [vmem:[%s1092 + $0xf0] sm:$0xff]
    %v1124 = vld [vmem:[%s1092 + $0xf8] sm:$0xff]
    %s1125 = scalar_lea.vmem [#allocation8], 4
    %v1126 = vld [vmem:[%s1125] ss:$8 sm:$0x3]
    %v1128 = vlaneseq
    %v1129 = vshrl.u32 %v1128, 7
    %v1130 = vsub.s32 0, %v1129
    %v1131 = vrot.slane %v1126, %v1130
    %v1132 = vlaneseq
    %v1133 = vshrl.u32 %v1132, 7
    %v1134 = vsub.s32 1, %v1133
    %v1135 = vrot.slane %v1126, %v1134
    %1138 = vmatprep.subr.mxu0 %v1094
    %1139 = vmatpush1.msra.mxu0 %v1093
    %1140 = vmatprep.subr.mxu0 %v1096
    %1141 = vmatpush1.msra.mxu0 %v1095
    %1142 = vmatprep.subr.mxu0 %v1098
    %1143 = vmatpush1.msra.mxu0 %v1097
    %1144 = vmatprep.subr.mxu0 %v1100
    %1145 = vmatpush1.msra.mxu0 %v1099
    %1146 = vmatprep.subr.mxu0 %v1102
    %1147 = vmatpush1.msra.mxu0 %v1101
    %1148 = vmatprep.subr.mxu0 %v1104
    %1149 = vmatpush1.msra.mxu0 %v1103
    %1150 = vmatprep.subr.mxu0 %v1106
    %1151 = vmatpush1.msra.mxu0 %v1105
    %1152 = vmatprep.subr.mxu0 %v1108
    %1153 = vmatpush1.msra.mxu0 %v1107
    %1154 = vmatprep.subr.mxu0 %v1110
    %1155 = vmatpush1.msra.mxu0 %v1109
    %1156 = vmatprep.subr.mxu0 %v1112
    %1157 = vmatpush1.msra.mxu0 %v1111
    %1158 = vmatprep.subr.mxu0 %v1114
    %1159 = vmatpush1.msra.mxu0 %v1113
    %1160 = vmatprep.subr.mxu0 %v1116
    %1161 = vmatpush1.msra.mxu0 %v1115
    %1162 = vmatprep.subr.mxu0 %v1118
    %1163 = vmatpush1.msra.mxu0 %v1117
    %1164 = vmatprep.subr.mxu0 %v1120
    %1165 = vmatpush1.msra.mxu0 %v1119
    %1166 = vmatprep.subr.mxu0 %v1122
    %1167 = vmatpush1.msra.mxu0 %v1121
    %1168 = vmatprep.subr.mxu0 %v1124
    %1169 = vmatpush1.msra.mxu0 %v1123
    %1170 = vmatprep.subr.mxu0 0.0
    %1171 = vmatpush1.msra.mxu0 0.0
    %1172 = vmatprep.subr.mxu0 0.0
    %1173 = vmatpush1.msra.mxu0 0.0
    %1174 = vmatprep.subr.mxu0 0.0
    %1175 = vmatpush1.msra.mxu0 0.0
    %1176 = vmatprep.subr.mxu0 0.0
    %1177 = vmatpush1.msra.mxu0 0.0
    %1178 = vmatprep.subr.mxu0 0.0
    %1179 = vmatpush1.msra.mxu0 0.0
    %1180 = vmatprep.subr.mxu0 0.0
    %1181 = vmatpush1.msra.mxu0 0.0
    %1182 = vmatprep.subr.mxu0 0.0
    %1183 = vmatpush1.msra.mxu0 0.0
    %1184 = vmatprep.subr.mxu0 0.0
    %1185 = vmatpush1.msra.mxu0 0.0
    %1186 = vmatprep.subr.mxu0 0.0
    %1187 = vmatpush1.msra.mxu0 0.0
    %1188 = vmatprep.subr.mxu0 0.0
    %1189 = vmatpush1.msra.mxu0 0.0
    %1190 = vmatprep.subr.mxu0 0.0
    %1191 = vmatpush1.msra.mxu0 0.0
    %1192 = vmatprep.subr.mxu0 0.0
    %1193 = vmatpush1.msra.mxu0 0.0
    %1194 = vmatprep.subr.mxu0 0.0
    %1195 = vmatpush1.msra.mxu0 0.0
    %1196 = vmatprep.subr.mxu0 0.0
    %1197 = vmatpush1.msra.mxu0 0.0
    %1198 = vmatprep.subr.mxu0 0.0
    %1199 = vmatpush1.msra.mxu0 0.0
    %1200 = vmatprep.subr.mxu0 0.0
    %1201 = vmatpush1.msra.mxu0 0.0
    %1202 = vmatprep.mubr.f32.mxu0 0.0
    %1203 = vmatmul.mubr.f32.gmra.mrb[0].mxu0 %v1090
    %v1204 = vpop.f32.mrb[0].mxu0
    %v1205 = vadd.f32 %v1131, %v1204
    %v1206 = vpop.f32.mrb[0].mxu0
    %v1207 = vadd.f32 %v1135, %v1206
    %1208 = vmatprep.mubr.f32.mxu0 0.0
    %1209 = vmatmul.mubr.f32.gmra.mrb[0].mxu0 %v1091
    %v1210 = vpop.f32.mrb[0].mxu0
    %v1211 = vadd.f32 %v1131, %v1210
    %v1212 = vpop.f32.mrb[0].mxu0
    %v1213 = vadd.f32 %v1135, %v1212
    %1214 = vdwg.mxu0
    %v1215 = vmax.f32 %v1205, 0.0
    %v1216 = vmax.f32 %v1207, 0.0
    %v1217 = vmax.f32 %v1211, 0.0
    %v1218 = vmax.f32 %v1213, 0.0
    %v1219 = vpack.c.bf16 %v1217, %v1215
    %v1220 = vpack.c.bf16 %v1218, %v1216
    %s1221 = scalar_lea.vmem [#allocation7], 768
    %v1222 = vld [vmem:[%s1221] sm:$0xff]
    %v1223 = vld [vmem:[%s1221 + $0x8] sm:$0xff]
    %v1224 = vld [vmem:[%s1221 + $0x10] sm:$0xff]
    %v1225 = vld [vmem:[%s1221 + $0x18] sm:$0xff]
    %v1226 = vld [vmem:[%s1221 + $0x20] sm:$0xff]
    %v1227 = vld [vmem:[%s1221 + $0x28] sm:$0xff]
    %v1228 = vld [vmem:[%s1221 + $0x30] sm:$0xff]
    %v1229 = vld [vmem:[%s1221 + $0x38] sm:$0xff]
    %v1230 = vld [vmem:[%s1221 + $0x40] sm:$0xff]
    %v1231 = vld [vmem:[%s1221 + $0x48] sm:$0xff]
    %v1232 = vld [vmem:[%s1221 + $0x50] sm:$0xff]
    %v1233 = vld [vmem:[%s1221 + $0x58] sm:$0xff]
    %v1234 = vld [vmem:[%s1221 + $0x60] sm:$0xff]
    %v1235 = vld [vmem:[%s1221 + $0x68] sm:$0xff]
    %v1236 = vld [vmem:[%s1221 + $0x70] sm:$0xff]
    %v1237 = vld [vmem:[%s1221 + $0x78] sm:$0xff]
    %v1238 = vld [vmem:[%s1221 + $0x80] sm:$0xff]
    %v1239 = vld [vmem:[%s1221 + $0x88] sm:$0xff]
    %v1240 = vld [vmem:[%s1221 + $0x90] sm:$0xff]
    %v1241 = vld [vmem:[%s1221 + $0x98] sm:$0xff]
    %v1242 = vld [vmem:[%s1221 + $0xa0] sm:$0xff]
    %v1243 = vld [vmem:[%s1221 + $0xa8] sm:$0xff]
    %v1244 = vld [vmem:[%s1221 + $0xb0] sm:$0xff]
    %v1245 = vld [vmem:[%s1221 + $0xb8] sm:$0xff]
    %v1246 = vld [vmem:[%s1221 + $0xc0] sm:$0xff]
    %v1247 = vld [vmem:[%s1221 + $0xc8] sm:$0xff]
    %v1248 = vld [vmem:[%s1221 + $0xd0] sm:$0xff]
    %v1249 = vld [vmem:[%s1221 + $0xd8] sm:$0xff]
    %v1250 = vld [vmem:[%s1221 + $0xe0] sm:$0xff]
    %v1251 = vld [vmem:[%s1221 + $0xe8] sm:$0xff]
    %v1252 = vld [vmem:[%s1221 + $0xf0] sm:$0xff]
    %v1253 = vld [vmem:[%s1221 + $0xf8] sm:$0xff]
    %s1254 = scalar_lea.vmem [#allocation8], 5
    %v1255 = vld [vmem:[%s1254] ss:$8 sm:$0x3]
    %v1257 = vlaneseq
    %v1258 = vshrl.u32 %v1257, 7
    %v1259 = vsub.s32 0, %v1258
    %v1260 = vrot.slane %v1255, %v1259
    %v1261 = vlaneseq
    %v1262 = vshrl.u32 %v1261, 7
    %v1263 = vsub.s32 1, %v1262
    %v1264 = vrot.slane %v1255, %v1263
    %v1299 = vunpack.c.l.b16 %v1222
    %v1300 = vunpack.c.h.b16 %v1222
    %v1301 = vunpack.c.l.b16 %v1223
    %v1302 = vunpack.c.h.b16 %v1223
    %v1303 = vunpack.c.l.b16 %v1224
    %v1304 = vunpack.c.h.b16 %v1224
    %v1305 = vunpack.c.l.b16 %v1225
    %v1306 = vunpack.c.h.b16 %v1225
    %v1307 = vunpack.c.l.b16 %v1226
    %v1308 = vunpack.c.h.b16 %v1226
    %v1309 = vunpack.c.l.b16 %v1227
    %v1310 = vunpack.c.h.b16 %v1227
    %v1311 = vunpack.c.l.b16 %v1228
    %v1312 = vunpack.c.h.b16 %v1228
    %v1313 = vunpack.c.l.b16 %v1229
    %v1314 = vunpack.c.h.b16 %v1229
    %v1315 = vunpack.c.l.b16 %v1230
    %v1316 = vunpack.c.h.b16 %v1230
    %v1317 = vunpack.c.l.b16 %v1231
    %v1318 = vunpack.c.h.b16 %v1231
    %v1319 = vunpack.c.l.b16 %v1232
    %v1320 = vunpack.c.h.b16 %v1232
    %v1321 = vunpack.c.l.b16 %v1233
    %v1322 = vunpack.c.h.b16 %v1233
    %v1323 = vunpack.c.l.b16 %v1234
    %v1324 = vunpack.c.h.b16 %v1234
    %v1325 = vunpack.c.l.b16 %v1235
    %v1326 = vunpack.c.h.b16 %v1235
    %v1327 = vunpack.c.l.b16 %v1236
    %v1328 = vunpack.c.h.b16 %v1236
    %v1329 = vunpack.c.l.b16 %v1237
    %v1330 = vunpack.c.h.b16 %v1237
    %v1331 = vunpack.c.l.b16 %v1238
    %v1332 = vunpack.c.h.b16 %v1238
    %v1333 = vunpack.c.l.b16 %v1239
    %v1334 = vunpack.c.h.b16 %v1239
    %v1335 = vunpack.c.l.b16 %v1240
    %v1336 = vunpack.c.h.b16 %v1240
    %v1337 = vunpack.c.l.b16 %v1241
    %v1338 = vunpack.c.h.b16 %v1241
    %v1339 = vunpack.c.l.b16 %v1242
    %v1340 = vunpack.c.h.b16 %v1242
    %v1341 = vunpack.c.l.b16 %v1243
    %v1342 = vunpack.c.h.b16 %v1243
    %v1343 = vunpack.c.l.b16 %v1244
    %v1344 = vunpack.c.h.b16 %v1244
    %v1345 = vunpack.c.l.b16 %v1245
    %v1346 = vunpack.c.h.b16 %v1245
    %v1347 = vunpack.c.l.b16 %v1246
    %v1348 = vunpack.c.h.b16 %v1246
    %v1349 = vunpack.c.l.b16 %v1247
    %v1350 = vunpack.c.h.b16 %v1247
    %v1351 = vunpack.c.l.b16 %v1248
    %v1352 = vunpack.c.h.b16 %v1248
    %v1353 = vunpack.c.l.b16 %v1249
    %v1354 = vunpack.c.h.b16 %v1249
    %v1355 = vunpack.c.l.b16 %v1250
    %v1356 = vunpack.c.h.b16 %v1250
    %v1357 = vunpack.c.l.b16 %v1251
    %v1358 = vunpack.c.h.b16 %v1251
    %v1359 = vunpack.c.l.b16 %v1252
    %v1360 = vunpack.c.h.b16 %v1252
    %v1361 = vunpack.c.l.b16 %v1253
    %v1362 = vunpack.c.h.b16 %v1253
    %v1363 = vpack.c.b16 %v1301, %v1299
    %v1364 = vpack.c.b16 %v1302, %v1300
    %v1365 = vpack.c.b16 %v1305, %v1303
    %v1366 = vpack.c.b16 %v1306, %v1304
    %v1367 = vpack.c.b16 %v1309, %v1307
    %v1368 = vpack.c.b16 %v1310, %v1308
    %v1369 = vpack.c.b16 %v1313, %v1311
    %v1370 = vpack.c.b16 %v1314, %v1312
    %v1371 = vpack.c.b16 %v1317, %v1315
    %v1372 = vpack.c.b16 %v1318, %v1316
    %v1373 = vpack.c.b16 %v1321, %v1319
    %v1374 = vpack.c.b16 %v1322, %v1320
    %v1375 = vpack.c.b16 %v1325, %v1323
    %v1376 = vpack.c.b16 %v1326, %v1324
    %v1377 = vpack.c.b16 %v1329, %v1327
    %v1378 = vpack.c.b16 %v1330, %v1328
    %v1379 = vpack.c.b16 %v1333, %v1331
    %v1380 = vpack.c.b16 %v1334, %v1332
    %v1381 = vpack.c.b16 %v1337, %v1335
    %v1382 = vpack.c.b16 %v1338, %v1336
    %v1383 = vpack.c.b16 %v1341, %v1339
    %v1384 = vpack.c.b16 %v1342, %v1340
    %v1385 = vpack.c.b16 %v1345, %v1343
    %v1386 = vpack.c.b16 %v1346, %v1344
    %v1387 = vpack.c.b16 %v1349, %v1347
    %v1388 = vpack.c.b16 %v1350, %v1348
    %v1389 = vpack.c.b16 %v1353, %v1351
    %v1390 = vpack.c.b16 %v1354, %v1352
    %v1391 = vpack.c.b16 %v1357, %v1355
    %v1392 = vpack.c.b16 %v1358, %v1356
    %v1393 = vpack.c.b16 %v1361, %v1359
    %v1394 = vpack.c.b16 %v1362, %v1360
    %1427 = vmatprep.subr.bf16.mxu0 %v1364
    %1428 = vmatpush1.bf16.msra.mxu0 %v1363
    %1429 = vmatprep.subr.bf16.mxu0 %v1366
    %1430 = vmatpush1.bf16.msra.mxu0 %v1365
    %1431 = vmatprep.subr.bf16.mxu0 %v1368
    %1432 = vmatpush1.bf16.msra.mxu0 %v1367
    %1433 = vmatprep.subr.bf16.mxu0 %v1370
    %1434 = vmatpush1.bf16.msra.mxu0 %v1369
    %1435 = vmatprep.subr.bf16.mxu0 %v1372
    %1436 = vmatpush1.bf16.msra.mxu0 %v1371
    %1437 = vmatprep.subr.bf16.mxu0 %v1374
    %1438 = vmatpush1.bf16.msra.mxu0 %v1373
    %1439 = vmatprep.subr.bf16.mxu0 %v1376
    %1440 = vmatpush1.bf16.msra.mxu0 %v1375
    %1441 = vmatprep.subr.bf16.mxu0 %v1378
    %1442 = vmatpush1.bf16.msra.mxu0 %v1377
    %1443 = vmatprep.subr.bf16.mxu0 %v1380
    %1444 = vmatpush1.bf16.msra.mxu0 %v1379
    %1445 = vmatprep.subr.bf16.mxu0 %v1382
    %1446 = vmatpush1.bf16.msra.mxu0 %v1381
    %1447 = vmatprep.subr.bf16.mxu0 %v1384
    %1448 = vmatpush1.bf16.msra.mxu0 %v1383
    %1449 = vmatprep.subr.bf16.mxu0 %v1386
    %1450 = vmatpush1.bf16.msra.mxu0 %v1385
    %1451 = vmatprep.subr.bf16.mxu0 %v1388
    %1452 = vmatpush1.bf16.msra.mxu0 %v1387
    %1453 = vmatprep.subr.bf16.mxu0 %v1390
    %1454 = vmatpush1.bf16.msra.mxu0 %v1389
    %1455 = vmatprep.subr.bf16.mxu0 %v1392
    %1456 = vmatpush1.bf16.msra.mxu0 %v1391
    %1457 = vmatprep.subr.bf16.mxu0 %v1394
    %1458 = vmatpush1.bf16.msra.mxu0 %v1393
    %1459 = vmatprep.mubr.bf16.mxu0 %v1220
    %1460 = vmatmul.mubr.bf16.gmra.mrb[0].mxu0 %v1219
    %v1461 = vpop.f32.mrb[0].mxu0
    %v1462 = vadd.f32 %v1260, %v1461
    %v1463 = vpop.f32.mrb[0].mxu0
    %v1464 = vadd.f32 %v1264, %v1463
    %v1465 = vpop.f32.mrb[0].mxu0
    %v1466 = vadd.f32 %v1260, %v1465
    %v1467 = vpop.f32.mrb[0].mxu0
    %v1468 = vadd.f32 %v1264, %v1467
    %1469 = vdwg.mxu0
    %v1470 = vmax.f32 %v1462, 0.0
    %v1471 = vmax.f32 %v1464, 0.0
    %v1472 = vmax.f32 %v1466, 0.0
    %v1473 = vmax.f32 %v1468, 0.0
    %v1474 = vpack.c.bf16 %v1472, %v1470
    %v1475 = vpack.c.bf16 %v1473, %v1471
    %s1476 = scalar_lea.vmem [#allocation7], 1024
    %v1477 = vld [vmem:[%s1476] sm:$0xff]
    %v1478 = vld [vmem:[%s1476 + $0x8] sm:$0xff]
    %v1479 = vld [vmem:[%s1476 + $0x10] sm:$0xff]
    %v1480 = vld [vmem:[%s1476 + $0x18] sm:$0xff]
    %v1481 = vld [vmem:[%s1476 + $0x20] sm:$0xff]
    %v1482 = vld [vmem:[%s1476 + $0x28] sm:$0xff]
    %v1483 = vld [vmem:[%s1476 + $0x30] sm:$0xff]
    %v1484 = vld [vmem:[%s1476 + $0x38] sm:$0xff]
    %v1485 = vld [vmem:[%s1476 + $0x40] sm:$0xff]
    %v1486 = vld [vmem:[%s1476 + $0x48] sm:$0xff]
    %v1487 = vld [vmem:[%s1476 + $0x50] sm:$0xff]
    %v1488 = vld [vmem:[%s1476 + $0x58] sm:$0xff]
    %v1489 = vld [vmem:[%s1476 + $0x60] sm:$0xff]
    %v1490 = vld [vmem:[%s1476 + $0x68] sm:$0xff]
    %v1491 = vld [vmem:[%s1476 + $0x70] sm:$0xff]
    %v1492 = vld [vmem:[%s1476 + $0x78] sm:$0xff]
    %v1493 = vld [vmem:[%s1476 + $0x80] sm:$0xff]
    %v1494 = vld [vmem:[%s1476 + $0x88] sm:$0xff]
    %v1495 = vld [vmem:[%s1476 + $0x90] sm:$0xff]
    %v1496 = vld [vmem:[%s1476 + $0x98] sm:$0xff]
    %v1497 = vld [vmem:[%s1476 + $0xa0] sm:$0xff]
    %v1498 = vld [vmem:[%s1476 + $0xa8] sm:$0xff]
    %v1499 = vld [vmem:[%s1476 + $0xb0] sm:$0xff]
    %v1500 = vld [vmem:[%s1476 + $0xb8] sm:$0xff]
    %v1501 = vld [vmem:[%s1476 + $0xc0] sm:$0xff]
    %v1502 = vld [vmem:[%s1476 + $0xc8] sm:$0xff]
    %v1503 = vld [vmem:[%s1476 + $0xd0] sm:$0xff]
    %v1504 = vld [vmem:[%s1476 + $0xd8] sm:$0xff]
    %v1505 = vld [vmem:[%s1476 + $0xe0] sm:$0xff]
    %v1506 = vld [vmem:[%s1476 + $0xe8] sm:$0xff]
    %v1507 = vld [vmem:[%s1476 + $0xf0] sm:$0xff]
    %v1508 = vld [vmem:[%s1476 + $0xf8] sm:$0xff]
    %s1509 = scalar_lea.vmem [#allocation8], 6
    %v1510 = vld [vmem:[%s1509] ss:$8 sm:$0x3]
    %v1512 = vlaneseq
    %v1513 = vshrl.u32 %v1512, 7
    %v1514 = vsub.s32 0, %v1513
    %v1515 = vrot.slane %v1510, %v1514
    %v1516 = vlaneseq
    %v1517 = vshrl.u32 %v1516, 7
    %v1518 = vsub.s32 1, %v1517
    %v1519 = vrot.slane %v1510, %v1518
    %v1554 = vunpack.c.l.b16 %v1477
    %v1555 = vunpack.c.h.b16 %v1477
    %v1556 = vunpack.c.l.b16 %v1478
    %v1557 = vunpack.c.h.b16 %v1478
    %v1558 = vunpack.c.l.b16 %v1479
    %v1559 = vunpack.c.h.b16 %v1479
    %v1560 = vunpack.c.l.b16 %v1480
    %v1561 = vunpack.c.h.b16 %v1480
    %v1562 = vunpack.c.l.b16 %v1481
    %v1563 = vunpack.c.h.b16 %v1481
    %v1564 = vunpack.c.l.b16 %v1482
    %v1565 = vunpack.c.h.b16 %v1482
    %v1566 = vunpack.c.l.b16 %v1483
    %v1567 = vunpack.c.h.b16 %v1483
    %v1568 = vunpack.c.l.b16 %v1484
    %v1569 = vunpack.c.h.b16 %v1484
    %v1570 = vunpack.c.l.b16 %v1485
    %v1571 = vunpack.c.h.b16 %v1485
    %v1572 = vunpack.c.l.b16 %v1486
    %v1573 = vunpack.c.h.b16 %v1486
    %v1574 = vunpack.c.l.b16 %v1487
    %v1575 = vunpack.c.h.b16 %v1487
    %v1576 = vunpack.c.l.b16 %v1488
    %v1577 = vunpack.c.h.b16 %v1488
    %v1578 = vunpack.c.l.b16 %v1489
    %v1579 = vunpack.c.h.b16 %v1489
    %v1580 = vunpack.c.l.b16 %v1490
    %v1581 = vunpack.c.h.b16 %v1490
    %v1582 = vunpack.c.l.b16 %v1491
    %v1583 = vunpack.c.h.b16 %v1491
    %v1584 = vunpack.c.l.b16 %v1492
    %v1585 = vunpack.c.h.b16 %v1492
    %v1586 = vunpack.c.l.b16 %v1493
    %v1587 = vunpack.c.h.b16 %v1493
    %v1588 = vunpack.c.l.b16 %v1494
    %v1589 = vunpack.c.h.b16 %v1494
    %v1590 = vunpack.c.l.b16 %v1495
    %v1591 = vunpack.c.h.b16 %v1495
    %v1592 = vunpack.c.l.b16 %v1496
    %v1593 = vunpack.c.h.b16 %v1496
    %v1594 = vunpack.c.l.b16 %v1497
    %v1595 = vunpack.c.h.b16 %v1497
    %v1596 = vunpack.c.l.b16 %v1498
    %v1597 = vunpack.c.h.b16 %v1498
    %v1598 = vunpack.c.l.b16 %v1499
    %v1599 = vunpack.c.h.b16 %v1499
    %v1600 = vunpack.c.l.b16 %v1500
    %v1601 = vunpack.c.h.b16 %v1500
    %v1602 = vunpack.c.l.b16 %v1501
    %v1603 = vunpack.c.h.b16 %v1501
    %v1604 = vunpack.c.l.b16 %v1502
    %v1605 = vunpack.c.h.b16 %v1502
    %v1606 = vunpack.c.l.b16 %v1503
    %v1607 = vunpack.c.h.b16 %v1503
    %v1608 = vunpack.c.l.b16 %v1504
    %v1609 = vunpack.c.h.b16 %v1504
    %v1610 = vunpack.c.l.b16 %v1505
    %v1611 = vunpack.c.h.b16 %v1505
    %v1612 = vunpack.c.l.b16 %v1506
    %v1613 = vunpack.c.h.b16 %v1506
    %v1614 = vunpack.c.l.b16 %v1507
    %v1615 = vunpack.c.h.b16 %v1507
    %v1616 = vunpack.c.l.b16 %v1508
    %v1617 = vunpack.c.h.b16 %v1508
    %v1618 = vpack.c.b16 %v1556, %v1554
    %v1619 = vpack.c.b16 %v1557, %v1555
    %v1620 = vpack.c.b16 %v1560, %v1558
    %v1621 = vpack.c.b16 %v1561, %v1559
    %v1622 = vpack.c.b16 %v1564, %v1562
    %v1623 = vpack.c.b16 %v1565, %v1563
    %v1624 = vpack.c.b16 %v1568, %v1566
    %v1625 = vpack.c.b16 %v1569, %v1567
    %v1626 = vpack.c.b16 %v1572, %v1570
    %v1627 = vpack.c.b16 %v1573, %v1571
    %v1628 = vpack.c.b16 %v1576, %v1574
    %v1629 = vpack.c.b16 %v1577, %v1575
    %v1630 = vpack.c.b16 %v1580, %v1578
    %v1631 = vpack.c.b16 %v1581, %v1579
    %v1632 = vpack.c.b16 %v1584, %v1582
    %v1633 = vpack.c.b16 %v1585, %v1583
    %v1634 = vpack.c.b16 %v1588, %v1586
    %v1635 = vpack.c.b16 %v1589, %v1587
    %v1636 = vpack.c.b16 %v1592, %v1590
    %v1637 = vpack.c.b16 %v1593, %v1591
    %v1638 = vpack.c.b16 %v1596, %v1594
    %v1639 = vpack.c.b16 %v1597, %v1595
    %v1640 = vpack.c.b16 %v1600, %v1598
    %v1641 = vpack.c.b16 %v1601, %v1599
    %v1642 = vpack.c.b16 %v1604, %v1602
    %v1643 = vpack.c.b16 %v1605, %v1603
    %v1644 = vpack.c.b16 %v1608, %v1606
    %v1645 = vpack.c.b16 %v1609, %v1607
    %v1646 = vpack.c.b16 %v1612, %v1610
    %v1647 = vpack.c.b16 %v1613, %v1611
    %v1648 = vpack.c.b16 %v1616, %v1614
    %v1649 = vpack.c.b16 %v1617, %v1615
    %1682 = vmatprep.subr.bf16.mxu0 %v1619
    %1683 = vmatpush1.bf16.msra.mxu0 %v1618
    %1684 = vmatprep.subr.bf16.mxu0 %v1621
    %1685 = vmatpush1.bf16.msra.mxu0 %v1620
    %1686 = vmatprep.subr.bf16.mxu0 %v1623
    %1687 = vmatpush1.bf16.msra.mxu0 %v1622
    %1688 = vmatprep.subr.bf16.mxu0 %v1625
    %1689 = vmatpush1.bf16.msra.mxu0 %v1624
    %1690 = vmatprep.subr.bf16.mxu0 %v1627
    %1691 = vmatpush1.bf16.msra.mxu0 %v1626
    %1692 = vmatprep.subr.bf16.mxu0 %v1629
    %1693 = vmatpush1.bf16.msra.mxu0 %v1628
    %1694 = vmatprep.subr.bf16.mxu0 %v1631
    %1695 = vmatpush1.bf16.msra.mxu0 %v1630
    %1696 = vmatprep.subr.bf16.mxu0 %v1633
    %1697 = vmatpush1.bf16.msra.mxu0 %v1632
    %1698 = vmatprep.subr.bf16.mxu0 %v1635
    %1699 = vmatpush1.bf16.msra.mxu0 %v1634
    %1700 = vmatprep.subr.bf16.mxu0 %v1637
    %1701 = vmatpush1.bf16.msra.mxu0 %v1636
    %1702 = vmatprep.subr.bf16.mxu0 %v1639
    %1703 = vmatpush1.bf16.msra.mxu0 %v1638
    %1704 = vmatprep.subr.bf16.mxu0 %v1641
    %1705 = vmatpush1.bf16.msra.mxu0 %v1640
    %1706 = vmatprep.subr.bf16.mxu0 %v1643
    %1707 = vmatpush1.bf16.msra.mxu0 %v1642
    %1708 = vmatprep.subr.bf16.mxu0 %v1645
    %1709 = vmatpush1.bf16.msra.mxu0 %v1644
    %1710 = vmatprep.subr.bf16.mxu0 %v1647
    %1711 = vmatpush1.bf16.msra.mxu0 %v1646
    %1712 = vmatprep.subr.bf16.mxu0 %v1649
    %1713 = vmatpush1.bf16.msra.mxu0 %v1648
    %1714 = vmatprep.mubr.bf16.mxu0 %v1475
    %1715 = vmatmul.mubr.bf16.gmra.mrb[0].mxu0 %v1474
    %v1716 = vpop.f32.mrb[0].mxu0
    %v1717 = vadd.f32 %v1515, %v1716
    %v1718 = vpop.f32.mrb[0].mxu0
    %v1719 = vadd.f32 %v1519, %v1718
    %v1720 = vpop.f32.mrb[0].mxu0
    %v1721 = vadd.f32 %v1515, %v1720
    %v1722 = vpop.f32.mrb[0].mxu0
    %v1723 = vadd.f32 %v1519, %v1722
    %1724 = vdwg.mxu0
    %v1725 = vmax.f32 %v1717, 0.0
    %v1726 = vmax.f32 %v1719, 0.0
    %v1727 = vmax.f32 %v1721, 0.0
    %v1728 = vmax.f32 %v1723, 0.0
    %v1729 = vpack.c.bf16 %v1727, %v1725
    %v1730 = vpack.c.bf16 %v1728, %v1726
    %s1731 = scalar_lea.vmem [#allocation7], 1280
    %v1732 = vld [vmem:[%s1731] sm:$0xff]
    %v1733 = vld [vmem:[%s1731 + $0x8] sm:$0xff]
    %v1734 = vld [vmem:[%s1731 + $0x10] sm:$0xff]
    %v1735 = vld [vmem:[%s1731 + $0x18] sm:$0xff]
    %v1736 = vld [vmem:[%s1731 + $0x20] sm:$0xff]
    %v1737 = vld [vmem:[%s1731 + $0x28] sm:$0xff]
    %v1738 = vld [vmem:[%s1731 + $0x30] sm:$0xff]
    %v1739 = vld [vmem:[%s1731 + $0x38] sm:$0xff]
    %v1740 = vld [vmem:[%s1731 + $0x40] sm:$0xff]
    %v1741 = vld [vmem:[%s1731 + $0x48] sm:$0xff]
    %v1742 = vld [vmem:[%s1731 + $0x50] sm:$0xff]
    %v1743 = vld [vmem:[%s1731 + $0x58] sm:$0xff]
    %v1744 = vld [vmem:[%s1731 + $0x60] sm:$0xff]
    %v1745 = vld [vmem:[%s1731 + $0x68] sm:$0xff]
    %v1746 = vld [vmem:[%s1731 + $0x70] sm:$0xff]
    %v1747 = vld [vmem:[%s1731 + $0x78] sm:$0xff]
    %v1748 = vld [vmem:[%s1731 + $0x80] sm:$0xff]
    %v1749 = vld [vmem:[%s1731 + $0x88] sm:$0xff]
    %v1750 = vld [vmem:[%s1731 + $0x90] sm:$0xff]
    %v1751 = vld [vmem:[%s1731 + $0x98] sm:$0xff]
    %v1752 = vld [vmem:[%s1731 + $0xa0] sm:$0xff]
    %v1753 = vld [vmem:[%s1731 + $0xa8] sm:$0xff]
    %v1754 = vld [vmem:[%s1731 + $0xb0] sm:$0xff]
    %v1755 = vld [vmem:[%s1731 + $0xb8] sm:$0xff]
    %v1756 = vld [vmem:[%s1731 + $0xc0] sm:$0xff]
    %v1757 = vld [vmem:[%s1731 + $0xc8] sm:$0xff]
    %v1758 = vld [vmem:[%s1731 + $0xd0] sm:$0xff]
    %v1759 = vld [vmem:[%s1731 + $0xd8] sm:$0xff]
    %v1760 = vld [vmem:[%s1731 + $0xe0] sm:$0xff]
    %v1761 = vld [vmem:[%s1731 + $0xe8] sm:$0xff]
    %v1762 = vld [vmem:[%s1731 + $0xf0] sm:$0xff]
    %v1763 = vld [vmem:[%s1731 + $0xf8] sm:$0xff]
    %s1764 = scalar_lea.vmem [#allocation8], 7
    %v1765 = vld [vmem:[%s1764] ss:$8 sm:$0x3]
    %v1767 = vlaneseq
    %v1768 = vshrl.u32 %v1767, 7
    %v1769 = vsub.s32 0, %v1768
    %v1770 = vrot.slane %v1765, %v1769
    %v1771 = vlaneseq
    %v1772 = vshrl.u32 %v1771, 7
    %v1773 = vsub.s32 1, %v1772
    %v1774 = vrot.slane %v1765, %v1773
    %v1809 = vunpack.c.l.b16 %v1732
    %v1810 = vunpack.c.h.b16 %v1732
    %v1811 = vunpack.c.l.b16 %v1733
    %v1812 = vunpack.c.h.b16 %v1733
    %v1813 = vunpack.c.l.b16 %v1734
    %v1814 = vunpack.c.h.b16 %v1734
    %v1815 = vunpack.c.l.b16 %v1735
    %v1816 = vunpack.c.h.b16 %v1735
    %v1817 = vunpack.c.l.b16 %v1736
    %v1818 = vunpack.c.h.b16 %v1736
    %v1819 = vunpack.c.l.b16 %v1737
    %v1820 = vunpack.c.h.b16 %v1737
    %v1821 = vunpack.c.l.b16 %v1738
    %v1822 = vunpack.c.h.b16 %v1738
    %v1823 = vunpack.c.l.b16 %v1739
    %v1824 = vunpack.c.h.b16 %v1739
    %v1825 = vunpack.c.l.b16 %v1740
    %v1826 = vunpack.c.h.b16 %v1740
    %v1827 = vunpack.c.l.b16 %v1741
    %v1828 = vunpack.c.h.b16 %v1741
    %v1829 = vunpack.c.l.b16 %v1742
    %v1830 = vunpack.c.h.b16 %v1742
    %v1831 = vunpack.c.l.b16 %v1743
    %v1832 = vunpack.c.h.b16 %v1743
    %v1833 = vunpack.c.l.b16 %v1744
    %v1834 = vunpack.c.h.b16 %v1744
    %v1835 = vunpack.c.l.b16 %v1745
    %v1836 = vunpack.c.h.b16 %v1745
    %v1837 = vunpack.c.l.b16 %v1746
    %v1838 = vunpack.c.h.b16 %v1746
    %v1839 = vunpack.c.l.b16 %v1747
    %v1840 = vunpack.c.h.b16 %v1747
    %v1841 = vunpack.c.l.b16 %v1748
    %v1842 = vunpack.c.h.b16 %v1748
    %v1843 = vunpack.c.l.b16 %v1749
    %v1844 = vunpack.c.h.b16 %v1749
    %v1845 = vunpack.c.l.b16 %v1750
    %v1846 = vunpack.c.h.b16 %v1750
    %v1847 = vunpack.c.l.b16 %v1751
    %v1848 = vunpack.c.h.b16 %v1751
    %v1849 = vunpack.c.l.b16 %v1752
    %v1850 = vunpack.c.h.b16 %v1752
    %v1851 = vunpack.c.l.b16 %v1753
    %v1852 = vunpack.c.h.b16 %v1753
    %v1853 = vunpack.c.l.b16 %v1754
    %v1854 = vunpack.c.h.b16 %v1754
    %v1855 = vunpack.c.l.b16 %v1755
    %v1856 = vunpack.c.h.b16 %v1755
    %v1857 = vunpack.c.l.b16 %v1756
    %v1858 = vunpack.c.h.b16 %v1756
    %v1859 = vunpack.c.l.b16 %v1757
    %v1860 = vunpack.c.h.b16 %v1757
    %v1861 = vunpack.c.l.b16 %v1758
    %v1862 = vunpack.c.h.b16 %v1758
    %v1863 = vunpack.c.l.b16 %v1759
    %v1864 = vunpack.c.h.b16 %v1759
    %v1865 = vunpack.c.l.b16 %v1760
    %v1866 = vunpack.c.h.b16 %v1760
    %v1867 = vunpack.c.l.b16 %v1761
    %v1868 = vunpack.c.h.b16 %v1761
    %v1869 = vunpack.c.l.b16 %v1762
    %v1870 = vunpack.c.h.b16 %v1762
    %v1871 = vunpack.c.l.b16 %v1763
    %v1872 = vunpack.c.h.b16 %v1763
    %v1873 = vpack.c.b16 %v1811, %v1809
    %v1874 = vpack.c.b16 %v1812, %v1810
    %v1875 = vpack.c.b16 %v1815, %v1813
    %v1876 = vpack.c.b16 %v1816, %v1814
    %v1877 = vpack.c.b16 %v1819, %v1817
    %v1878 = vpack.c.b16 %v1820, %v1818
    %v1879 = vpack.c.b16 %v1823, %v1821
    %v1880 = vpack.c.b16 %v1824, %v1822
    %v1881 = vpack.c.b16 %v1827, %v1825
    %v1882 = vpack.c.b16 %v1828, %v1826
    %v1883 = vpack.c.b16 %v1831, %v1829
    %v1884 = vpack.c.b16 %v1832, %v1830
    %v1885 = vpack.c.b16 %v1835, %v1833
    %v1886 = vpack.c.b16 %v1836, %v1834
    %v1887 = vpack.c.b16 %v1839, %v1837
    %v1888 = vpack.c.b16 %v1840, %v1838
    %v1889 = vpack.c.b16 %v1843, %v1841
    %v1890 = vpack.c.b16 %v1844, %v1842
    %v1891 = vpack.c.b16 %v1847, %v1845
    %v1892 = vpack.c.b16 %v1848, %v1846
    %v1893 = vpack.c.b16 %v1851, %v1849
    %v1894 = vpack.c.b16 %v1852, %v1850
    %v1895 = vpack.c.b16 %v1855, %v1853
    %v1896 = vpack.c.b16 %v1856, %v1854
    %v1897 = vpack.c.b16 %v1859, %v1857
    %v1898 = vpack.c.b16 %v1860, %v1858
    %v1899 = vpack.c.b16 %v1863, %v1861
    %v1900 = vpack.c.b16 %v1864, %v1862
    %v1901 = vpack.c.b16 %v1867, %v1865
    %v1902 = vpack.c.b16 %v1868, %v1866
    %v1903 = vpack.c.b16 %v1871, %v1869
    %v1904 = vpack.c.b16 %v1872, %v1870
    %1937 = vmatprep.subr.bf16.mxu0 %v1874
    %1938 = vmatpush1.bf16.msra.mxu0 %v1873
    %1939 = vmatprep.subr.bf16.mxu0 %v1876
    %1940 = vmatpush1.bf16.msra.mxu0 %v1875
    %1941 = vmatprep.subr.bf16.mxu0 %v1878
    %1942 = vmatpush1.bf16.msra.mxu0 %v1877
    %1943 = vmatprep.subr.bf16.mxu0 %v1880
    %1944 = vmatpush1.bf16.msra.mxu0 %v1879
    %1945 = vmatprep.subr.bf16.mxu0 %v1882
    %1946 = vmatpush1.bf16.msra.mxu0 %v1881
    %1947 = vmatprep.subr.bf16.mxu0 %v1884
    %1948 = vmatpush1.bf16.msra.mxu0 %v1883
    %1949 = vmatprep.subr.bf16.mxu0 %v1886
    %1950 = vmatpush1.bf16.msra.mxu0 %v1885
    %1951 = vmatprep.subr.bf16.mxu0 %v1888
    %1952 = vmatpush1.bf16.msra.mxu0 %v1887
    %1953 = vmatprep.subr.bf16.mxu0 %v1890
    %1954 = vmatpush1.bf16.msra.mxu0 %v1889
    %1955 = vmatprep.subr.bf16.mxu0 %v1892
    %1956 = vmatpush1.bf16.msra.mxu0 %v1891
    %1957 = vmatprep.subr.bf16.mxu0 %v1894
    %1958 = vmatpush1.bf16.msra.mxu0 %v1893
    %1959 = vmatprep.subr.bf16.mxu0 %v1896
    %1960 = vmatpush1.bf16.msra.mxu0 %v1895
    %1961 = vmatprep.subr.bf16.mxu0 %v1898
    %1962 = vmatpush1.bf16.msra.mxu0 %v1897
    %1963 = vmatprep.subr.bf16.mxu0 %v1900
    %1964 = vmatpush1.bf16.msra.mxu0 %v1899
    %1965 = vmatprep.subr.bf16.mxu0 %v1902
    %1966 = vmatpush1.bf16.msra.mxu0 %v1901
    %1967 = vmatprep.subr.bf16.mxu0 %v1904
    %1968 = vmatpush1.bf16.msra.mxu0 %v1903
    %1969 = vmatprep.mubr.bf16.mxu0 %v1730
    %1970 = vmatmul.mubr.bf16.gmra.mrb[0].mxu0 %v1729
    %v1971 = vpop.f32.mrb[0].mxu0
    %v1972 = vadd.f32 %v1770, %v1971
    %v1973 = vpop.f32.mrb[0].mxu0
    %v1974 = vadd.f32 %v1774, %v1973
    %v1975 = vpop.f32.mrb[0].mxu0
    %v1976 = vadd.f32 %v1770, %v1975
    %v1977 = vpop.f32.mrb[0].mxu0
    %v1978 = vadd.f32 %v1774, %v1977
    %1979 = vdwg.mxu0
    %v1980 = vmax.f32 %v1972, 0.0
    %v1981 = vmax.f32 %v1974, 0.0
    %v1982 = vmax.f32 %v1976, 0.0
    %v1983 = vmax.f32 %v1978, 0.0
    %s1984 = scalar_lea.vmem [#allocation10], 256
    %v1985 = vld [vmem:[%s1984] sm:$0xff]
    %v1986 = vld [vmem:[%s1984 + $0x8] sm:$0xff]
    %v1987 = vld [vmem:[%s1984 + $0x10] sm:$0xff]
    %v1988 = vld [vmem:[%s1984 + $0x18] sm:$0xff]
    %v1989 = vld [vmem:[%s1984 + $0x20] sm:$0xff]
    %v1990 = vld [vmem:[%s1984 + $0x28] sm:$0xff]
    %v1991 = vld [vmem:[%s1984 + $0x30] sm:$0xff]
    %v1992 = vld [vmem:[%s1984 + $0x38] sm:$0xff]
    %v1993 = vld [vmem:[%s1984 + $0x40] sm:$0xff]
    %v1994 = vld [vmem:[%s1984 + $0x48] sm:$0xff]
    %v1995 = vld [vmem:[%s1984 + $0x50] sm:$0xff]
    %v1996 = vld [vmem:[%s1984 + $0x58] sm:$0xff]
    %v1997 = vld [vmem:[%s1984 + $0x60] sm:$0xff]
    %v1998 = vld [vmem:[%s1984 + $0x68] sm:$0xff]
    %v1999 = vld [vmem:[%s1984 + $0x70] sm:$0xff]
    %v2000 = vld [vmem:[%s1984 + $0x78] sm:$0xff]
    %v2001 = vld [vmem:[%s1984 + $0x80] sm:$0xff]
    %v2002 = vld [vmem:[%s1984 + $0x88] sm:$0xff]
    %v2003 = vld [vmem:[%s1984 + $0x90] sm:$0xff]
    %v2004 = vld [vmem:[%s1984 + $0x98] sm:$0xff]
    %v2005 = vld [vmem:[%s1984 + $0xa0] sm:$0xff]
    %v2006 = vld [vmem:[%s1984 + $0xa8] sm:$0xff]
    %v2007 = vld [vmem:[%s1984 + $0xb0] sm:$0xff]
    %v2008 = vld [vmem:[%s1984 + $0xb8] sm:$0xff]
    %v2009 = vld [vmem:[%s1984 + $0xc0] sm:$0xff]
    %v2010 = vld [vmem:[%s1984 + $0xc8] sm:$0xff]
    %v2011 = vld [vmem:[%s1984 + $0xd0] sm:$0xff]
    %v2012 = vld [vmem:[%s1984 + $0xd8] sm:$0xff]
    %v2013 = vld [vmem:[%s1984 + $0xe0] sm:$0xff]
    %v2014 = vld [vmem:[%s1984 + $0xe8] sm:$0xff]
    %v2015 = vld [vmem:[%s1984 + $0xf0] sm:$0xff]
    %v2016 = vld [vmem:[%s1984 + $0xf8] sm:$0xff]
    %2017 = vmatprep.subr.mxu0 0.0
    %2018 = vmatpush1.msra.mxu0 %v1985
    %2019 = vmatprep.subr.mxu0 0.0
    %2020 = vmatpush1.msra.mxu0 %v1986
    %2021 = vmatprep.subr.mxu0 0.0
    %2022 = vmatpush1.msra.mxu0 %v1987
    %2023 = vmatprep.subr.mxu0 0.0
    %2024 = vmatpush1.msra.mxu0 %v1988
    %2025 = vmatprep.subr.mxu0 0.0
    %2026 = vmatpush1.msra.mxu0 %v1989
    %2027 = vmatprep.subr.mxu0 0.0
    %2028 = vmatpush1.msra.mxu0 %v1990
    %2029 = vmatprep.subr.mxu0 0.0
    %2030 = vmatpush1.msra.mxu0 %v1991
    %2031 = vmatprep.subr.mxu0 0.0
    %2032 = vmatpush1.msra.mxu0 %v1992
    %2033 = vmatprep.subr.mxu0 0.0
    %2034 = vmatpush1.msra.mxu0 %v1993
    %2035 = vmatprep.subr.mxu0 0.0
    %2036 = vmatpush1.msra.mxu0 %v1994
    %2037 = vmatprep.subr.mxu0 0.0
    %2038 = vmatpush1.msra.mxu0 %v1995
    %2039 = vmatprep.subr.mxu0 0.0
    %2040 = vmatpush1.msra.mxu0 %v1996
    %2041 = vmatprep.subr.mxu0 0.0
    %2042 = vmatpush1.msra.mxu0 %v1997
    %2043 = vmatprep.subr.mxu0 0.0
    %2044 = vmatpush1.msra.mxu0 %v1998
    %2045 = vmatprep.subr.mxu0 0.0
    %2046 = vmatpush1.msra.mxu0 %v1999
    %2047 = vmatprep.subr.mxu0 0.0
    %2048 = vmatpush1.msra.mxu0 %v2000
    %2049 = vmatprep.subr.mxu0 0.0
    %2050 = vmatpush1.msra.mxu0 %v2001
    %2051 = vmatprep.subr.mxu0 0.0
    %2052 = vmatpush1.msra.mxu0 %v2002
    %2053 = vmatprep.subr.mxu0 0.0
    %2054 = vmatpush1.msra.mxu0 %v2003
    %2055 = vmatprep.subr.mxu0 0.0
    %2056 = vmatpush1.msra.mxu0 %v2004
    %2057 = vmatprep.subr.mxu0 0.0
    %2058 = vmatpush1.msra.mxu0 %v2005
    %2059 = vmatprep.subr.mxu0 0.0
    %2060 = vmatpush1.msra.mxu0 %v2006
    %2061 = vmatprep.subr.mxu0 0.0
    %2062 = vmatpush1.msra.mxu0 %v2007
    %2063 = vmatprep.subr.mxu0 0.0
    %2064 = vmatpush1.msra.mxu0 %v2008
    %2065 = vmatprep.subr.mxu0 0.0
    %2066 = vmatpush1.msra.mxu0 %v2009
    %2067 = vmatprep.subr.mxu0 0.0
    %2068 = vmatpush1.msra.mxu0 %v2010
    %2069 = vmatprep.subr.mxu0 0.0
    %2070 = vmatpush1.msra.mxu0 %v2011
    %2071 = vmatprep.subr.mxu0 0.0
    %2072 = vmatpush1.msra.mxu0 %v2012
    %2073 = vmatprep.subr.mxu0 0.0
    %2074 = vmatpush1.msra.mxu0 %v2013
    %2075 = vmatprep.subr.mxu0 0.0
    %2076 = vmatpush1.msra.mxu0 %v2014
    %2077 = vmatprep.subr.mxu0 0.0
    %2078 = vmatpush1.msra.mxu0 %v2015
    %2079 = vmatprep.subr.mxu0 0.0
    %2080 = vmatpush1.msra.mxu0 %v2016
    %2081 = vmatprep.mubr.f32.mxu0 %v1981
    %2082 = vmatmul.mubr.f32.gmra.mrb[0].mxu0 %v1980
    %v2083 = vpop.f32.mrb[0].mxu0
    %v2084 = vadd.f32 0.0, %v2083
    %v2085 = vpop.f32.mrb[0].mxu0
    %2086 = vmatprep.mubr.f32.mxu0 %v1983
    %2087 = vmatmul.mubr.f32.gmra.mrb[0].mxu0 %v1982
    %v2088 = vpop.f32.mrb[0].mxu0
    %v2089 = vadd.f32 0.0, %v2088
    %v2090 = vpop.f32.mrb[0].mxu0
    %2091 = vdwg.mxu0
    %v2092 = vadd.f32 %v1090, %v2084
    %v2093 = vadd.f32 %v1091, %v2089
    %s2094 = scalar_lea.vmem [#allocation5], 512
    %v2095 = vld [vmem:[%s2094] sm:$0xff]
    %v2096 = vld [vmem:[%s2094 + $0x8] sm:$0xff]
    %v2097 = vld [vmem:[%s2094 + $0x10] sm:$0xff]
    %v2098 = vld [vmem:[%s2094 + $0x18] sm:$0xff]
    %v2099 = vld [vmem:[%s2094 + $0x20] sm:$0xff]
    %v2100 = vld [vmem:[%s2094 + $0x28] sm:$0xff]
    %v2101 = vld [vmem:[%s2094 + $0x30] sm:$0xff]
    %v2102 = vld [vmem:[%s2094 + $0x38] sm:$0xff]
    %v2103 = vld [vmem:[%s2094 + $0x40] sm:$0xff]
    %v2104 = vld [vmem:[%s2094 + $0x48] sm:$0xff]
    %v2105 = vld [vmem:[%s2094 + $0x50] sm:$0xff]
    %v2106 = vld [vmem:[%s2094 + $0x58] sm:$0xff]
    %v2107 = vld [vmem:[%s2094 + $0x60] sm:$0xff]
    %v2108 = vld [vmem:[%s2094 + $0x68] sm:$0xff]
    %v2109 = vld [vmem:[%s2094 + $0x70] sm:$0xff]
    %v2110 = vld [vmem:[%s2094 + $0x78] sm:$0xff]
    %v2111 = vld [vmem:[%s2094 + $0x80] sm:$0xff]
    %v2112 = vld [vmem:[%s2094 + $0x88] sm:$0xff]
    %v2113 = vld [vmem:[%s2094 + $0x90] sm:$0xff]
    %v2114 = vld [vmem:[%s2094 + $0x98] sm:$0xff]
    %v2115 = vld [vmem:[%s2094 + $0xa0] sm:$0xff]
    %v2116 = vld [vmem:[%s2094 + $0xa8] sm:$0xff]
    %v2117 = vld [vmem:[%s2094 + $0xb0] sm:$0xff]
    %v2118 = vld [vmem:[%s2094 + $0xb8] sm:$0xff]
    %v2119 = vld [vmem:[%s2094 + $0xc0] sm:$0xff]
    %v2120 = vld [vmem:[%s2094 + $0xc8] sm:$0xff]
    %v2121 = vld [vmem:[%s2094 + $0xd0] sm:$0xff]
    %v2122 = vld [vmem:[%s2094 + $0xd8] sm:$0xff]
    %v2123 = vld [vmem:[%s2094 + $0xe0] sm:$0xff]
    %v2124 = vld [vmem:[%s2094 + $0xe8] sm:$0xff]
    %v2125 = vld [vmem:[%s2094 + $0xf0] sm:$0xff]
    %v2126 = vld [vmem:[%s2094 + $0xf8] sm:$0xff]
    %s2127 = scalar_lea.vmem [#allocation8], 16
    %v2128 = vld [vmem:[%s2127] ss:$8 sm:$0x3]
    %v2130 = vlaneseq
    %v2131 = vshrl.u32 %v2130, 7
    %v2132 = vsub.s32 0, %v2131
    %v2133 = vrot.slane %v2128, %v2132
    %v2134 = vlaneseq
    %v2135 = vshrl.u32 %v2134, 7
    %v2136 = vsub.s32 1, %v2135
    %v2137 = vrot.slane %v2128, %v2136
    %2140 = vmatprep.subr.mxu0 %v2096
    %2141 = vmatpush1.msra.mxu0 %v2095
    %2142 = vmatprep.subr.mxu0 %v2098
    %2143 = vmatpush1.msra.mxu0 %v2097
    %2144 = vmatprep.subr.mxu0 %v2100
    %2145 = vmatpush1.msra.mxu0 %v2099
    %2146 = vmatprep.subr.mxu0 %v2102
    %2147 = vmatpush1.msra.mxu0 %v2101
    %2148 = vmatprep.subr.mxu0 %v2104
    %2149 = vmatpush1.msra.mxu0 %v2103
    %2150 = vmatprep.subr.mxu0 %v2106
    %2151 = vmatpush1.msra.mxu0 %v2105
    %2152 = vmatprep.subr.mxu0 %v2108
    %2153 = vmatpush1.msra.mxu0 %v2107
    %2154 = vmatprep.subr.mxu0 %v2110
    %2155 = vmatpush1.msra.mxu0 %v2109
    %2156 = vmatprep.subr.mxu0 %v2112
    %2157 = vmatpush1.msra.mxu0 %v2111
    %2158 = vmatprep.subr.mxu0 %v2114
    %2159 = vmatpush1.msra.mxu0 %v2113
    %2160 = vmatprep.subr.mxu0 %v2116
    %2161 = vmatpush1.msra.mxu0 %v2115
    %2162 = vmatprep.subr.mxu0 %v2118
    %2163 = vmatpush1.msra.mxu0 %v2117
    %2164 = vmatprep.subr.mxu0 %v2120
    %2165 = vmatpush1.msra.mxu0 %v2119
    %2166 = vmatprep.subr.mxu0 %v2122
    %2167 = vmatpush1.msra.mxu0 %v2121
    %2168 = vmatprep.subr.mxu0 %v2124
    %2169 = vmatpush1.msra.mxu0 %v2123
    %2170 = vmatprep.subr.mxu0 %v2126
    %2171 = vmatpush1.msra.mxu0 %v2125
    %2172 = vmatprep.subr.mxu0 0.0
    %2173 = vmatpush1.msra.mxu0 0.0
    %2174 = vmatprep.subr.mxu0 0.0
    %2175 = vmatpush1.msra.mxu0 0.0
    %2176 = vmatprep.subr.mxu0 0.0
    %2177 = vmatpush1.msra.mxu0 0.0
    %2178 = vmatprep.subr.mxu0 0.0
    %2179 = vmatpush1.msra.mxu0 0.0
    %2180 = vmatprep.subr.mxu0 0.0
    %2181 = vmatpush1.msra.mxu0 0.0
    %2182 = vmatprep.subr.mxu0 0.0
    %2183 = vmatpush1.msra.mxu0 0.0
    %2184 = vmatprep.subr.mxu0 0.0
    %2185 = vmatpush1.msra.mxu0 0.0
    %2186 = vmatprep.subr.mxu0 0.0
    %2187 = vmatpush1.msra.mxu0 0.0
    %2188 = vmatprep.subr.mxu0 0.0
    %2189 = vmatpush1.msra.mxu0 0.0
    %2190 = vmatprep.subr.mxu0 0.0
    %2191 = vmatpush1.msra.mxu0 0.0
    %2192 = vmatprep.subr.mxu0 0.0
    %2193 = vmatpush1.msra.mxu0 0.0
    %2194 = vmatprep.subr.mxu0 0.0
    %2195 = vmatpush1.msra.mxu0 0.0
    %2196 = vmatprep.subr.mxu0 0.0
    %2197 = vmatpush1.msra.mxu0 0.0
    %2198 = vmatprep.subr.mxu0 0.0
    %2199 = vmatpush1.msra.mxu0 0.0
    %2200 = vmatprep.subr.mxu0 0.0
    %2201 = vmatpush1.msra.mxu0 0.0
    %2202 = vmatprep.subr.mxu0 0.0
    %2203 = vmatpush1.msra.mxu0 0.0
    %2204 = vmatprep.mubr.f32.mxu0 0.0
    %2205 = vmatmul.mubr.f32.gmra.mrb[0].mxu0 %v2092
    %v2206 = vpop.f32.mrb[0].mxu0
    %v2207 = vadd.f32 %v2133, %v2206
    %v2208 = vpop.f32.mrb[0].mxu0
    %v2209 = vadd.f32 %v2137, %v2208
    %2210 = vmatprep.mubr.f32.mxu0 0.0
    %2211 = vmatmul.mubr.f32.gmra.mrb[0].mxu0 %v2093
    %v2212 = vpop.f32.mrb[0].mxu0
    %v2213 = vadd.f32 %v2133, %v2212
    %v2214 = vpop.f32.mrb[0].mxu0
    %v2215 = vadd.f32 %v2137, %v2214
    %2216 = vdwg.mxu0
    %v2217 = vmax.f32 %v2207, 0.0
    %v2218 = vmax.f32 %v2209, 0.0
    %v2219 = vmax.f32 %v2213, 0.0
    %v2220 = vmax.f32 %v2215, 0.0
    %v2221 = vpack.c.bf16 %v2219, %v2217
    %v2222 = vpack.c.bf16 %v2220, %v2218
    %s2223 = scalar_lea.vmem [#allocation7], 1536
    %v2224 = vld [vmem:[%s2223] sm:$0xff]
    %v2225 = vld [vmem:[%s2223 + $0x8] sm:$0xff]
    %v2226 = vld [vmem:[%s2223 + $0x10] sm:$0xff]
    %v2227 = vld [vmem:[%s2223 + $0x18] sm:$0xff]
    %v2228 = vld [vmem:[%s2223 + $0x20] sm:$0xff]
    %v2229 = vld [vmem:[%s2223 + $0x28] sm:$0xff]
    %v2230 = vld [vmem:[%s2223 + $0x30] sm:$0xff]
    %v2231 = vld [vmem:[%s2223 + $0x38] sm:$0xff]
    %v2232 = vld [vmem:[%s2223 + $0x40] sm:$0xff]
    %v2233 = vld [vmem:[%s2223 + $0x48] sm:$0xff]
    %v2234 = vld [vmem:[%s2223 + $0x50] sm:$0xff]
    %v2235 = vld [vmem:[%s2223 + $0x58] sm:$0xff]
    %v2236 = vld [vmem:[%s2223 + $0x60] sm:$0xff]
    %v2237 = vld [vmem:[%s2223 + $0x68] sm:$0xff]
    %v2238 = vld [vmem:[%s2223 + $0x70] sm:$0xff]
    %v2239 = vld [vmem:[%s2223 + $0x78] sm:$0xff]
    %v2240 = vld [vmem:[%s2223 + $0x80] sm:$0xff]
    %v2241 = vld [vmem:[%s2223 + $0x88] sm:$0xff]
    %v2242 = vld [vmem:[%s2223 + $0x90] sm:$0xff]
    %v2243 = vld [vmem:[%s2223 + $0x98] sm:$0xff]
    %v2244 = vld [vmem:[%s2223 + $0xa0] sm:$0xff]
    %v2245 = vld [vmem:[%s2223 + $0xa8] sm:$0xff]
    %v2246 = vld [vmem:[%s2223 + $0xb0] sm:$0xff]
    %v2247 = vld [vmem:[%s2223 + $0xb8] sm:$0xff]
    %v2248 = vld [vmem:[%s2223 + $0xc0] sm:$0xff]
    %v2249 = vld [vmem:[%s2223 + $0xc8] sm:$0xff]
    %v2250 = vld [vmem:[%s2223 + $0xd0] sm:$0xff]
    %v2251 = vld [vmem:[%s2223 + $0xd8] sm:$0xff]
    %v2252 = vld [vmem:[%s2223 + $0xe0] sm:$0xff]
    %v2253 = vld [vmem:[%s2223 + $0xe8] sm:$0xff]
    %v2254 = vld [vmem:[%s2223 + $0xf0] sm:$0xff]
    %v2255 = vld [vmem:[%s2223 + $0xf8] sm:$0xff]
    %s2256 = scalar_lea.vmem [#allocation8], 17
    %v2257 = vld [vmem:[%s2256] ss:$8 sm:$0x3]
    %v2259 = vlaneseq
    %v2260 = vshrl.u32 %v2259, 7
    %v2261 = vsub.s32 0, %v2260
    %v2262 = vrot.slane %v2257, %v2261
    %v2263 = vlaneseq
    %v2264 = vshrl.u32 %v2263, 7
    %v2265 = vsub.s32 1, %v2264
    %v2266 = vrot.slane %v2257, %v2265
    %v2301 = vunpack.c.l.b16 %v2224
    %v2302 = vunpack.c.h.b16 %v2224
    %v2303 = vunpack.c.l.b16 %v2225
    %v2304 = vunpack.c.h.b16 %v2225
    %v2305 = vunpack.c.l.b16 %v2226
    %v2306 = vunpack.c.h.b16 %v2226
    %v2307 = vunpack.c.l.b16 %v2227
    %v2308 = vunpack.c.h.b16 %v2227
    %v2309 = vunpack.c.l.b16 %v2228
    %v2310 = vunpack.c.h.b16 %v2228
    %v2311 = vunpack.c.l.b16 %v2229
    %v2312 = vunpack.c.h.b16 %v2229
    %v2313 = vunpack.c.l.b16 %v2230
    %v2314 = vunpack.c.h.b16 %v2230
    %v2315 = vunpack.c.l.b16 %v2231
    %v2316 = vunpack.c.h.b16 %v2231
    %v2317 = vunpack.c.l.b16 %v2232
    %v2318 = vunpack.c.h.b16 %v2232
    %v2319 = vunpack.c.l.b16 %v2233
    %v2320 = vunpack.c.h.b16 %v2233
    %v2321 = vunpack.c.l.b16 %v2234
    %v2322 = vunpack.c.h.b16 %v2234
    %v2323 = vunpack.c.l.b16 %v2235
    %v2324 = vunpack.c.h.b16 %v2235
    %v2325 = vunpack.c.l.b16 %v2236
    %v2326 = vunpack.c.h.b16 %v2236
    %v2327 = vunpack.c.l.b16 %v2237
    %v2328 = vunpack.c.h.b16 %v2237
    %v2329 = vunpack.c.l.b16 %v2238
    %v2330 = vunpack.c.h.b16 %v2238
    %v2331 = vunpack.c.l.b16 %v2239
    %v2332 = vunpack.c.h.b16 %v2239
    %v2333 = vunpack.c.l.b16 %v2240
    %v2334 = vunpack.c.h.b16 %v2240
    %v2335 = vunpack.c.l.b16 %v2241
    %v2336 = vunpack.c.h.b16 %v2241
    %v2337 = vunpack.c.l.b16 %v2242
    %v2338 = vunpack.c.h.b16 %v2242
    %v2339 = vunpack.c.l.b16 %v2243
    %v2340 = vunpack.c.h.b16 %v2243
    %v2341 = vunpack.c.l.b16 %v2244
    %v2342 = vunpack.c.h.b16 %v2244
    %v2343 = vunpack.c.l.b16 %v2245
    %v2344 = vunpack.c.h.b16 %v2245
    %v2345 = vunpack.c.l.b16 %v2246
    %v2346 = vunpack.c.h.b16 %v2246
    %v2347 = vunpack.c.l.b16 %v2247
    %v2348 = vunpack.c.h.b16 %v2247
    %v2349 = vunpack.c.l.b16 %v2248
    %v2350 = vunpack.c.h.b16 %v2248
    %v2351 = vunpack.c.l.b16 %v2249
    %v2352 = vunpack.c.h.b16 %v2249
    %v2353 = vunpack.c.l.b16 %v2250
    %v2354 = vunpack.c.h.b16 %v2250
    %v2355 = vunpack.c.l.b16 %v2251
    %v2356 = vunpack.c.h.b16 %v2251
    %v2357 = vunpack.c.l.b16 %v2252
    %v2358 = vunpack.c.h.b16 %v2252
    %v2359 = vunpack.c.l.b16 %v2253
    %v2360 = vunpack.c.h.b16 %v2253
    %v2361 = vunpack.c.l.b16 %v2254
    %v2362 = vunpack.c.h.b16 %v2254
    %v2363 = vunpack.c.l.b16 %v2255
    %v2364 = vunpack.c.h.b16 %v2255
    %v2365 = vpack.c.b16 %v2303, %v2301
    %v2366 = vpack.c.b16 %v2304, %v2302
    %v2367 = vpack.c.b16 %v2307, %v2305
    %v2368 = vpack.c.b16 %v2308, %v2306
    %v2369 = vpack.c.b16 %v2311, %v2309
    %v2370 = vpack.c.b16 %v2312, %v2310
    %v2371 = vpack.c.b16 %v2315, %v2313
    %v2372 = vpack.c.b16 %v2316, %v2314
    %v2373 = vpack.c.b16 %v2319, %v2317
    %v2374 = vpack.c.b16 %v2320, %v2318
    %v2375 = vpack.c.b16 %v2323, %v2321
    %v2376 = vpack.c.b16 %v2324, %v2322
    %v2377 = vpack.c.b16 %v2327, %v2325
    %v2378 = vpack.c.b16 %v2328, %v2326
    %v2379 = vpack.c.b16 %v2331, %v2329
    %v2380 = vpack.c.b16 %v2332, %v2330
    %v2381 = vpack.c.b16 %v2335, %v2333
    %v2382 = vpack.c.b16 %v2336, %v2334
    %v2383 = vpack.c.b16 %v2339, %v2337
    %v2384 = vpack.c.b16 %v2340, %v2338
    %v2385 = vpack.c.b16 %v2343, %v2341
    %v2386 = vpack.c.b16 %v2344, %v2342
    %v2387 = vpack.c.b16 %v2347, %v2345
    %v2388 = vpack.c.b16 %v2348, %v2346
    %v2389 = vpack.c.b16 %v2351, %v2349
    %v2390 = vpack.c.b16 %v2352, %v2350
    %v2391 = vpack.c.b16 %v2355, %v2353
    %v2392 = vpack.c.b16 %v2356, %v2354
    %v2393 = vpack.c.b16 %v2359, %v2357
    %v2394 = vpack.c.b16 %v2360, %v2358
    %v2395 = vpack.c.b16 %v2363, %v2361
    %v2396 = vpack.c.b16 %v2364, %v2362
    %2429 = vmatprep.subr.bf16.mxu0 %v2366
    %2430 = vmatpush1.bf16.msra.mxu0 %v2365
    %2431 = vmatprep.subr.bf16.mxu0 %v2368
    %2432 = vmatpush1.bf16.msra.mxu0 %v2367
    %2433 = vmatprep.subr.bf16.mxu0 %v2370
    %2434 = vmatpush1.bf16.msra.mxu0 %v2369
    %2435 = vmatprep.subr.bf16.mxu0 %v2372
    %2436 = vmatpush1.bf16.msra.mxu0 %v2371
    %2437 = vmatprep.subr.bf16.mxu0 %v2374
    %2438 = vmatpush1.bf16.msra.mxu0 %v2373
    %2439 = vmatprep.subr.bf16.mxu0 %v2376
    %2440 = vmatpush1.bf16.msra.mxu0 %v2375
    %2441 = vmatprep.subr.bf16.mxu0 %v2378
    %2442 = vmatpush1.bf16.msra.mxu0 %v2377
    %2443 = vmatprep.subr.bf16.mxu0 %v2380
    %2444 = vmatpush1.bf16.msra.mxu0 %v2379
    %2445 = vmatprep.subr.bf16.mxu0 %v2382
    %2446 = vmatpush1.bf16.msra.mxu0 %v2381
    %2447 = vmatprep.subr.bf16.mxu0 %v2384
    %2448 = vmatpush1.bf16.msra.mxu0 %v2383
    %2449 = vmatprep.subr.bf16.mxu0 %v2386
    %2450 = vmatpush1.bf16.msra.mxu0 %v2385
    %2451 = vmatprep.subr.bf16.mxu0 %v2388
    %2452 = vmatpush1.bf16.msra.mxu0 %v2387
    %2453 = vmatprep.subr.bf16.mxu0 %v2390
    %2454 = vmatpush1.bf16.msra.mxu0 %v2389
    %2455 = vmatprep.subr.bf16.mxu0 %v2392
    %2456 = vmatpush1.bf16.msra.mxu0 %v2391
    %2457 = vmatprep.subr.bf16.mxu0 %v2394
    %2458 = vmatpush1.bf16.msra.mxu0 %v2393
    %2459 = vmatprep.subr.bf16.mxu0 %v2396
    %2460 = vmatpush1.bf16.msra.mxu0 %v2395
    %2461 = vmatprep.mubr.bf16.mxu0 %v2222
    %2462 = vmatmul.mubr.bf16.gmra.mrb[0].mxu0 %v2221
    %v2463 = vpop.f32.mrb[0].mxu0
    %v2464 = vadd.f32 %v2262, %v2463
    %v2465 = vpop.f32.mrb[0].mxu0
    %v2466 = vadd.f32 %v2266, %v2465
    %v2467 = vpop.f32.mrb[0].mxu0
    %v2468 = vadd.f32 %v2262, %v2467
    %v2469 = vpop.f32.mrb[0].mxu0
    %v2470 = vadd.f32 %v2266, %v2469
    %2471 = vdwg.mxu0
    %v2472 = vmax.f32 %v2464, 0.0
    %v2473 = vmax.f32 %v2466, 0.0
    %v2474 = vmax.f32 %v2468, 0.0
    %v2475 = vmax.f32 %v2470, 0.0
    %v2476 = vpack.c.bf16 %v2474, %v2472
    %v2477 = vpack.c.bf16 %v2475, %v2473
    %s2478 = scalar_lea.vmem [#allocation7], 1792
    %v2479 = vld [vmem:[%s2478] sm:$0xff]
    %v2480 = vld [vmem:[%s2478 + $0x8] sm:$0xff]
    %v2481 = vld [vmem:[%s2478 + $0x10] sm:$0xff]
    %v2482 = vld [vmem:[%s2478 + $0x18] sm:$0xff]
    %v2483 = vld [vmem:[%s2478 + $0x20] sm:$0xff]
    %v2484 = vld [vmem:[%s2478 + $0x28] sm:$0xff]
    %v2485 = vld [vmem:[%s2478 + $0x30] sm:$0xff]
    %v2486 = vld [vmem:[%s2478 + $0x38] sm:$0xff]
    %v2487 = vld [vmem:[%s2478 + $0x40] sm:$0xff]
    %v2488 = vld [vmem:[%s2478 + $0x48] sm:$0xff]
    %v2489 = vld [vmem:[%s2478 + $0x50] sm:$0xff]
    %v2490 = vld [vmem:[%s2478 + $0x58] sm:$0xff]
    %v2491 = vld [vmem:[%s2478 + $0x60] sm:$0xff]
    %v2492 = vld [vmem:[%s2478 + $0x68] sm:$0xff]
    %v2493 = vld [vmem:[%s2478 + $0x70] sm:$0xff]
    %v2494 = vld [vmem:[%s2478 + $0x78] sm:$0xff]
    %v2495 = vld [vmem:[%s2478 + $0x80] sm:$0xff]
    %v2496 = vld [vmem:[%s2478 + $0x88] sm:$0xff]
    %v2497 = vld [vmem:[%s2478 + $0x90] sm:$0xff]
    %v2498 = vld [vmem:[%s2478 + $0x98] sm:$0xff]
    %v2499 = vld [vmem:[%s2478 + $0xa0] sm:$0xff]
    %v2500 = vld [vmem:[%s2478 + $0xa8] sm:$0xff]
    %v2501 = vld [vmem:[%s2478 + $0xb0] sm:$0xff]
    %v2502 = vld [vmem:[%s2478 + $0xb8] sm:$0xff]
    %v2503 = vld [vmem:[%s2478 + $0xc0] sm:$0xff]
    %v2504 = vld [vmem:[%s2478 + $0xc8] sm:$0xff]
    %v2505 = vld [vmem:[%s2478 + $0xd0] sm:$0xff]
    %v2506 = vld [vmem:[%s2478 + $0xd8] sm:$0xff]
    %v2507 = vld [vmem:[%s2478 + $0xe0] sm:$0xff]
    %v2508 = vld [vmem:[%s2478 + $0xe8] sm:$0xff]
    %v2509 = vld [vmem:[%s2478 + $0xf0] sm:$0xff]
    %v2510 = vld [vmem:[%s2478 + $0xf8] sm:$0xff]
    %s2511 = scalar_lea.vmem [#allocation8], 18
    %v2512 = vld [vmem:[%s2511] ss:$8 sm:$0x3]
    %v2514 = vlaneseq
    %v2515 = vshrl.u32 %v2514, 7
    %v2516 = vsub.s32 0, %v2515
    %v2517 = vrot.slane %v2512, %v2516
    %v2518 = vlaneseq
    %v2519 = vshrl.u32 %v2518, 7
    %v2520 = vsub.s32 1, %v2519
    %v2521 = vrot.slane %v2512, %v2520
    %v2556 = vunpack.c.l.b16 %v2479
    %v2557 = vunpack.c.h.b16 %v2479
    %v2558 = vunpack.c.l.b16 %v2480
    %v2559 = vunpack.c.h.b16 %v2480
    %v2560 = vunpack.c.l.b16 %v2481
    %v2561 = vunpack.c.h.b16 %v2481
    %v2562 = vunpack.c.l.b16 %v2482
    %v2563 = vunpack.c.h.b16 %v2482
    %v2564 = vunpack.c.l.b16 %v2483
    %v2565 = vunpack.c.h.b16 %v2483
    %v2566 = vunpack.c.l.b16 %v2484
    %v2567 = vunpack.c.h.b16 %v2484
    %v2568 = vunpack.c.l.b16 %v2485
    %v2569 = vunpack.c.h.b16 %v2485
    %v2570 = vunpack.c.l.b16 %v2486
    %v2571 = vunpack.c.h.b16 %v2486
    %v2572 = vunpack.c.l.b16 %v2487
    %v2573 = vunpack.c.h.b16 %v2487
    %v2574 = vunpack.c.l.b16 %v2488
    %v2575 = vunpack.c.h.b16 %v2488
    %v2576 = vunpack.c.l.b16 %v2489
    %v2577 = vunpack.c.h.b16 %v2489
    %v2578 = vunpack.c.l.b16 %v2490
    %v2579 = vunpack.c.h.b16 %v2490
    %v2580 = vunpack.c.l.b16 %v2491
    %v2581 = vunpack.c.h.b16 %v2491
    %v2582 = vunpack.c.l.b16 %v2492
    %v2583 = vunpack.c.h.b16 %v2492
    %v2584 = vunpack.c.l.b16 %v2493
    %v2585 = vunpack.c.h.b16 %v2493
    %v2586 = vunpack.c.l.b16 %v2494
    %v2587 = vunpack.c.h.b16 %v2494
    %v2588 = vunpack.c.l.b16 %v2495
    %v2589 = vunpack.c.h.b16 %v2495
    %v2590 = vunpack.c.l.b16 %v2496
    %v2591 = vunpack.c.h.b16 %v2496
    %v2592 = vunpack.c.l.b16 %v2497
    %v2593 = vunpack.c.h.b16 %v2497
    %v2594 = vunpack.c.l.b16 %v2498
    %v2595 = vunpack.c.h.b16 %v2498
    %v2596 = vunpack.c.l.b16 %v2499
    %v2597 = vunpack.c.h.b16 %v2499
    %v2598 = vunpack.c.l.b16 %v2500
    %v2599 = vunpack.c.h.b16 %v2500
    %v2600 = vunpack.c.l.b16 %v2501
    %v2601 = vunpack.c.h.b16 %v2501
    %v2602 = vunpack.c.l.b16 %v2502
    %v2603 = vunpack.c.h.b16 %v2502
    %v2604 = vunpack.c.l.b16 %v2503
    %v2605 = vunpack.c.h.b16 %v2503
    %v2606 = vunpack.c.l.b16 %v2504
    %v2607 = vunpack.c.h.b16 %v2504
    %v2608 = vunpack.c.l.b16 %v2505
    %v2609 = vunpack.c.h.b16 %v2505
    %v2610 = vunpack.c.l.b16 %v2506
    %v2611 = vunpack.c.h.b16 %v2506
    %v2612 = vunpack.c.l.b16 %v2507
    %v2613 = vunpack.c.h.b16 %v2507
    %v2614 = vunpack.c.l.b16 %v2508
    %v2615 = vunpack.c.h.b16 %v2508
    %v2616 = vunpack.c.l.b16 %v2509
    %v2617 = vunpack.c.h.b16 %v2509
    %v2618 = vunpack.c.l.b16 %v2510
    %v2619 = vunpack.c.h.b16 %v2510
    %v2620 = vpack.c.b16 %v2558, %v2556
    %v2621 = vpack.c.b16 %v2559, %v2557
    %v2622 = vpack.c.b16 %v2562, %v2560
    %v2623 = vpack.c.b16 %v2563, %v2561
    %v2624 = vpack.c.b16 %v2566, %v2564
    %v2625 = vpack.c.b16 %v2567, %v2565
    %v2626 = vpack.c.b16 %v2570, %v2568
    %v2627 = vpack.c.b16 %v2571, %v2569
    %v2628 = vpack.c.b16 %v2574, %v2572
    %v2629 = vpack.c.b16 %v2575, %v2573
    %v2630 = vpack.c.b16 %v2578, %v2576
    %v2631 = vpack.c.b16 %v2579, %v2577
    %v2632 = vpack.c.b16 %v2582, %v2580
    %v2633 = vpack.c.b16 %v2583, %v2581
    %v2634 = vpack.c.b16 %v2586, %v2584
    %v2635 = vpack.c.b16 %v2587, %v2585
    %v2636 = vpack.c.b16 %v2590, %v2588
    %v2637 = vpack.c.b16 %v2591, %v2589
    %v2638 = vpack.c.b16 %v2594, %v2592
    %v2639 = vpack.c.b16 %v2595, %v2593
    %v2640 = vpack.c.b16 %v2598, %v2596
    %v2641 = vpack.c.b16 %v2599, %v2597
    %v2642 = vpack.c.b16 %v2602, %v2600
    %v2643 = vpack.c.b16 %v2603, %v2601
    %v2644 = vpack.c.b16 %v2606, %v2604
    %v2645 = vpack.c.b16 %v2607, %v2605
    %v2646 = vpack.c.b16 %v2610, %v2608
    %v2647 = vpack.c.b16 %v2611, %v2609
    %v2648 = vpack.c.b16 %v2614, %v2612
    %v2649 = vpack.c.b16 %v2615, %v2613
    %v2650 = vpack.c.b16 %v2618, %v2616
    %v2651 = vpack.c.b16 %v2619, %v2617
    %2684 = vmatprep.subr.bf16.mxu0 %v2621
    %2685 = vmatpush1.bf16.msra.mxu0 %v2620
    %2686 = vmatprep.subr.bf16.mxu0 %v2623
    %2687 = vmatpush1.bf16.msra.mxu0 %v2622
    %2688 = vmatprep.subr.bf16.mxu0 %v2625
    %2689 = vmatpush1.bf16.msra.mxu0 %v2624
    %2690 = vmatprep.subr.bf16.mxu0 %v2627
    %2691 = vmatpush1.bf16.msra.mxu0 %v2626
    %2692 = vmatprep.subr.bf16.mxu0 %v2629
    %2693 = vmatpush1.bf16.msra.mxu0 %v2628
    %2694 = vmatprep.subr.bf16.mxu0 %v2631
    %2695 = vmatpush1.bf16.msra.mxu0 %v2630
    %2696 = vmatprep.subr.bf16.mxu0 %v2633
    %2697 = vmatpush1.bf16.msra.mxu0 %v2632
    %2698 = vmatprep.subr.bf16.mxu0 %v2635
    %2699 = vmatpush1.bf16.msra.mxu0 %v2634
    %2700 = vmatprep.subr.bf16.mxu0 %v2637
    %2701 = vmatpush1.bf16.msra.mxu0 %v2636
    %2702 = vmatprep.subr.bf16.mxu0 %v2639
    %2703 = vmatpush1.bf16.msra.mxu0 %v2638
    %2704 = vmatprep.subr.bf16.mxu0 %v2641
    %2705 = vmatpush1.bf16.msra.mxu0 %v2640
    %2706 = vmatprep.subr.bf16.mxu0 %v2643
    %2707 = vmatpush1.bf16.msra.mxu0 %v2642
    %2708 = vmatprep.subr.bf16.mxu0 %v2645
    %2709 = vmatpush1.bf16.msra.mxu0 %v2644
    %2710 = vmatprep.subr.bf16.mxu0 %v2647
    %2711 = vmatpush1.bf16.msra.mxu0 %v2646
    %2712 = vmatprep.subr.bf16.mxu0 %v2649
    %2713 = vmatpush1.bf16.msra.mxu0 %v2648
    %2714 = vmatprep.subr.bf16.mxu0 %v2651
    %2715 = vmatpush1.bf16.msra.mxu0 %v2650
    %2716 = vmatprep.mubr.bf16.mxu0 %v2477
    %2717 = vmatmul.mubr.bf16.gmra.mrb[0].mxu0 %v2476
    %v2718 = vpop.f32.mrb[0].mxu0
    %v2719 = vadd.f32 %v2517, %v2718
    %v2720 = vpop.f32.mrb[0].mxu0
    %v2721 = vadd.f32 %v2521, %v2720
    %v2722 = vpop.f32.mrb[0].mxu0
    %v2723 = vadd.f32 %v2517, %v2722
    %v2724 = vpop.f32.mrb[0].mxu0
    %v2725 = vadd.f32 %v2521, %v2724
    %2726 = vdwg.mxu0
    %v2727 = vmax.f32 %v2719, 0.0
    %v2728 = vmax.f32 %v2721, 0.0
    %v2729 = vmax.f32 %v2723, 0.0
    %v2730 = vmax.f32 %v2725, 0.0
    %v2731 = vpack.c.bf16 %v2729, %v2727
    %v2732 = vpack.c.bf16 %v2730, %v2728
    %s2733 = scalar_lea.vmem [#allocation7], 2048
    %v2734 = vld [vmem:[%s2733] sm:$0xff]
    %v2735 = vld [vmem:[%s2733 + $0x8] sm:$0xff]
    %v2736 = vld [vmem:[%s2733 + $0x10] sm:$0xff]
    %v2737 = vld [vmem:[%s2733 + $0x18] sm:$0xff]
    %v2738 = vld [vmem:[%s2733 + $0x20] sm:$0xff]
    %v2739 = vld [vmem:[%s2733 + $0x28] sm:$0xff]
    %v2740 = vld [vmem:[%s2733 + $0x30] sm:$0xff]
    %v2741 = vld [vmem:[%s2733 + $0x38] sm:$0xff]
    %v2742 = vld [vmem:[%s2733 + $0x40] sm:$0xff]
    %v2743 = vld [vmem:[%s2733 + $0x48] sm:$0xff]
    %v2744 = vld [vmem:[%s2733 + $0x50] sm:$0xff]
    %v2745 = vld [vmem:[%s2733 + $0x58] sm:$0xff]
    %v2746 = vld [vmem:[%s2733 + $0x60] sm:$0xff]
    %v2747 = vld [vmem:[%s2733 + $0x68] sm:$0xff]
    %v2748 = vld [vmem:[%s2733 + $0x70] sm:$0xff]
    %v2749 = vld [vmem:[%s2733 + $0x78] sm:$0xff]
    %v2750 = vld [vmem:[%s2733 + $0x80] sm:$0xff]
    %v2751 = vld [vmem:[%s2733 + $0x88] sm:$0xff]
    %v2752 = vld [vmem:[%s2733 + $0x90] sm:$0xff]
    %v2753 = vld [vmem:[%s2733 + $0x98] sm:$0xff]
    %v2754 = vld [vmem:[%s2733 + $0xa0] sm:$0xff]
    %v2755 = vld [vmem:[%s2733 + $0xa8] sm:$0xff]
    %v2756 = vld [vmem:[%s2733 + $0xb0] sm:$0xff]
    %v2757 = vld [vmem:[%s2733 + $0xb8] sm:$0xff]
    %v2758 = vld [vmem:[%s2733 + $0xc0] sm:$0xff]
    %v2759 = vld [vmem:[%s2733 + $0xc8] sm:$0xff]
    %v2760 = vld [vmem:[%s2733 + $0xd0] sm:$0xff]
    %v2761 = vld [vmem:[%s2733 + $0xd8] sm:$0xff]
    %v2762 = vld [vmem:[%s2733 + $0xe0] sm:$0xff]
    %v2763 = vld [vmem:[%s2733 + $0xe8] sm:$0xff]
    %v2764 = vld [vmem:[%s2733 + $0xf0] sm:$0xff]
    %v2765 = vld [vmem:[%s2733 + $0xf8] sm:$0xff]
    %s2766 = scalar_lea.vmem [#allocation8], 19
    %v2767 = vld [vmem:[%s2766] ss:$8 sm:$0x3]
    %v2769 = vlaneseq
    %v2770 = vshrl.u32 %v2769, 7
    %v2771 = vsub.s32 0, %v2770
    %v2772 = vrot.slane %v2767, %v2771
    %v2773 = vlaneseq
    %v2774 = vshrl.u32 %v2773, 7
    %v2775 = vsub.s32 1, %v2774
    %v2776 = vrot.slane %v2767, %v2775
    %v2811 = vunpack.c.l.b16 %v2734
    %v2812 = vunpack.c.h.b16 %v2734
    %v2813 = vunpack.c.l.b16 %v2735
    %v2814 = vunpack.c.h.b16 %v2735
    %v2815 = vunpack.c.l.b16 %v2736
    %v2816 = vunpack.c.h.b16 %v2736
    %v2817 = vunpack.c.l.b16 %v2737
    %v2818 = vunpack.c.h.b16 %v2737
    %v2819 = vunpack.c.l.b16 %v2738
    %v2820 = vunpack.c.h.b16 %v2738
    %v2821 = vunpack.c.l.b16 %v2739
    %v2822 = vunpack.c.h.b16 %v2739
    %v2823 = vunpack.c.l.b16 %v2740
    %v2824 = vunpack.c.h.b16 %v2740
    %v2825 = vunpack.c.l.b16 %v2741
    %v2826 = vunpack.c.h.b16 %v2741
    %v2827 = vunpack.c.l.b16 %v2742
    %v2828 = vunpack.c.h.b16 %v2742
    %v2829 = vunpack.c.l.b16 %v2743
    %v2830 = vunpack.c.h.b16 %v2743
    %v2831 = vunpack.c.l.b16 %v2744
    %v2832 = vunpack.c.h.b16 %v2744
    %v2833 = vunpack.c.l.b16 %v2745
    %v2834 = vunpack.c.h.b16 %v2745
    %v2835 = vunpack.c.l.b16 %v2746
    %v2836 = vunpack.c.h.b16 %v2746
    %v2837 = vunpack.c.l.b16 %v2747
    %v2838 = vunpack.c.h.b16 %v2747
    %v2839 = vunpack.c.l.b16 %v2748
    %v2840 = vunpack.c.h.b16 %v2748
    %v2841 = vunpack.c.l.b16 %v2749
    %v2842 = vunpack.c.h.b16 %v2749
    %v2843 = vunpack.c.l.b16 %v2750
    %v2844 = vunpack.c.h.b16 %v2750
    %v2845 = vunpack.c.l.b16 %v2751
    %v2846 = vunpack.c.h.b16 %v2751
    %v2847 = vunpack.c.l.b16 %v2752
    %v2848 = vunpack.c.h.b16 %v2752
    %v2849 = vunpack.c.l.b16 %v2753
    %v2850 = vunpack.c.h.b16 %v2753
    %v2851 = vunpack.c.l.b16 %v2754
    %v2852 = vunpack.c.h.b16 %v2754
    %v2853 = vunpack.c.l.b16 %v2755
    %v2854 = vunpack.c.h.b16 %v2755
    %v2855 = vunpack.c.l.b16 %v2756
    %v2856 = vunpack.c.h.b16 %v2756
    %v2857 = vunpack.c.l.b16 %v2757
    %v2858 = vunpack.c.h.b16 %v2757
    %v2859 = vunpack.c.l.b16 %v2758
    %v2860 = vunpack.c.h.b16 %v2758
    %v2861 = vunpack.c.l.b16 %v2759
    %v2862 = vunpack.c.h.b16 %v2759
    %v2863 = vunpack.c.l.b16 %v2760
    %v2864 = vunpack.c.h.b16 %v2760
    %v2865 = vunpack.c.l.b16 %v2761
    %v2866 = vunpack.c.h.b16 %v2761
    %v2867 = vunpack.c.l.b16 %v2762
    %v2868 = vunpack.c.h.b16 %v2762
    %v2869 = vunpack.c.l.b16 %v2763
    %v2870 = vunpack.c.h.b16 %v2763
    %v2871 = vunpack.c.l.b16 %v2764
    %v2872 = vunpack.c.h.b16 %v2764
    %v2873 = vunpack.c.l.b16 %v2765
    %v2874 = vunpack.c.h.b16 %v2765
    %v2875 = vpack.c.b16 %v2813, %v2811
    %v2876 = vpack.c.b16 %v2814, %v2812
    %v2877 = vpack.c.b16 %v2817, %v2815
    %v2878 = vpack.c.b16 %v2818, %v2816
    %v2879 = vpack.c.b16 %v2821, %v2819
    %v2880 = vpack.c.b16 %v2822, %v2820
    %v2881 = vpack.c.b16 %v2825, %v2823
    %v2882 = vpack.c.b16 %v2826, %v2824
    %v2883 = vpack.c.b16 %v2829, %v2827
    %v2884 = vpack.c.b16 %v2830, %v2828
    %v2885 = vpack.c.b16 %v2833, %v2831
    %v2886 = vpack.c.b16 %v2834, %v2832
    %v2887 = vpack.c.b16 %v2837, %v2835
    %v2888 = vpack.c.b16 %v2838, %v2836
    %v2889 = vpack.c.b16 %v2841, %v2839
    %v2890 = vpack.c.b16 %v2842, %v2840
    %v2891 = vpack.c.b16 %v2845, %v2843
    %v2892 = vpack.c.b16 %v2846, %v2844
    %v2893 = vpack.c.b16 %v2849, %v2847
    %v2894 = vpack.c.b16 %v2850, %v2848
    %v2895 = vpack.c.b16 %v2853, %v2851
    %v2896 = vpack.c.b16 %v2854, %v2852
    %v2897 = vpack.c.b16 %v2857, %v2855
    %v2898 = vpack.c.b16 %v2858, %v2856
    %v2899 = vpack.c.b16 %v2861, %v2859
    %v2900 = vpack.c.b16 %v2862, %v2860
    %v2901 = vpack.c.b16 %v2865, %v2863
    %v2902 = vpack.c.b16 %v2866, %v2864
    %v2903 = vpack.c.b16 %v2869, %v2867
    %v2904 = vpack.c.b16 %v2870, %v2868
    %v2905 = vpack.c.b16 %v2873, %v2871
    %v2906 = vpack.c.b16 %v2874, %v2872
    %2939 = vmatprep.subr.bf16.mxu0 %v2876
    %2940 = vmatpush1.bf16.msra.mxu0 %v2875
    %2941 = vmatprep.subr.bf16.mxu0 %v2878
    %2942 = vmatpush1.bf16.msra.mxu0 %v2877
    %2943 = vmatprep.subr.bf16.mxu0 %v2880
    %2944 = vmatpush1.bf16.msra.mxu0 %v2879
    %2945 = vmatprep.subr.bf16.mxu0 %v2882
    %2946 = vmatpush1.bf16.msra.mxu0 %v2881
    %2947 = vmatprep.subr.bf16.mxu0 %v2884
    %2948 = vmatpush1.bf16.msra.mxu0 %v2883
    %2949 = vmatprep.subr.bf16.mxu0 %v2886
    %2950 = vmatpush1.bf16.msra.mxu0 %v2885
    %2951 = vmatprep.subr.bf16.mxu0 %v2888
    %2952 = vmatpush1.bf16.msra.mxu0 %v2887
    %2953 = vmatprep.subr.bf16.mxu0 %v2890
    %2954 = vmatpush1.bf16.msra.mxu0 %v2889
    %2955 = vmatprep.subr.bf16.mxu0 %v2892
    %2956 = vmatpush1.bf16.msra.mxu0 %v2891
    %2957 = vmatprep.subr.bf16.mxu0 %v2894
    %2958 = vmatpush1.bf16.msra.mxu0 %v2893
    %2959 = vmatprep.subr.bf16.mxu0 %v2896
    %2960 = vmatpush1.bf16.msra.mxu0 %v2895
    %2961 = vmatprep.subr.bf16.mxu0 %v2898
    %2962 = vmatpush1.bf16.msra.mxu0 %v2897
    %2963 = vmatprep.subr.bf16.mxu0 %v2900
    %2964 = vmatpush1.bf16.msra.mxu0 %v2899
    %2965 = vmatprep.subr.bf16.mxu0 %v2902
    %2966 = vmatpush1.bf16.msra.mxu0 %v2901
    %2967 = vmatprep.subr.bf16.mxu0 %v2904
    %2968 = vmatpush1.bf16.msra.mxu0 %v2903
    %2969 = vmatprep.subr.bf16.mxu0 %v2906
    %2970 = vmatpush1.bf16.msra.mxu0 %v2905
    %2971 = vmatprep.mubr.bf16.mxu0 %v2732
    %2972 = vmatmul.mubr.bf16.gmra.mrb[0].mxu0 %v2731
    %v2973 = vpop.f32.mrb[0].mxu0
    %v2974 = vadd.f32 %v2772, %v2973
    %v2975 = vpop.f32.mrb[0].mxu0
    %v2976 = vadd.f32 %v2776, %v2975
    %v2977 = vpop.f32.mrb[0].mxu0
    %v2978 = vadd.f32 %v2772, %v2977
    %v2979 = vpop.f32.mrb[0].mxu0
    %v2980 = vadd.f32 %v2776, %v2979
    %2981 = vdwg.mxu0
    %v2982 = vmax.f32 %v2974, 0.0
    %v2983 = vmax.f32 %v2976, 0.0
    %v2984 = vmax.f32 %v2978, 0.0
    %v2985 = vmax.f32 %v2980, 0.0
    %s2986 = scalar_lea.vmem [#allocation10], 512
    %v2987 = vld [vmem:[%s2986] sm:$0xff]
    %v2988 = vld [vmem:[%s2986 + $0x8] sm:$0xff]
    %v2989 = vld [vmem:[%s2986 + $0x10] sm:$0xff]
    %v2990 = vld [vmem:[%s2986 + $0x18] sm:$0xff]
    %v2991 = vld [vmem:[%s2986 + $0x20] sm:$0xff]
    %v2992 = vld [vmem:[%s2986 + $0x28] sm:$0xff]
    %v2993 = vld [vmem:[%s2986 + $0x30] sm:$0xff]
    %v2994 = vld [vmem:[%s2986 + $0x38] sm:$0xff]
    %v2995 = vld [vmem:[%s2986 + $0x40] sm:$0xff]
    %v2996 = vld [vmem:[%s2986 + $0x48] sm:$0xff]
    %v2997 = vld [vmem:[%s2986 + $0x50] sm:$0xff]
    %v2998 = vld [vmem:[%s2986 + $0x58] sm:$0xff]
    %v2999 = vld [vmem:[%s2986 + $0x60] sm:$0xff]
    %v3000 = vld [vmem:[%s2986 + $0x68] sm:$0xff]
    %v3001 = vld [vmem:[%s2986 + $0x70] sm:$0xff]
    %v3002 = vld [vmem:[%s2986 + $0x78] sm:$0xff]
    %v3003 = vld [vmem:[%s2986 + $0x80] sm:$0xff]
    %v3004 = vld [vmem:[%s2986 + $0x88] sm:$0xff]
    %v3005 = vld [vmem:[%s2986 + $0x90] sm:$0xff]
    %v3006 = vld [vmem:[%s2986 + $0x98] sm:$0xff]
    %v3007 = vld [vmem:[%s2986 + $0xa0] sm:$0xff]
    %v3008 = vld [vmem:[%s2986 + $0xa8] sm:$0xff]
    %v3009 = vld [vmem:[%s2986 + $0xb0] sm:$0xff]
    %v3010 = vld [vmem:[%s2986 + $0xb8] sm:$0xff]
    %v3011 = vld [vmem:[%s2986 + $0xc0] sm:$0xff]
    %v3012 = vld [vmem:[%s2986 + $0xc8] sm:$0xff]
    %v3013 = vld [vmem:[%s2986 + $0xd0] sm:$0xff]
    %v3014 = vld [vmem:[%s2986 + $0xd8] sm:$0xff]
    %v3015 = vld [vmem:[%s2986 + $0xe0] sm:$0xff]
    %v3016 = vld [vmem:[%s2986 + $0xe8] sm:$0xff]
    %v3017 = vld [vmem:[%s2986 + $0xf0] sm:$0xff]
    %v3018 = vld [vmem:[%s2986 + $0xf8] sm:$0xff]
    %3019 = vmatprep.subr.mxu0 0.0
    %3020 = vmatpush1.msra.mxu0 %v2987
    %3021 = vmatprep.subr.mxu0 0.0
    %3022 = vmatpush1.msra.mxu0 %v2988
    %3023 = vmatprep.subr.mxu0 0.0
    %3024 = vmatpush1.msra.mxu0 %v2989
    %3025 = vmatprep.subr.mxu0 0.0
    %3026 = vmatpush1.msra.mxu0 %v2990
    %3027 = vmatprep.subr.mxu0 0.0
    %3028 = vmatpush1.msra.mxu0 %v2991
    %3029 = vmatprep.subr.mxu0 0.0
    %3030 = vmatpush1.msra.mxu0 %v2992
    %3031 = vmatprep.subr.mxu0 0.0
    %3032 = vmatpush1.msra.mxu0 %v2993
    %3033 = vmatprep.subr.mxu0 0.0
    %3034 = vmatpush1.msra.mxu0 %v2994
    %3035 = vmatprep.subr.mxu0 0.0
    %3036 = vmatpush1.msra.mxu0 %v2995
    %3037 = vmatprep.subr.mxu0 0.0
    %3038 = vmatpush1.msra.mxu0 %v2996
    %3039 = vmatprep.subr.mxu0 0.0
    %3040 = vmatpush1.msra.mxu0 %v2997
    %3041 = vmatprep.subr.mxu0 0.0
    %3042 = vmatpush1.msra.mxu0 %v2998
    %3043 = vmatprep.subr.mxu0 0.0
    %3044 = vmatpush1.msra.mxu0 %v2999
    %3045 = vmatprep.subr.mxu0 0.0
    %3046 = vmatpush1.msra.mxu0 %v3000
    %3047 = vmatprep.subr.mxu0 0.0
    %3048 = vmatpush1.msra.mxu0 %v3001
    %3049 = vmatprep.subr.mxu0 0.0
    %3050 = vmatpush1.msra.mxu0 %v3002
    %3051 = vmatprep.subr.mxu0 0.0
    %3052 = vmatpush1.msra.mxu0 %v3003
    %3053 = vmatprep.subr.mxu0 0.0
    %3054 = vmatpush1.msra.mxu0 %v3004
    %3055 = vmatprep.subr.mxu0 0.0
    %3056 = vmatpush1.msra.mxu0 %v3005
    %3057 = vmatprep.subr.mxu0 0.0
    %3058 = vmatpush1.msra.mxu0 %v3006
    %3059 = vmatprep.subr.mxu0 0.0
    %3060 = vmatpush1.msra.mxu0 %v3007
    %3061 = vmatprep.subr.mxu0 0.0
    %3062 = vmatpush1.msra.mxu0 %v3008
    %3063 = vmatprep.subr.mxu0 0.0
    %3064 = vmatpush1.msra.mxu0 %v3009
    %3065 = vmatprep.subr.mxu0 0.0
    %3066 = vmatpush1.msra.mxu0 %v3010
    %3067 = vmatprep.subr.mxu0 0.0
    %3068 = vmatpush1.msra.mxu0 %v3011
    %3069 = vmatprep.subr.mxu0 0.0
    %3070 = vmatpush1.msra.mxu0 %v3012
    %3071 = vmatprep.subr.mxu0 0.0
    %3072 = vmatpush1.msra.mxu0 %v3013
    %3073 = vmatprep.subr.mxu0 0.0
    %3074 = vmatpush1.msra.mxu0 %v3014
    %3075 = vmatprep.subr.mxu0 0.0
    %3076 = vmatpush1.msra.mxu0 %v3015
    %3077 = vmatprep.subr.mxu0 0.0
    %3078 = vmatpush1.msra.mxu0 %v3016
    %3079 = vmatprep.subr.mxu0 0.0
    %3080 = vmatpush1.msra.mxu0 %v3017
    %3081 = vmatprep.subr.mxu0 0.0
    %3082 = vmatpush1.msra.mxu0 %v3018
    %3083 = vmatprep.mubr.f32.mxu0 %v2983
    %3084 = vmatmul.mubr.f32.gmra.mrb[0].mxu0 %v2982
    %v3085 = vpop.f32.mrb[0].mxu0
    %v3086 = vadd.f32 0.0, %v3085
    %v3087 = vpop.f32.mrb[0].mxu0
    %3088 = vmatprep.mubr.f32.mxu0 %v2985
    %3089 = vmatmul.mubr.f32.gmra.mrb[0].mxu0 %v2984
    %v3090 = vpop.f32.mrb[0].mxu0
    %v3091 = vadd.f32 0.0, %v3090
    %v3092 = vpop.f32.mrb[0].mxu0
    %3093 = vdwg.mxu0
    %v3094 = vadd.f32 %v2092, %v3086
    %v3095 = vadd.f32 %v2093, %v3091
    %s3096 = scalar_lea.vmem [#allocation5], 768
    %v3097 = vld [vmem:[%s3096] sm:$0xff]
    %v3098 = vld [vmem:[%s3096 + $0x8] sm:$0xff]
    %v3099 = vld [vmem:[%s3096 + $0x10] sm:$0xff]
    %v3100 = vld [vmem:[%s3096 + $0x18] sm:$0xff]
    %v3101 = vld [vmem:[%s3096 + $0x20] sm:$0xff]
    %v3102 = vld [vmem:[%s3096 + $0x28] sm:$0xff]
    %v3103 = vld [vmem:[%s3096 + $0x30] sm:$0xff]
    %v3104 = vld [vmem:[%s3096 + $0x38] sm:$0xff]
    %v3105 = vld [vmem:[%s3096 + $0x40] sm:$0xff]
    %v3106 = vld [vmem:[%s3096 + $0x48] sm:$0xff]
    %v3107 = vld [vmem:[%s3096 + $0x50] sm:$0xff]
    %v3108 = vld [vmem:[%s3096 + $0x58] sm:$0xff]
    %v3109 = vld [vmem:[%s3096 + $0x60] sm:$0xff]
    %v3110 = vld [vmem:[%s3096 + $0x68] sm:$0xff]
    %v3111 = vld [vmem:[%s3096 + $0x70] sm:$0xff]
    %v3112 = vld [vmem:[%s3096 + $0x78] sm:$0xff]
    %v3113 = vld [vmem:[%s3096 + $0x80] sm:$0xff]
    %v3114 = vld [vmem:[%s3096 + $0x88] sm:$0xff]
    %v3115 = vld [vmem:[%s3096 + $0x90] sm:$0xff]
    %v3116 = vld [vmem:[%s3096 + $0x98] sm:$0xff]
    %v3117 = vld [vmem:[%s3096 + $0xa0] sm:$0xff]
    %v3118 = vld [vmem:[%s3096 + $0xa8] sm:$0xff]
    %v3119 = vld [vmem:[%s3096 + $0xb0] sm:$0xff]
    %v3120 = vld [vmem:[%s3096 + $0xb8] sm:$0xff]
    %v3121 = vld [vmem:[%s3096 + $0xc0] sm:$0xff]
    %v3122 = vld [vmem:[%s3096 + $0xc8] sm:$0xff]
    %v3123 = vld [vmem:[%s3096 + $0xd0] sm:$0xff]
    %v3124 = vld [vmem:[%s3096 + $0xd8] sm:$0xff]
    %v3125 = vld [vmem:[%s3096 + $0xe0] sm:$0xff]
    %v3126 = vld [vmem:[%s3096 + $0xe8] sm:$0xff]
    %v3127 = vld [vmem:[%s3096 + $0xf0] sm:$0xff]
    %v3128 = vld [vmem:[%s3096 + $0xf8] sm:$0xff]
    %s3129 = scalar_lea.vmem [#allocation8], 20
    %v3130 = vld [vmem:[%s3129] ss:$8 sm:$0x3]
    %v3132 = vlaneseq
    %v3133 = vshrl.u32 %v3132, 7
    %v3134 = vsub.s32 0, %v3133
    %v3135 = vrot.slane %v3130, %v3134
    %v3136 = vlaneseq
    %v3137 = vshrl.u32 %v3136, 7
    %v3138 = vsub.s32 1, %v3137
    %v3139 = vrot.slane %v3130, %v3138
    %3142 = vmatprep.subr.mxu0 %v3098
    %3143 = vmatpush1.msra.mxu0 %v3097
    %3144 = vmatprep.subr.mxu0 %v3100
    %3145 = vmatpush1.msra.mxu0 %v3099
    %3146 = vmatprep.subr.mxu0 %v3102
    %3147 = vmatpush1.msra.mxu0 %v3101
    %3148 = vmatprep.subr.mxu0 %v3104
    %3149 = vmatpush1.msra.mxu0 %v3103
    %3150 = vmatprep.subr.mxu0 %v3106
    %3151 = vmatpush1.msra.mxu0 %v3105
    %3152 = vmatprep.subr.mxu0 %v3108
    %3153 = vmatpush1.msra.mxu0 %v3107
    %3154 = vmatprep.subr.mxu0 %v3110
    %3155 = vmatpush1.msra.mxu0 %v3109
    %3156 = vmatprep.subr.mxu0 %v3112
    %3157 = vmatpush1.msra.mxu0 %v3111
    %3158 = vmatprep.subr.mxu0 %v3114
    %3159 = vmatpush1.msra.mxu0 %v3113
    %3160 = vmatprep.subr.mxu0 %v3116
    %3161 = vmatpush1.msra.mxu0 %v3115
    %3162 = vmatprep.subr.mxu0 %v3118
    %3163 = vmatpush1.msra.mxu0 %v3117
    %3164 = vmatprep.subr.mxu0 %v3120
    %3165 = vmatpush1.msra.mxu0 %v3119
    %3166 = vmatprep.subr.mxu0 %v3122
    %3167 = vmatpush1.msra.mxu0 %v3121
    %3168 = vmatprep.subr.mxu0 %v3124
    %3169 = vmatpush1.msra.mxu0 %v3123
    %3170 = vmatprep.subr.mxu0 %v3126
    %3171 = vmatpush1.msra.mxu0 %v3125
    %3172 = vmatprep.subr.mxu0 %v3128
    %3173 = vmatpush1.msra.mxu0 %v3127
    %3174 = vmatprep.subr.mxu0 0.0
    %3175 = vmatpush1.msra.mxu0 0.0
    %3176 = vmatprep.subr.mxu0 0.0
    %3177 = vmatpush1.msra.mxu0 0.0
    %3178 = vmatprep.subr.mxu0 0.0
    %3179 = vmatpush1.msra.mxu0 0.0
    %3180 = vmatprep.subr.mxu0 0.0
    %3181 = vmatpush1.msra.mxu0 0.0
    %3182 = vmatprep.subr.mxu0 0.0
    %3183 = vmatpush1.msra.mxu0 0.0
    %3184 = vmatprep.subr.mxu0 0.0
    %3185 = vmatpush1.msra.mxu0 0.0
    %3186 = vmatprep.subr.mxu0 0.0
    %3187 = vmatpush1.msra.mxu0 0.0
    %3188 = vmatprep.subr.mxu0 0.0
    %3189 = vmatpush1.msra.mxu0 0.0
    %3190 = vmatprep.subr.mxu0 0.0
    %3191 = vmatpush1.msra.mxu0 0.0
    %3192 = vmatprep.subr.mxu0 0.0
    %3193 = vmatpush1.msra.mxu0 0.0
    %3194 = vmatprep.subr.mxu0 0.0
    %3195 = vmatpush1.msra.mxu0 0.0
    %3196 = vmatprep.subr.mxu0 0.0
    %3197 = vmatpush1.msra.mxu0 0.0
    %3198 = vmatprep.subr.mxu0 0.0
    %3199 = vmatpush1.msra.mxu0 0.0
    %3200 = vmatprep.subr.mxu0 0.0
    %3201 = vmatpush1.msra.mxu0 0.0
    %3202 = vmatprep.subr.mxu0 0.0
    %3203 = vmatpush1.msra.mxu0 0.0
    %3204 = vmatprep.subr.mxu0 0.0
    %3205 = vmatpush1.msra.mxu0 0.0
    %3206 = vmatprep.mubr.f32.mxu0 0.0
    %3207 = vmatmul.mubr.f32.gmra.mrb[0].mxu0 %v3094
    %v3208 = vpop.f32.mrb[0].mxu0
    %v3209 = vadd.f32 %v3135, %v3208
    %v3210 = vpop.f32.mrb[0].mxu0
    %v3211 = vadd.f32 %v3139, %v3210
    %3212 = vmatprep.mubr.f32.mxu0 0.0
    %3213 = vmatmul.mubr.f32.gmra.mrb[0].mxu0 %v3095
    %v3214 = vpop.f32.mrb[0].mxu0
    %v3215 = vadd.f32 %v3135, %v3214
    %v3216 = vpop.f32.mrb[0].mxu0
    %v3217 = vadd.f32 %v3139, %v3216
    %3218 = vdwg.mxu0
    %v3219 = vmax.f32 %v3209, 0.0
    %v3220 = vmax.f32 %v3211, 0.0
    %v3221 = vmax.f32 %v3215, 0.0
    %v3222 = vmax.f32 %v3217, 0.0
    %v3223 = vpack.c.bf16 %v3221, %v3219
    %v3224 = vpack.c.bf16 %v3222, %v3220
    %s3225 = scalar_lea.vmem [#allocation7], 2304
    %v3226 = vld [vmem:[%s3225] sm:$0xff]
    %v3227 = vld [vmem:[%s3225 + $0x8] sm:$0xff]
    %v3228 = vld [vmem:[%s3225 + $0x10] sm:$0xff]
    %v3229 = vld [vmem:[%s3225 + $0x18] sm:$0xff]
    %v3230 = vld [vmem:[%s3225 + $0x20] sm:$0xff]
    %v3231 = vld [vmem:[%s3225 + $0x28] sm:$0xff]
    %v3232 = vld [vmem:[%s3225 + $0x30] sm:$0xff]
    %v3233 = vld [vmem:[%s3225 + $0x38] sm:$0xff]
    %v3234 = vld [vmem:[%s3225 + $0x40] sm:$0xff]
    %v3235 = vld [vmem:[%s3225 + $0x48] sm:$0xff]
    %v3236 = vld [vmem:[%s3225 + $0x50] sm:$0xff]
    %v3237 = vld [vmem:[%s3225 + $0x58] sm:$0xff]
    %v3238 = vld [vmem:[%s3225 + $0x60] sm:$0xff]
    %v3239 = vld [vmem:[%s3225 + $0x68] sm:$0xff]
    %v3240 = vld [vmem:[%s3225 + $0x70] sm:$0xff]
    %v3241 = vld [vmem:[%s3225 + $0x78] sm:$0xff]
    %v3242 = vld [vmem:[%s3225 + $0x80] sm:$0xff]
    %v3243 = vld [vmem:[%s3225 + $0x88] sm:$0xff]
    %v3244 = vld [vmem:[%s3225 + $0x90] sm:$0xff]
    %v3245 = vld [vmem:[%s3225 + $0x98] sm:$0xff]
    %v3246 = vld [vmem:[%s3225 + $0xa0] sm:$0xff]
    %v3247 = vld [vmem:[%s3225 + $0xa8] sm:$0xff]
    %v3248 = vld [vmem:[%s3225 + $0xb0] sm:$0xff]
    %v3249 = vld [vmem:[%s3225 + $0xb8] sm:$0xff]
    %v3250 = vld [vmem:[%s3225 + $0xc0] sm:$0xff]
    %v3251 = vld [vmem:[%s3225 + $0xc8] sm:$0xff]
    %v3252 = vld [vmem:[%s3225 + $0xd0] sm:$0xff]
    %v3253 = vld [vmem:[%s3225 + $0xd8] sm:$0xff]
    %v3254 = vld [vmem:[%s3225 + $0xe0] sm:$0xff]
    %v3255 = vld [vmem:[%s3225 + $0xe8] sm:$0xff]
    %v3256 = vld [vmem:[%s3225 + $0xf0] sm:$0xff]
    %v3257 = vld [vmem:[%s3225 + $0xf8] sm:$0xff]
    %s3258 = scalar_lea.vmem [#allocation8], 21
    %v3259 = vld [vmem:[%s3258] ss:$8 sm:$0x3]
    %v3261 = vlaneseq
    %v3262 = vshrl.u32 %v3261, 7
    %v3263 = vsub.s32 0, %v3262
    %v3264 = vrot.slane %v3259, %v3263
    %v3265 = vlaneseq
    %v3266 = vshrl.u32 %v3265, 7
    %v3267 = vsub.s32 1, %v3266
    %v3268 = vrot.slane %v3259, %v3267
    %v3303 = vunpack.c.l.b16 %v3226
    %v3304 = vunpack.c.h.b16 %v3226
    %v3305 = vunpack.c.l.b16 %v3227
    %v3306 = vunpack.c.h.b16 %v3227
    %v3307 = vunpack.c.l.b16 %v3228
    %v3308 = vunpack.c.h.b16 %v3228
    %v3309 = vunpack.c.l.b16 %v3229
    %v3310 = vunpack.c.h.b16 %v3229
    %v3311 = vunpack.c.l.b16 %v3230
    %v3312 = vunpack.c.h.b16 %v3230
    %v3313 = vunpack.c.l.b16 %v3231
    %v3314 = vunpack.c.h.b16 %v3231
    %v3315 = vunpack.c.l.b16 %v3232
    %v3316 = vunpack.c.h.b16 %v3232
    %v3317 = vunpack.c.l.b16 %v3233
    %v3318 = vunpack.c.h.b16 %v3233
    %v3319 = vunpack.c.l.b16 %v3234
    %v3320 = vunpack.c.h.b16 %v3234
    %v3321 = vunpack.c.l.b16 %v3235
    %v3322 = vunpack.c.h.b16 %v3235
    %v3323 = vunpack.c.l.b16 %v3236
    %v3324 = vunpack.c.h.b16 %v3236
    %v3325 = vunpack.c.l.b16 %v3237
    %v3326 = vunpack.c.h.b16 %v3237
    %v3327 = vunpack.c.l.b16 %v3238
    %v3328 = vunpack.c.h.b16 %v3238
    %v3329 = vunpack.c.l.b16 %v3239
    %v3330 = vunpack.c.h.b16 %v3239
    %v3331 = vunpack.c.l.b16 %v3240
    %v3332 = vunpack.c.h.b16 %v3240
    %v3333 = vunpack.c.l.b16 %v3241
    %v3334 = vunpack.c.h.b16 %v3241
    %v3335 = vunpack.c.l.b16 %v3242
    %v3336 = vunpack.c.h.b16 %v3242
    %v3337 = vunpack.c.l.b16 %v3243
    %v3338 = vunpack.c.h.b16 %v3243
    %v3339 = vunpack.c.l.b16 %v3244
    %v3340 = vunpack.c.h.b16 %v3244
    %v3341 = vunpack.c.l.b16 %v3245
    %v3342 = vunpack.c.h.b16 %v3245
    %v3343 = vunpack.c.l.b16 %v3246
    %v3344 = vunpack.c.h.b16 %v3246
    %v3345 = vunpack.c.l.b16 %v3247
    %v3346 = vunpack.c.h.b16 %v3247
    %v3347 = vunpack.c.l.b16 %v3248
    %v3348 = vunpack.c.h.b16 %v3248
    %v3349 = vunpack.c.l.b16 %v3249
    %v3350 = vunpack.c.h.b16 %v3249
    %v3351 = vunpack.c.l.b16 %v3250
    %v3352 = vunpack.c.h.b16 %v3250
    %v3353 = vunpack.c.l.b16 %v3251
    %v3354 = vunpack.c.h.b16 %v3251
    %v3355 = vunpack.c.l.b16 %v3252
    %v3356 = vunpack.c.h.b16 %v3252
    %v3357 = vunpack.c.l.b16 %v3253
    %v3358 = vunpack.c.h.b16 %v3253
    %v3359 = vunpack.c.l.b16 %v3254
    %v3360 = vunpack.c.h.b16 %v3254
    %v3361 = vunpack.c.l.b16 %v3255
    %v3362 = vunpack.c.h.b16 %v3255
    %v3363 = vunpack.c.l.b16 %v3256
    %v3364 = vunpack.c.h.b16 %v3256
    %v3365 = vunpack.c.l.b16 %v3257
    %v3366 = vunpack.c.h.b16 %v3257
    %v3367 = vpack.c.b16 %v3305, %v3303
    %v3368 = vpack.c.b16 %v3306, %v3304
    %v3369 = vpack.c.b16 %v3309, %v3307
    %v3370 = vpack.c.b16 %v3310, %v3308
    %v3371 = vpack.c.b16 %v3313, %v3311
    %v3372 = vpack.c.b16 %v3314, %v3312
    %v3373 = vpack.c.b16 %v3317, %v3315
    %v3374 = vpack.c.b16 %v3318, %v3316
    %v3375 = vpack.c.b16 %v3321, %v3319
    %v3376 = vpack.c.b16 %v3322, %v3320
    %v3377 = vpack.c.b16 %v3325, %v3323
    %v3378 = vpack.c.b16 %v3326, %v3324
    %v3379 = vpack.c.b16 %v3329, %v3327
    %v3380 = vpack.c.b16 %v3330, %v3328
    %v3381 = vpack.c.b16 %v3333, %v3331
    %v3382 = vpack.c.b16 %v3334, %v3332
    %v3383 = vpack.c.b16 %v3337, %v3335
    %v3384 = vpack.c.b16 %v3338, %v3336
    %v3385 = vpack.c.b16 %v3341, %v3339
    %v3386 = vpack.c.b16 %v3342, %v3340
    %v3387 = vpack.c.b16 %v3345, %v3343
    %v3388 = vpack.c.b16 %v3346, %v3344
    %v3389 = vpack.c.b16 %v3349, %v3347
    %v3390 = vpack.c.b16 %v3350, %v3348
    %v3391 = vpack.c.b16 %v3353, %v3351
    %v3392 = vpack.c.b16 %v3354, %v3352
    %v3393 = vpack.c.b16 %v3357, %v3355
    %v3394 = vpack.c.b16 %v3358, %v3356
    %v3395 = vpack.c.b16 %v3361, %v3359
    %v3396 = vpack.c.b16 %v3362, %v3360
    %v3397 = vpack.c.b16 %v3365, %v3363
    %v3398 = vpack.c.b16 %v3366, %v3364
    %3431 = vmatprep.subr.bf16.mxu0 %v3368
    %3432 = vmatpush1.bf16.msra.mxu0 %v3367
    %3433 = vmatprep.subr.bf16.mxu0 %v3370
    %3434 = vmatpush1.bf16.msra.mxu0 %v3369
    %3435 = vmatprep.subr.bf16.mxu0 %v3372
    %3436 = vmatpush1.bf16.msra.mxu0 %v3371
    %3437 = vmatprep.subr.bf16.mxu0 %v3374
    %3438 = vmatpush1.bf16.msra.mxu0 %v3373
    %3439 = vmatprep.subr.bf16.mxu0 %v3376
    %3440 = vmatpush1.bf16.msra.mxu0 %v3375
    %3441 = vmatprep.subr.bf16.mxu0 %v3378
    %3442 = vmatpush1.bf16.msra.mxu0 %v3377
    %3443 = vmatprep.subr.bf16.mxu0 %v3380
    %3444 = vmatpush1.bf16.msra.mxu0 %v3379
    %3445 = vmatprep.subr.bf16.mxu0 %v3382
    %3446 = vmatpush1.bf16.msra.mxu0 %v3381
    %3447 = vmatprep.subr.bf16.mxu0 %v3384
    %3448 = vmatpush1.bf16.msra.mxu0 %v3383
    %3449 = vmatprep.subr.bf16.mxu0 %v3386
    %3450 = vmatpush1.bf16.msra.mxu0 %v3385
    %3451 = vmatprep.subr.bf16.mxu0 %v3388
    %3452 = vmatpush1.bf16.msra.mxu0 %v3387
    %3453 = vmatprep.subr.bf16.mxu0 %v3390
    %3454 = vmatpush1.bf16.msra.mxu0 %v3389
    %3455 = vmatprep.subr.bf16.mxu0 %v3392
    %3456 = vmatpush1.bf16.msra.mxu0 %v3391
    %3457 = vmatprep.subr.bf16.mxu0 %v3394
    %3458 = vmatpush1.bf16.msra.mxu0 %v3393
    %3459 = vmatprep.subr.bf16.mxu0 %v3396
    %3460 = vmatpush1.bf16.msra.mxu0 %v3395
    %3461 = vmatprep.subr.bf16.mxu0 %v3398
    %3462 = vmatpush1.bf16.msra.mxu0 %v3397
    %3463 = vmatprep.mubr.bf16.mxu0 %v3224
    %3464 = vmatmul.mubr.bf16.gmra.mrb[0].mxu0 %v3223
    %v3465 = vpop.f32.mrb[0].mxu0
    %v3466 = vadd.f32 %v3264, %v3465
    %v3467 = vpop.f32.mrb[0].mxu0
    %v3468 = vadd.f32 %v3268, %v3467
    %v3469 = vpop.f32.mrb[0].mxu0
    %v3470 = vadd.f32 %v3264, %v3469
    %v3471 = vpop.f32.mrb[0].mxu0
    %v3472 = vadd.f32 %v3268, %v3471
    %3473 = vdwg.mxu0
    %v3474 = vmax.f32 %v3466, 0.0
    %v3475 = vmax.f32 %v3468, 0.0
    %v3476 = vmax.f32 %v3470, 0.0
    %v3477 = vmax.f32 %v3472, 0.0
    %v3478 = vpack.c.bf16 %v3476, %v3474
    %v3479 = vpack.c.bf16 %v3477, %v3475
    %s3480 = scalar_lea.vmem [#allocation7], 2560
    %v3481 = vld [vmem:[%s3480] sm:$0xff]
    %v3482 = vld [vmem:[%s3480 + $0x8] sm:$0xff]
    %v3483 = vld [vmem:[%s3480 + $0x10] sm:$0xff]
    %v3484 = vld [vmem:[%s3480 + $0x18] sm:$0xff]
    %v3485 = vld [vmem:[%s3480 + $0x20] sm:$0xff]
    %v3486 = vld [vmem:[%s3480 + $0x28] sm:$0xff]
    %v3487 = vld [vmem:[%s3480 + $0x30] sm:$0xff]
    %v3488 = vld [vmem:[%s3480 + $0x38] sm:$0xff]
    %v3489 = vld [vmem:[%s3480 + $0x40] sm:$0xff]
    %v3490 = vld [vmem:[%s3480 + $0x48] sm:$0xff]
    %v3491 = vld [vmem:[%s3480 + $0x50] sm:$0xff]
    %v3492 = vld [vmem:[%s3480 + $0x58] sm:$0xff]
    %v3493 = vld [vmem:[%s3480 + $0x60] sm:$0xff]
    %v3494 = vld [vmem:[%s3480 + $0x68] sm:$0xff]
    %v3495 = vld [vmem:[%s3480 + $0x70] sm:$0xff]
    %v3496 = vld [vmem:[%s3480 + $0x78] sm:$0xff]
    %v3497 = vld [vmem:[%s3480 + $0x80] sm:$0xff]
    %v3498 = vld [vmem:[%s3480 + $0x88] sm:$0xff]
    %v3499 = vld [vmem:[%s3480 + $0x90] sm:$0xff]
    %v3500 = vld [vmem:[%s3480 + $0x98] sm:$0xff]
    %v3501 = vld [vmem:[%s3480 + $0xa0] sm:$0xff]
    %v3502 = vld [vmem:[%s3480 + $0xa8] sm:$0xff]
    %v3503 = vld [vmem:[%s3480 + $0xb0] sm:$0xff]
    %v3504 = vld [vmem:[%s3480 + $0xb8] sm:$0xff]
    %v3505 = vld [vmem:[%s3480 + $0xc0] sm:$0xff]
    %v3506 = vld [vmem:[%s3480 + $0xc8] sm:$0xff]
    %v3507 = vld [vmem:[%s3480 + $0xd0] sm:$0xff]
    %v3508 = vld [vmem:[%s3480 + $0xd8] sm:$0xff]
    %v3509 = vld [vmem:[%s3480 + $0xe0] sm:$0xff]
    %v3510 = vld [vmem:[%s3480 + $0xe8] sm:$0xff]
    %v3511 = vld [vmem:[%s3480 + $0xf0] sm:$0xff]
    %v3512 = vld [vmem:[%s3480 + $0xf8] sm:$0xff]
    %s3513 = scalar_lea.vmem [#allocation8], 22
    %v3514 = vld [vmem:[%s3513] ss:$8 sm:$0x3]
    %v3516 = vlaneseq
    %v3517 = vshrl.u32 %v3516, 7
    %v3518 = vsub.s32 0, %v3517
    %v3519 = vrot.slane %v3514, %v3518
    %v3520 = vlaneseq
    %v3521 = vshrl.u32 %v3520, 7
    %v3522 = vsub.s32 1, %v3521
    %v3523 = vrot.slane %v3514, %v3522
    %v3558 = vunpack.c.l.b16 %v3481
    %v3559 = vunpack.c.h.b16 %v3481
    %v3560 = vunpack.c.l.b16 %v3482
    %v3561 = vunpack.c.h.b16 %v3482
    %v3562 = vunpack.c.l.b16 %v3483
    %v3563 = vunpack.c.h.b16 %v3483
    %v3564 = vunpack.c.l.b16 %v3484
    %v3565 = vunpack.c.h.b16 %v3484
    %v3566 = vunpack.c.l.b16 %v3485
    %v3567 = vunpack.c.h.b16 %v3485
    %v3568 = vunpack.c.l.b16 %v3486
    %v3569 = vunpack.c.h.b16 %v3486
    %v3570 = vunpack.c.l.b16 %v3487
    %v3571 = vunpack.c.h.b16 %v3487
    %v3572 = vunpack.c.l.b16 %v3488
    %v3573 = vunpack.c.h.b16 %v3488
    %v3574 = vunpack.c.l.b16 %v3489
    %v3575 = vunpack.c.h.b16 %v3489
    %v3576 = vunpack.c.l.b16 %v3490
    %v3577 = vunpack.c.h.b16 %v3490
    %v3578 = vunpack.c.l.b16 %v3491
    %v3579 = vunpack.c.h.b16 %v3491
    %v3580 = vunpack.c.l.b16 %v3492
    %v3581 = vunpack.c.h.b16 %v3492
    %v3582 = vunpack.c.l.b16 %v3493
    %v3583 = vunpack.c.h.b16 %v3493
    %v3584 = vunpack.c.l.b16 %v3494
    %v3585 = vunpack.c.h.b16 %v3494
    %v3586 = vunpack.c.l.b16 %v3495
    %v3587 = vunpack.c.h.b16 %v3495
    %v3588 = vunpack.c.l.b16 %v3496
    %v3589 = vunpack.c.h.b16 %v3496
    %v3590 = vunpack.c.l.b16 %v3497
    %v3591 = vunpack.c.h.b16 %v3497
    %v3592 = vunpack.c.l.b16 %v3498
    %v3593 = vunpack.c.h.b16 %v3498
    %v3594 = vunpack.c.l.b16 %v3499
    %v3595 = vunpack.c.h.b16 %v3499
    %v3596 = vunpack.c.l.b16 %v3500
    %v3597 = vunpack.c.h.b16 %v3500
    %v3598 = vunpack.c.l.b16 %v3501
    %v3599 = vunpack.c.h.b16 %v3501
    %v3600 = vunpack.c.l.b16 %v3502
    %v3601 = vunpack.c.h.b16 %v3502
    %v3602 = vunpack.c.l.b16 %v3503
    %v3603 = vunpack.c.h.b16 %v3503
    %v3604 = vunpack.c.l.b16 %v3504
    %v3605 = vunpack.c.h.b16 %v3504
    %v3606 = vunpack.c.l.b16 %v3505
    %v3607 = vunpack.c.h.b16 %v3505
    %v3608 = vunpack.c.l.b16 %v3506
    %v3609 = vunpack.c.h.b16 %v3506
    %v3610 = vunpack.c.l.b16 %v3507
    %v3611 = vunpack.c.h.b16 %v3507
    %v3612 = vunpack.c.l.b16 %v3508
    %v3613 = vunpack.c.h.b16 %v3508
    %v3614 = vunpack.c.l.b16 %v3509
    %v3615 = vunpack.c.h.b16 %v3509
    %v3616 = vunpack.c.l.b16 %v3510
    %v3617 = vunpack.c.h.b16 %v3510
    %v3618 = vunpack.c.l.b16 %v3511
    %v3619 = vunpack.c.h.b16 %v3511
    %v3620 = vunpack.c.l.b16 %v3512
    %v3621 = vunpack.c.h.b16 %v3512
    %v3622 = vpack.c.b16 %v3560, %v3558
    %v3623 = vpack.c.b16 %v3561, %v3559
    %v3624 = vpack.c.b16 %v3564, %v3562
    %v3625 = vpack.c.b16 %v3565, %v3563
    %v3626 = vpack.c.b16 %v3568, %v3566
    %v3627 = vpack.c.b16 %v3569, %v3567
    %v3628 = vpack.c.b16 %v3572, %v3570
    %v3629 = vpack.c.b16 %v3573, %v3571
    %v3630 = vpack.c.b16 %v3576, %v3574
    %v3631 = vpack.c.b16 %v3577, %v3575
    %v3632 = vpack.c.b16 %v3580, %v3578
    %v3633 = vpack.c.b16 %v3581, %v3579
    %v3634 = vpack.c.b16 %v3584, %v3582
    %v3635 = vpack.c.b16 %v3585, %v3583
    %v3636 = vpack.c.b16 %v3588, %v3586
    %v3637 = vpack.c.b16 %v3589, %v3587
    %v3638 = vpack.c.b16 %v3592, %v3590
    %v3639 = vpack.c.b16 %v3593, %v3591
    %v3640 = vpack.c.b16 %v3596, %v3594
    %v3641 = vpack.c.b16 %v3597, %v3595
    %v3642 = vpack.c.b16 %v3600, %v3598
    %v3643 = vpack.c.b16 %v3601, %v3599
    %v3644 = vpack.c.b16 %v3604, %v3602
    %v3645 = vpack.c.b16 %v3605, %v3603
    %v3646 = vpack.c.b16 %v3608, %v3606
    %v3647 = vpack.c.b16 %v3609, %v3607
    %v3648 = vpack.c.b16 %v3612, %v3610
    %v3649 = vpack.c.b16 %v3613, %v3611
    %v3650 = vpack.c.b16 %v3616, %v3614
    %v3651 = vpack.c.b16 %v3617, %v3615
    %v3652 = vpack.c.b16 %v3620, %v3618
    %v3653 = vpack.c.b16 %v3621, %v3619
    %3686 = vmatprep.subr.bf16.mxu0 %v3623
    %3687 = vmatpush1.bf16.msra.mxu0 %v3622
    %3688 = vmatprep.subr.bf16.mxu0 %v3625
    %3689 = vmatpush1.bf16.msra.mxu0 %v3624
    %3690 = vmatprep.subr.bf16.mxu0 %v3627
    %3691 = vmatpush1.bf16.msra.mxu0 %v3626
    %3692 = vmatprep.subr.bf16.mxu0 %v3629
    %3693 = vmatpush1.bf16.msra.mxu0 %v3628
    %3694 = vmatprep.subr.bf16.mxu0 %v3631
    %3695 = vmatpush1.bf16.msra.mxu0 %v3630
    %3696 = vmatprep.subr.bf16.mxu0 %v3633
    %3697 = vmatpush1.bf16.msra.mxu0 %v3632
    %3698 = vmatprep.subr.bf16.mxu0 %v3635
    %3699 = vmatpush1.bf16.msra.mxu0 %v3634
    %3700 = vmatprep.subr.bf16.mxu0 %v3637
    %3701 = vmatpush1.bf16.msra.mxu0 %v3636
    %3702 = vmatprep.subr.bf16.mxu0 %v3639
    %3703 = vmatpush1.bf16.msra.mxu0 %v3638
    %3704 = vmatprep.subr.bf16.mxu0 %v3641
    %3705 = vmatpush1.bf16.msra.mxu0 %v3640
    %3706 = vmatprep.subr.bf16.mxu0 %v3643
    %3707 = vmatpush1.bf16.msra.mxu0 %v3642
    %3708 = vmatprep.subr.bf16.mxu0 %v3645
    %3709 = vmatpush1.bf16.msra.mxu0 %v3644
    %3710 = vmatprep.subr.bf16.mxu0 %v3647
    %3711 = vmatpush1.bf16.msra.mxu0 %v3646
    %3712 = vmatprep.subr.bf16.mxu0 %v3649
    %3713 = vmatpush1.bf16.msra.mxu0 %v3648
    %3714 = vmatprep.subr.bf16.mxu0 %v3651
    %3715 = vmatpush1.bf16.msra.mxu0 %v3650
    %3716 = vmatprep.subr.bf16.mxu0 %v3653
    %3717 = vmatpush1.bf16.msra.mxu0 %v3652
    %3718 = vmatprep.mubr.bf16.mxu0 %v3479
    %3719 = vmatmul.mubr.bf16.gmra.mrb[0].mxu0 %v3478
    %v3720 = vpop.f32.mrb[0].mxu0
    %v3721 = vadd.f32 %v3519, %v3720
    %v3722 = vpop.f32.mrb[0].mxu0
    %v3723 = vadd.f32 %v3523, %v3722
    %v3724 = vpop.f32.mrb[0].mxu0
    %v3725 = vadd.f32 %v3519, %v3724
    %v3726 = vpop.f32.mrb[0].mxu0
    %v3727 = vadd.f32 %v3523, %v3726
    %3728 = vdwg.mxu0
    %v3729 = vmax.f32 %v3721, 0.0
    %v3730 = vmax.f32 %v3723, 0.0
    %v3731 = vmax.f32 %v3725, 0.0
    %v3732 = vmax.f32 %v3727, 0.0
    %v3733 = vpack.c.bf16 %v3731, %v3729
    %v3734 = vpack.c.bf16 %v3732, %v3730
    %s3735 = scalar_lea.vmem [#allocation7], 2816
    %v3736 = vld [vmem:[%s3735] sm:$0xff]
    %v3737 = vld [vmem:[%s3735 + $0x8] sm:$0xff]
    %v3738 = vld [vmem:[%s3735 + $0x10] sm:$0xff]
    %v3739 = vld [vmem:[%s3735 + $0x18] sm:$0xff]
    %v3740 = vld [vmem:[%s3735 + $0x20] sm:$0xff]
    %v3741 = vld [vmem:[%s3735 + $0x28] sm:$0xff]
    %v3742 = vld [vmem:[%s3735 + $0x30] sm:$0xff]
    %v3743 = vld [vmem:[%s3735 + $0x38] sm:$0xff]
    %v3744 = vld [vmem:[%s3735 + $0x40] sm:$0xff]
    %v3745 = vld [vmem:[%s3735 + $0x48] sm:$0xff]
    %v3746 = vld [vmem:[%s3735 + $0x50] sm:$0xff]
    %v3747 = vld [vmem:[%s3735 + $0x58] sm:$0xff]
    %v3748 = vld [vmem:[%s3735 + $0x60] sm:$0xff]
    %v3749 = vld [vmem:[%s3735 + $0x68] sm:$0xff]
    %v3750 = vld [vmem:[%s3735 + $0x70] sm:$0xff]
    %v3751 = vld [vmem:[%s3735 + $0x78] sm:$0xff]
    %v3752 = vld [vmem:[%s3735 + $0x80] sm:$0xff]
    %v3753 = vld [vmem:[%s3735 + $0x88] sm:$0xff]
    %v3754 = vld [vmem:[%s3735 + $0x90] sm:$0xff]
    %v3755 = vld [vmem:[%s3735 + $0x98] sm:$0xff]
    %v3756 = vld [vmem:[%s3735 + $0xa0] sm:$0xff]
    %v3757 = vld [vmem:[%s3735 + $0xa8] sm:$0xff]
    %v3758 = vld [vmem:[%s3735 + $0xb0] sm:$0xff]
    %v3759 = vld [vmem:[%s3735 + $0xb8] sm:$0xff]
    %v3760 = vld [vmem:[%s3735 + $0xc0] sm:$0xff]
    %v3761 = vld [vmem:[%s3735 + $0xc8] sm:$0xff]
    %v3762 = vld [vmem:[%s3735 + $0xd0] sm:$0xff]
    %v3763 = vld [vmem:[%s3735 + $0xd8] sm:$0xff]
    %v3764 = vld [vmem:[%s3735 + $0xe0] sm:$0xff]
    %v3765 = vld [vmem:[%s3735 + $0xe8] sm:$0xff]
    %v3766 = vld [vmem:[%s3735 + $0xf0] sm:$0xff]
    %v3767 = vld [vmem:[%s3735 + $0xf8] sm:$0xff]
    %s3768 = scalar_lea.vmem [#allocation8], 23
    %v3769 = vld [vmem:[%s3768] ss:$8 sm:$0x3]
    %v3771 = vlaneseq
    %v3772 = vshrl.u32 %v3771, 7
    %v3773 = vsub.s32 0, %v3772
    %v3774 = vrot.slane %v3769, %v3773
    %v3775 = vlaneseq
    %v3776 = vshrl.u32 %v3775, 7
    %v3777 = vsub.s32 1, %v3776
    %v3778 = vrot.slane %v3769, %v3777
    %v3813 = vunpack.c.l.b16 %v3736
    %v3814 = vunpack.c.h.b16 %v3736
    %v3815 = vunpack.c.l.b16 %v3737
    %v3816 = vunpack.c.h.b16 %v3737
    %v3817 = vunpack.c.l.b16 %v3738
    %v3818 = vunpack.c.h.b16 %v3738
    %v3819 = vunpack.c.l.b16 %v3739
    %v3820 = vunpack.c.h.b16 %v3739
    %v3821 = vunpack.c.l.b16 %v3740
    %v3822 = vunpack.c.h.b16 %v3740
    %v3823 = vunpack.c.l.b16 %v3741
    %v3824 = vunpack.c.h.b16 %v3741
    %v3825 = vunpack.c.l.b16 %v3742
    %v3826 = vunpack.c.h.b16 %v3742
    %v3827 = vunpack.c.l.b16 %v3743
    %v3828 = vunpack.c.h.b16 %v3743
    %v3829 = vunpack.c.l.b16 %v3744
    %v3830 = vunpack.c.h.b16 %v3744
    %v3831 = vunpack.c.l.b16 %v3745
    %v3832 = vunpack.c.h.b16 %v3745
    %v3833 = vunpack.c.l.b16 %v3746
    %v3834 = vunpack.c.h.b16 %v3746
    %v3835 = vunpack.c.l.b16 %v3747
    %v3836 = vunpack.c.h.b16 %v3747
    %v3837 = vunpack.c.l.b16 %v3748
    %v3838 = vunpack.c.h.b16 %v3748
    %v3839 = vunpack.c.l.b16 %v3749
    %v3840 = vunpack.c.h.b16 %v3749
    %v3841 = vunpack.c.l.b16 %v3750
    %v3842 = vunpack.c.h.b16 %v3750
    %v3843 = vunpack.c.l.b16 %v3751
    %v3844 = vunpack.c.h.b16 %v3751
    %v3845 = vunpack.c.l.b16 %v3752
    %v3846 = vunpack.c.h.b16 %v3752
    %v3847 = vunpack.c.l.b16 %v3753
    %v3848 = vunpack.c.h.b16 %v3753
    %v3849 = vunpack.c.l.b16 %v3754
    %v3850 = vunpack.c.h.b16 %v3754
    %v3851 = vunpack.c.l.b16 %v3755
    %v3852 = vunpack.c.h.b16 %v3755
    %v3853 = vunpack.c.l.b16 %v3756
    %v3854 = vunpack.c.h.b16 %v3756
    %v3855 = vunpack.c.l.b16 %v3757
    %v3856 = vunpack.c.h.b16 %v3757
    %v3857 = vunpack.c.l.b16 %v3758
    %v3858 = vunpack.c.h.b16 %v3758
    %v3859 = vunpack.c.l.b16 %v3759
    %v3860 = vunpack.c.h.b16 %v3759
    %v3861 = vunpack.c.l.b16 %v3760
    %v3862 = vunpack.c.h.b16 %v3760
    %v3863 = vunpack.c.l.b16 %v3761
    %v3864 = vunpack.c.h.b16 %v3761
    %v3865 = vunpack.c.l.b16 %v3762
    %v3866 = vunpack.c.h.b16 %v3762
    %v3867 = vunpack.c.l.b16 %v3763
    %v3868 = vunpack.c.h.b16 %v3763
    %v3869 = vunpack.c.l.b16 %v3764
    %v3870 = vunpack.c.h.b16 %v3764
    %v3871 = vunpack.c.l.b16 %v3765
    %v3872 = vunpack.c.h.b16 %v3765
    %v3873 = vunpack.c.l.b16 %v3766
    %v3874 = vunpack.c.h.b16 %v3766
    %v3875 = vunpack.c.l.b16 %v3767
    %v3876 = vunpack.c.h.b16 %v3767
    %v3877 = vpack.c.b16 %v3815, %v3813
    %v3878 = vpack.c.b16 %v3816, %v3814
    %v3879 = vpack.c.b16 %v3819, %v3817
    %v3880 = vpack.c.b16 %v3820, %v3818
    %v3881 = vpack.c.b16 %v3823, %v3821
    %v3882 = vpack.c.b16 %v3824, %v3822
    %v3883 = vpack.c.b16 %v3827, %v3825
    %v3884 = vpack.c.b16 %v3828, %v3826
    %v3885 = vpack.c.b16 %v3831, %v3829
    %v3886 = vpack.c.b16 %v3832, %v3830
    %v3887 = vpack.c.b16 %v3835, %v3833
    %v3888 = vpack.c.b16 %v3836, %v3834
    %v3889 = vpack.c.b16 %v3839, %v3837
    %v3890 = vpack.c.b16 %v3840, %v3838
    %v3891 = vpack.c.b16 %v3843, %v3841
    %v3892 = vpack.c.b16 %v3844, %v3842
    %v3893 = vpack.c.b16 %v3847, %v3845
    %v3894 = vpack.c.b16 %v3848, %v3846
    %v3895 = vpack.c.b16 %v3851, %v3849
    %v3896 = vpack.c.b16 %v3852, %v3850
    %v3897 = vpack.c.b16 %v3855, %v3853
    %v3898 = vpack.c.b16 %v3856, %v3854
    %v3899 = vpack.c.b16 %v3859, %v3857
    %v3900 = vpack.c.b16 %v3860, %v3858
    %v3901 = vpack.c.b16 %v3863, %v3861
    %v3902 = vpack.c.b16 %v3864, %v3862
    %v3903 = vpack.c.b16 %v3867, %v3865
    %v3904 = vpack.c.b16 %v3868, %v3866
    %v3905 = vpack.c.b16 %v3871, %v3869
    %v3906 = vpack.c.b16 %v3872, %v3870
    %v3907 = vpack.c.b16 %v3875, %v3873
    %v3908 = vpack.c.b16 %v3876, %v3874
    %3941 = vmatprep.subr.bf16.mxu0 %v3878
    %3942 = vmatpush1.bf16.msra.mxu0 %v3877
    %3943 = vmatprep.subr.bf16.mxu0 %v3880
    %3944 = vmatpush1.bf16.msra.mxu0 %v3879
    %3945 = vmatprep.subr.bf16.mxu0 %v3882
    %3946 = vmatpush1.bf16.msra.mxu0 %v3881
    %3947 = vmatprep.subr.bf16.mxu0 %v3884
    %3948 = vmatpush1.bf16.msra.mxu0 %v3883
    %3949 = vmatprep.subr.bf16.mxu0 %v3886
    %3950 = vmatpush1.bf16.msra.mxu0 %v3885
    %3951 = vmatprep.subr.bf16.mxu0 %v3888
    %3952 = vmatpush1.bf16.msra.mxu0 %v3887
    %3953 = vmatprep.subr.bf16.mxu0 %v3890
    %3954 = vmatpush1.bf16.msra.mxu0 %v3889
    %3955 = vmatprep.subr.bf16.mxu0 %v3892
    %3956 = vmatpush1.bf16.msra.mxu0 %v3891
    %3957 = vmatprep.subr.bf16.mxu0 %v3894
    %3958 = vmatpush1.bf16.msra.mxu0 %v3893
    %3959 = vmatprep.subr.bf16.mxu0 %v3896
    %3960 = vmatpush1.bf16.msra.mxu0 %v3895
    %3961 = vmatprep.subr.bf16.mxu0 %v3898
    %3962 = vmatpush1.bf16.msra.mxu0 %v3897
    %3963 = vmatprep.subr.bf16.mxu0 %v3900
    %3964 = vmatpush1.bf16.msra.mxu0 %v3899
    %3965 = vmatprep.subr.bf16.mxu0 %v3902
    %3966 = vmatpush1.bf16.msra.mxu0 %v3901
    %3967 = vmatprep.subr.bf16.mxu0 %v3904
    %3968 = vmatpush1.bf16.msra.mxu0 %v3903
    %3969 = vmatprep.subr.bf16.mxu0 %v3906
    %3970 = vmatpush1.bf16.msra.mxu0 %v3905
    %3971 = vmatprep.subr.bf16.mxu0 %v3908
    %3972 = vmatpush1.bf16.msra.mxu0 %v3907
    %3973 = vmatprep.mubr.bf16.mxu0 %v3734
    %3974 = vmatmul.mubr.bf16.gmra.mrb[0].mxu0 %v3733
    %v3975 = vpop.f32.mrb[0].mxu0
    %v3976 = vadd.f32 %v3774, %v3975
    %v3977 = vpop.f32.mrb[0].mxu0
    %v3978 = vadd.f32 %v3778, %v3977
    %v3979 = vpop.f32.mrb[0].mxu0
    %v3980 = vadd.f32 %v3774, %v3979
    %v3981 = vpop.f32.mrb[0].mxu0
    %v3982 = vadd.f32 %v3778, %v3981
    %3983 = vdwg.mxu0
    %v3984 = vmax.f32 %v3976, 0.0
    %v3985 = vmax.f32 %v3978, 0.0
    %v3986 = vmax.f32 %v3980, 0.0
    %v3987 = vmax.f32 %v3982, 0.0
    %s3988 = scalar_lea.vmem [#allocation10], 768
    %v3989 = vld [vmem:[%s3988] sm:$0xff]
    %v3990 = vld [vmem:[%s3988 + $0x8] sm:$0xff]
    %v3991 = vld [vmem:[%s3988 + $0x10] sm:$0xff]
    %v3992 = vld [vmem:[%s3988 + $0x18] sm:$0xff]
    %v3993 = vld [vmem:[%s3988 + $0x20] sm:$0xff]
    %v3994 = vld [vmem:[%s3988 + $0x28] sm:$0xff]
    %v3995 = vld [vmem:[%s3988 + $0x30] sm:$0xff]
    %v3996 = vld [vmem:[%s3988 + $0x38] sm:$0xff]
    %v3997 = vld [vmem:[%s3988 + $0x40] sm:$0xff]
    %v3998 = vld [vmem:[%s3988 + $0x48] sm:$0xff]
    %v3999 = vld [vmem:[%s3988 + $0x50] sm:$0xff]
    %v4000 = vld [vmem:[%s3988 + $0x58] sm:$0xff]
    %v4001 = vld [vmem:[%s3988 + $0x60] sm:$0xff]
    %v4002 = vld [vmem:[%s3988 + $0x68] sm:$0xff]
    %v4003 = vld [vmem:[%s3988 + $0x70] sm:$0xff]
    %v4004 = vld [vmem:[%s3988 + $0x78] sm:$0xff]
    %v4005 = vld [vmem:[%s3988 + $0x80] sm:$0xff]
    %v4006 = vld [vmem:[%s3988 + $0x88] sm:$0xff]
    %v4007 = vld [vmem:[%s3988 + $0x90] sm:$0xff]
    %v4008 = vld [vmem:[%s3988 + $0x98] sm:$0xff]
    %v4009 = vld [vmem:[%s3988 + $0xa0] sm:$0xff]
    %v4010 = vld [vmem:[%s3988 + $0xa8] sm:$0xff]
    %v4011 = vld [vmem:[%s3988 + $0xb0] sm:$0xff]
    %v4012 = vld [vmem:[%s3988 + $0xb8] sm:$0xff]
    %v4013 = vld [vmem:[%s3988 + $0xc0] sm:$0xff]
    %v4014 = vld [vmem:[%s3988 + $0xc8] sm:$0xff]
    %v4015 = vld [vmem:[%s3988 + $0xd0] sm:$0xff]
    %v4016 = vld [vmem:[%s3988 + $0xd8] sm:$0xff]
    %v4017 = vld [vmem:[%s3988 + $0xe0] sm:$0xff]
    %v4018 = vld [vmem:[%s3988 + $0xe8] sm:$0xff]
    %v4019 = vld [vmem:[%s3988 + $0xf0] sm:$0xff]
    %v4020 = vld [vmem:[%s3988 + $0xf8] sm:$0xff]
    %4021 = vmatprep.subr.mxu0 0.0
    %4022 = vmatpush1.msra.mxu0 %v3989
    %4023 = vmatprep.subr.mxu0 0.0
    %4024 = vmatpush1.msra.mxu0 %v3990
    %4025 = vmatprep.subr.mxu0 0.0
    %4026 = vmatpush1.msra.mxu0 %v3991
    %4027 = vmatprep.subr.mxu0 0.0
    %4028 = vmatpush1.msra.mxu0 %v3992
    %4029 = vmatprep.subr.mxu0 0.0
    %4030 = vmatpush1.msra.mxu0 %v3993
    %4031 = vmatprep.subr.mxu0 0.0
    %4032 = vmatpush1.msra.mxu0 %v3994
    %4033 = vmatprep.subr.mxu0 0.0
    %4034 = vmatpush1.msra.mxu0 %v3995
    %4035 = vmatprep.subr.mxu0 0.0
    %4036 = vmatpush1.msra.mxu0 %v3996
    %4037 = vmatprep.subr.mxu0 0.0
    %4038 = vmatpush1.msra.mxu0 %v3997
    %4039 = vmatprep.subr.mxu0 0.0
    %4040 = vmatpush1.msra.mxu0 %v3998
    %4041 = vmatprep.subr.mxu0 0.0
    %4042 = vmatpush1.msra.mxu0 %v3999
    %4043 = vmatprep.subr.mxu0 0.0
    %4044 = vmatpush1.msra.mxu0 %v4000
    %4045 = vmatprep.subr.mxu0 0.0
    %4046 = vmatpush1.msra.mxu0 %v4001
    %4047 = vmatprep.subr.mxu0 0.0
    %4048 = vmatpush1.msra.mxu0 %v4002
    %4049 = vmatprep.subr.mxu0 0.0
    %4050 = vmatpush1.msra.mxu0 %v4003
    %4051 = vmatprep.subr.mxu0 0.0
    %4052 = vmatpush1.msra.mxu0 %v4004
    %4053 = vmatprep.subr.mxu0 0.0
    %4054 = vmatpush1.msra.mxu0 %v4005
    %4055 = vmatprep.subr.mxu0 0.0
    %4056 = vmatpush1.msra.mxu0 %v4006
    %4057 = vmatprep.subr.mxu0 0.0
    %4058 = vmatpush1.msra.mxu0 %v4007
    %4059 = vmatprep.subr.mxu0 0.0
    %4060 = vmatpush1.msra.mxu0 %v4008
    %4061 = vmatprep.subr.mxu0 0.0
    %4062 = vmatpush1.msra.mxu0 %v4009
    %4063 = vmatprep.subr.mxu0 0.0
    %4064 = vmatpush1.msra.mxu0 %v4010
    %4065 = vmatprep.subr.mxu0 0.0
    %4066 = vmatpush1.msra.mxu0 %v4011
    %4067 = vmatprep.subr.mxu0 0.0
    %4068 = vmatpush1.msra.mxu0 %v4012
    %4069 = vmatprep.subr.mxu0 0.0
    %4070 = vmatpush1.msra.mxu0 %v4013
    %4071 = vmatprep.subr.mxu0 0.0
    %4072 = vmatpush1.msra.mxu0 %v4014
    %4073 = vmatprep.subr.mxu0 0.0
    %4074 = vmatpush1.msra.mxu0 %v4015
    %4075 = vmatprep.subr.mxu0 0.0
    %4076 = vmatpush1.msra.mxu0 %v4016
    %4077 = vmatprep.subr.mxu0 0.0
    %4078 = vmatpush1.msra.mxu0 %v4017
    %4079 = vmatprep.subr.mxu0 0.0
    %4080 = vmatpush1.msra.mxu0 %v4018
    %4081 = vmatprep.subr.mxu0 0.0
    %4082 = vmatpush1.msra.mxu0 %v4019
    %4083 = vmatprep.subr.mxu0 0.0
    %4084 = vmatpush1.msra.mxu0 %v4020
    %4085 = vmatprep.mubr.f32.mxu0 %v3985
    %4086 = vmatmul.mubr.f32.gmra.mrb[0].mxu0 %v3984
    %v4087 = vpop.f32.mrb[0].mxu0
    %v4088 = vadd.f32 0.0, %v4087
    %v4089 = vpop.f32.mrb[0].mxu0
    %4090 = vmatprep.mubr.f32.mxu0 %v3987
    %4091 = vmatmul.mubr.f32.gmra.mrb[0].mxu0 %v3986
    %v4092 = vpop.f32.mrb[0].mxu0
    %v4093 = vadd.f32 0.0, %v4092
    %v4094 = vpop.f32.mrb[0].mxu0
    %4095 = vdwg.mxu0
    %v4096 = vadd.f32 %v3094, %v4088
    %v4097 = vadd.f32 %v3095, %v4093
    %s4098 = scalar_lea.vmem [#allocation5], 1024
    %v4099 = vld [vmem:[%s4098] sm:$0xff]
    %v4100 = vld [vmem:[%s4098 + $0x8] sm:$0xff]
    %v4101 = vld [vmem:[%s4098 + $0x10] sm:$0xff]
    %v4102 = vld [vmem:[%s4098 + $0x18] sm:$0xff]
    %v4103 = vld [vmem:[%s4098 + $0x20] sm:$0xff]
    %v4104 = vld [vmem:[%s4098 + $0x28] sm:$0xff]
    %v4105 = vld [vmem:[%s4098 + $0x30] sm:$0xff]
    %v4106 = vld [vmem:[%s4098 + $0x38] sm:$0xff]
    %v4107 = vld [vmem:[%s4098 + $0x40] sm:$0xff]
    %v4108 = vld [vmem:[%s4098 + $0x48] sm:$0xff]
    %v4109 = vld [vmem:[%s4098 + $0x50] sm:$0xff]
    %v4110 = vld [vmem:[%s4098 + $0x58] sm:$0xff]
    %v4111 = vld [vmem:[%s4098 + $0x60] sm:$0xff]
    %v4112 = vld [vmem:[%s4098 + $0x68] sm:$0xff]
    %v4113 = vld [vmem:[%s4098 + $0x70] sm:$0xff]
    %v4114 = vld [vmem:[%s4098 + $0x78] sm:$0xff]
    %v4115 = vld [vmem:[%s4098 + $0x80] sm:$0xff]
    %v4116 = vld [vmem:[%s4098 + $0x88] sm:$0xff]
    %v4117 = vld [vmem:[%s4098 + $0x90] sm:$0xff]
    %v4118 = vld [vmem:[%s4098 + $0x98] sm:$0xff]
    %v4119 = vld [vmem:[%s4098 + $0xa0] sm:$0xff]
    %v4120 = vld [vmem:[%s4098 + $0xa8] sm:$0xff]
    %v4121 = vld [vmem:[%s4098 + $0xb0] sm:$0xff]
    %v4122 = vld [vmem:[%s4098 + $0xb8] sm:$0xff]
    %v4123 = vld [vmem:[%s4098 + $0xc0] sm:$0xff]
    %v4124 = vld [vmem:[%s4098 + $0xc8] sm:$0xff]
    %v4125 = vld [vmem:[%s4098 + $0xd0] sm:$0xff]
    %v4126 = vld [vmem:[%s4098 + $0xd8] sm:$0xff]
    %v4127 = vld [vmem:[%s4098 + $0xe0] sm:$0xff]
    %v4128 = vld [vmem:[%s4098 + $0xe8] sm:$0xff]
    %v4129 = vld [vmem:[%s4098 + $0xf0] sm:$0xff]
    %v4130 = vld [vmem:[%s4098 + $0xf8] sm:$0xff]
    %s4131 = scalar_lea.vmem [#allocation8], 32
    %v4132 = vld [vmem:[%s4131] ss:$8 sm:$0x3]
    %v4134 = vlaneseq
    %v4135 = vshrl.u32 %v4134, 7
    %v4136 = vsub.s32 0, %v4135
    %v4137 = vrot.slane %v4132, %v4136
    %v4138 = vlaneseq
    %v4139 = vshrl.u32 %v4138, 7
    %v4140 = vsub.s32 1, %v4139
    %v4141 = vrot.slane %v4132, %v4140
    %4144 = vmatprep.subr.mxu0 %v4100
    %4145 = vmatpush1.msra.mxu0 %v4099
    %4146 = vmatprep.subr.mxu0 %v4102
    %4147 = vmatpush1.msra.mxu0 %v4101
    %4148 = vmatprep.subr.mxu0 %v4104
    %4149 = vmatpush1.msra.mxu0 %v4103
    %4150 = vmatprep.subr.mxu0 %v4106
    %4151 = vmatpush1.msra.mxu0 %v4105
    %4152 = vmatprep.subr.mxu0 %v4108
    %4153 = vmatpush1.msra.mxu0 %v4107
    %4154 = vmatprep.subr.mxu0 %v4110
    %4155 = vmatpush1.msra.mxu0 %v4109
    %4156 = vmatprep.subr.mxu0 %v4112
    %4157 = vmatpush1.msra.mxu0 %v4111
    %4158 = vmatprep.subr.mxu0 %v4114
    %4159 = vmatpush1.msra.mxu0 %v4113
    %4160 = vmatprep.subr.mxu0 %v4116
    %4161 = vmatpush1.msra.mxu0 %v4115
    %4162 = vmatprep.subr.mxu0 %v4118
    %4163 = vmatpush1.msra.mxu0 %v4117
    %4164 = vmatprep.subr.mxu0 %v4120
    %4165 = vmatpush1.msra.mxu0 %v4119
    %4166 = vmatprep.subr.mxu0 %v4122
    %4167 = vmatpush1.msra.mxu0 %v4121
    %4168 = vmatprep.subr.mxu0 %v4124
    %4169 = vmatpush1.msra.mxu0 %v4123
    %4170 = vmatprep.subr.mxu0 %v4126
    %4171 = vmatpush1.msra.mxu0 %v4125
    %4172 = vmatprep.subr.mxu0 %v4128
    %4173 = vmatpush1.msra.mxu0 %v4127
    %4174 = vmatprep.subr.mxu0 %v4130
    %4175 = vmatpush1.msra.mxu0 %v4129
    %4176 = vmatprep.subr.mxu0 0.0
    %4177 = vmatpush1.msra.mxu0 0.0
    %4178 = vmatprep.subr.mxu0 0.0
    %4179 = vmatpush1.msra.mxu0 0.0
    %4180 = vmatprep.subr.mxu0 0.0
    %4181 = vmatpush1.msra.mxu0 0.0
    %4182 = vmatprep.subr.mxu0 0.0
    %4183 = vmatpush1.msra.mxu0 0.0
    %4184 = vmatprep.subr.mxu0 0.0
    %4185 = vmatpush1.msra.mxu0 0.0
    %4186 = vmatprep.subr.mxu0 0.0
    %4187 = vmatpush1.msra.mxu0 0.0
    %4188 = vmatprep.subr.mxu0 0.0
    %4189 = vmatpush1.msra.mxu0 0.0
    %4190 = vmatprep.subr.mxu0 0.0
    %4191 = vmatpush1.msra.mxu0 0.0
    %4192 = vmatprep.subr.mxu0 0.0
    %4193 = vmatpush1.msra.mxu0 0.0
    %4194 = vmatprep.subr.mxu0 0.0
    %4195 = vmatpush1.msra.mxu0 0.0
    %4196 = vmatprep.subr.mxu0 0.0
    %4197 = vmatpush1.msra.mxu0 0.0
    %4198 = vmatprep.subr.mxu0 0.0
    %4199 = vmatpush1.msra.mxu0 0.0
    %4200 = vmatprep.subr.mxu0 0.0
    %4201 = vmatpush1.msra.mxu0 0.0
    %4202 = vmatprep.subr.mxu0 0.0
    %4203 = vmatpush1.msra.mxu0 0.0
    %4204 = vmatprep.subr.mxu0 0.0
    %4205 = vmatpush1.msra.mxu0 0.0
    %4206 = vmatprep.subr.mxu0 0.0
    %4207 = vmatpush1.msra.mxu0 0.0
    %4208 = vmatprep.mubr.f32.mxu0 0.0
    %4209 = vmatmul.mubr.f32.gmra.mrb[0].mxu0 %v4096
    %v4210 = vpop.f32.mrb[0].mxu0
    %v4211 = vadd.f32 %v4137, %v4210
    %v4212 = vpop.f32.mrb[0].mxu0
    %v4213 = vadd.f32 %v4141, %v4212
    %4214 = vmatprep.mubr.f32.mxu0 0.0
    %4215 = vmatmul.mubr.f32.gmra.mrb[0].mxu0 %v4097
    %v4216 = vpop.f32.mrb[0].mxu0
    %v4217 = vadd.f32 %v4137, %v4216
    %v4218 = vpop.f32.mrb[0].mxu0
    %v4219 = vadd.f32 %v4141, %v4218
    %4220 = vdwg.mxu0
    %v4221 = vmax.f32 %v4211, 0.0
    %v4222 = vmax.f32 %v4213, 0.0
    %v4223 = vmax.f32 %v4217, 0.0
    %v4224 = vmax.f32 %v4219, 0.0
    %v4225 = vpack.c.bf16 %v4223, %v4221
    %v4226 = vpack.c.bf16 %v4224, %v4222
    %s4227 = scalar_lea.vmem [#allocation7], 3072
    %v4228 = vld [vmem:[%s4227] sm:$0xff]
    %v4229 = vld [vmem:[%s4227 + $0x8] sm:$0xff]
    %v4230 = vld [vmem:[%s4227 + $0x10] sm:$0xff]
    %v4231 = vld [vmem:[%s4227 + $0x18] sm:$0xff]
    %v4232 = vld [vmem:[%s4227 + $0x20] sm:$0xff]
    %v4233 = vld [vmem:[%s4227 + $0x28] sm:$0xff]
    %v4234 = vld [vmem:[%s4227 + $0x30] sm:$0xff]
    %v4235 = vld [vmem:[%s4227 + $0x38] sm:$0xff]
    %v4236 = vld [vmem:[%s4227 + $0x40] sm:$0xff]
    %v4237 = vld [vmem:[%s4227 + $0x48] sm:$0xff]
    %v4238 = vld [vmem:[%s4227 + $0x50] sm:$0xff]
    %v4239 = vld [vmem:[%s4227 + $0x58] sm:$0xff]
    %v4240 = vld [vmem:[%s4227 + $0x60] sm:$0xff]
    %v4241 = vld [vmem:[%s4227 + $0x68] sm:$0xff]
    %v4242 = vld [vmem:[%s4227 + $0x70] sm:$0xff]
    %v4243 = vld [vmem:[%s4227 + $0x78] sm:$0xff]
    %v4244 = vld [vmem:[%s4227 + $0x80] sm:$0xff]
    %v4245 = vld [vmem:[%s4227 + $0x88] sm:$0xff]
    %v4246 = vld [vmem:[%s4227 + $0x90] sm:$0xff]
    %v4247 = vld [vmem:[%s4227 + $0x98] sm:$0xff]
    %v4248 = vld [vmem:[%s4227 + $0xa0] sm:$0xff]
    %v4249 = vld [vmem:[%s4227 + $0xa8] sm:$0xff]
    %v4250 = vld [vmem:[%s4227 + $0xb0] sm:$0xff]
    %v4251 = vld [vmem:[%s4227 + $0xb8] sm:$0xff]
    %v4252 = vld [vmem:[%s4227 + $0xc0] sm:$0xff]
    %v4253 = vld [vmem:[%s4227 + $0xc8] sm:$0xff]
    %v4254 = vld [vmem:[%s4227 + $0xd0] sm:$0xff]
    %v4255 = vld [vmem:[%s4227 + $0xd8] sm:$0xff]
    %v4256 = vld [vmem:[%s4227 + $0xe0] sm:$0xff]
    %v4257 = vld [vmem:[%s4227 + $0xe8] sm:$0xff]
    %v4258 = vld [vmem:[%s4227 + $0xf0] sm:$0xff]
    %v4259 = vld [vmem:[%s4227 + $0xf8] sm:$0xff]
    %s4260 = scalar_lea.vmem [#allocation8], 33
    %v4261 = vld [vmem:[%s4260] ss:$8 sm:$0x3]
    %v4263 = vlaneseq
    %v4264 = vshrl.u32 %v4263, 7
    %v4265 = vsub.s32 0, %v4264
    %v4266 = vrot.slane %v4261, %v4265
    %v4267 = vlaneseq
    %v4268 = vshrl.u32 %v4267, 7
    %v4269 = vsub.s32 1, %v4268
    %v4270 = vrot.slane %v4261, %v4269
    %v4305 = vunpack.c.l.b16 %v4228
    %v4306 = vunpack.c.h.b16 %v4228
    %v4307 = vunpack.c.l.b16 %v4229
    %v4308 = vunpack.c.h.b16 %v4229
    %v4309 = vunpack.c.l.b16 %v4230
    %v4310 = vunpack.c.h.b16 %v4230
    %v4311 = vunpack.c.l.b16 %v4231
    %v4312 = vunpack.c.h.b16 %v4231
    %v4313 = vunpack.c.l.b16 %v4232
    %v4314 = vunpack.c.h.b16 %v4232
    %v4315 = vunpack.c.l.b16 %v4233
    %v4316 = vunpack.c.h.b16 %v4233
    %v4317 = vunpack.c.l.b16 %v4234
    %v4318 = vunpack.c.h.b16 %v4234
    %v4319 = vunpack.c.l.b16 %v4235
    %v4320 = vunpack.c.h.b16 %v4235
    %v4321 = vunpack.c.l.b16 %v4236
    %v4322 = vunpack.c.h.b16 %v4236
    %v4323 = vunpack.c.l.b16 %v4237
    %v4324 = vunpack.c.h.b16 %v4237
    %v4325 = vunpack.c.l.b16 %v4238
    %v4326 = vunpack.c.h.b16 %v4238
    %v4327 = vunpack.c.l.b16 %v4239
    %v4328 = vunpack.c.h.b16 %v4239
    %v4329 = vunpack.c.l.b16 %v4240
    %v4330 = vunpack.c.h.b16 %v4240
    %v4331 = vunpack.c.l.b16 %v4241
    %v4332 = vunpack.c.h.b16 %v4241
    %v4333 = vunpack.c.l.b16 %v4242
    %v4334 = vunpack.c.h.b16 %v4242
    %v4335 = vunpack.c.l.b16 %v4243
    %v4336 = vunpack.c.h.b16 %v4243
    %v4337 = vunpack.c.l.b16 %v4244
    %v4338 = vunpack.c.h.b16 %v4244
    %v4339 = vunpack.c.l.b16 %v4245
    %v4340 = vunpack.c.h.b16 %v4245
    %v4341 = vunpack.c.l.b16 %v4246
    %v4342 = vunpack.c.h.b16 %v4246
    %v4343 = vunpack.c.l.b16 %v4247
    %v4344 = vunpack.c.h.b16 %v4247
    %v4345 = vunpack.c.l.b16 %v4248
    %v4346 = vunpack.c.h.b16 %v4248
    %v4347 = vunpack.c.l.b16 %v4249
    %v4348 = vunpack.c.h.b16 %v4249
    %v4349 = vunpack.c.l.b16 %v4250
    %v4350 = vunpack.c.h.b16 %v4250
    %v4351 = vunpack.c.l.b16 %v4251
    %v4352 = vunpack.c.h.b16 %v4251
    %v4353 = vunpack.c.l.b16 %v4252
    %v4354 = vunpack.c.h.b16 %v4252
    %v4355 = vunpack.c.l.b16 %v4253
    %v4356 = vunpack.c.h.b16 %v4253
    %v4357 = vunpack.c.l.b16 %v4254
    %v4358 = vunpack.c.h.b16 %v4254
    %v4359 = vunpack.c.l.b16 %v4255
    %v4360 = vunpack.c.h.b16 %v4255
    %v4361 = vunpack.c.l.b16 %v4256
    %v4362 = vunpack.c.h.b16 %v4256
    %v4363 = vunpack.c.l.b16 %v4257
    %v4364 = vunpack.c.h.b16 %v4257
    %v4365 = vunpack.c.l.b16 %v4258
    %v4366 = vunpack.c.h.b16 %v4258
    %v4367 = vunpack.c.l.b16 %v4259
    %v4368 = vunpack.c.h.b16 %v4259
    %v4369 = vpack.c.b16 %v4307, %v4305
    %v4370 = vpack.c.b16 %v4308, %v4306
    %v4371 = vpack.c.b16 %v4311, %v4309
    %v4372 = vpack.c.b16 %v4312, %v4310
    %v4373 = vpack.c.b16 %v4315, %v4313
    %v4374 = vpack.c.b16 %v4316, %v4314
    %v4375 = vpack.c.b16 %v4319, %v4317
    %v4376 = vpack.c.b16 %v4320, %v4318
    %v4377 = vpack.c.b16 %v4323, %v4321
    %v4378 = vpack.c.b16 %v4324, %v4322
    %v4379 = vpack.c.b16 %v4327, %v4325
    %v4380 = vpack.c.b16 %v4328, %v4326
    %v4381 = vpack.c.b16 %v4331, %v4329
    %v4382 = vpack.c.b16 %v4332, %v4330
    %v4383 = vpack.c.b16 %v4335, %v4333
    %v4384 = vpack.c.b16 %v4336, %v4334
    %v4385 = vpack.c.b16 %v4339, %v4337
    %v4386 = vpack.c.b16 %v4340, %v4338
    %v4387 = vpack.c.b16 %v4343, %v4341
    %v4388 = vpack.c.b16 %v4344, %v4342
    %v4389 = vpack.c.b16 %v4347, %v4345
    %v4390 = vpack.c.b16 %v4348, %v4346
    %v4391 = vpack.c.b16 %v4351, %v4349
    %v4392 = vpack.c.b16 %v4352, %v4350
    %v4393 = vpack.c.b16 %v4355, %v4353
    %v4394 = vpack.c.b16 %v4356, %v4354
    %v4395 = vpack.c.b16 %v4359, %v4357
    %v4396 = vpack.c.b16 %v4360, %v4358
    %v4397 = vpack.c.b16 %v4363, %v4361
    %v4398 = vpack.c.b16 %v4364, %v4362
    %v4399 = vpack.c.b16 %v4367, %v4365
    %v4400 = vpack.c.b16 %v4368, %v4366
    %4433 = vmatprep.subr.bf16.mxu0 %v4370
    %4434 = vmatpush1.bf16.msra.mxu0 %v4369
    %4435 = vmatprep.subr.bf16.mxu0 %v4372
    %4436 = vmatpush1.bf16.msra.mxu0 %v4371
    %4437 = vmatprep.subr.bf16.mxu0 %v4374
    %4438 = vmatpush1.bf16.msra.mxu0 %v4373
    %4439 = vmatprep.subr.bf16.mxu0 %v4376
    %4440 = vmatpush1.bf16.msra.mxu0 %v4375
    %4441 = vmatprep.subr.bf16.mxu0 %v4378
    %4442 = vmatpush1.bf16.msra.mxu0 %v4377
    %4443 = vmatprep.subr.bf16.mxu0 %v4380
    %4444 = vmatpush1.bf16.msra.mxu0 %v4379
    %4445 = vmatprep.subr.bf16.mxu0 %v4382
    %4446 = vmatpush1.bf16.msra.mxu0 %v4381
    %4447 = vmatprep.subr.bf16.mxu0 %v4384
    %4448 = vmatpush1.bf16.msra.mxu0 %v4383
    %4449 = vmatprep.subr.bf16.mxu0 %v4386
    %4450 = vmatpush1.bf16.msra.mxu0 %v4385
    %4451 = vmatprep.subr.bf16.mxu0 %v4388
    %4452 = vmatpush1.bf16.msra.mxu0 %v4387
    %4453 = vmatprep.subr.bf16.mxu0 %v4390
    %4454 = vmatpush1.bf16.msra.mxu0 %v4389
    %4455 = vmatprep.subr.bf16.mxu0 %v4392
    %4456 = vmatpush1.bf16.msra.mxu0 %v4391
    %4457 = vmatprep.subr.bf16.mxu0 %v4394
    %4458 = vmatpush1.bf16.msra.mxu0 %v4393
    %4459 = vmatprep.subr.bf16.mxu0 %v4396
    %4460 = vmatpush1.bf16.msra.mxu0 %v4395
    %4461 = vmatprep.subr.bf16.mxu0 %v4398
    %4462 = vmatpush1.bf16.msra.mxu0 %v4397
    %4463 = vmatprep.subr.bf16.mxu0 %v4400
    %4464 = vmatpush1.bf16.msra.mxu0 %v4399
    %4465 = vmatprep.mubr.bf16.mxu0 %v4226
    %4466 = vmatmul.mubr.bf16.gmra.mrb[0].mxu0 %v4225
    %v4467 = vpop.f32.mrb[0].mxu0
    %v4468 = vadd.f32 %v4266, %v4467
    %v4469 = vpop.f32.mrb[0].mxu0
    %v4470 = vadd.f32 %v4270, %v4469
    %v4471 = vpop.f32.mrb[0].mxu0
    %v4472 = vadd.f32 %v4266, %v4471
    %v4473 = vpop.f32.mrb[0].mxu0
    %v4474 = vadd.f32 %v4270, %v4473
    %4475 = vdwg.mxu0
    %v4476 = vmax.f32 %v4468, 0.0
    %v4477 = vmax.f32 %v4470, 0.0
    %v4478 = vmax.f32 %v4472, 0.0
    %v4479 = vmax.f32 %v4474, 0.0
    %v4480 = vpack.c.bf16 %v4478, %v4476
    %v4481 = vpack.c.bf16 %v4479, %v4477
    %s4482 = scalar_lea.vmem [#allocation7], 3328
    %v4483 = vld [vmem:[%s4482] sm:$0xff]
    %v4484 = vld [vmem:[%s4482 + $0x8] sm:$0xff]
    %v4485 = vld [vmem:[%s4482 + $0x10] sm:$0xff]
    %v4486 = vld [vmem:[%s4482 + $0x18] sm:$0xff]
    %v4487 = vld [vmem:[%s4482 + $0x20] sm:$0xff]
    %v4488 = vld [vmem:[%s4482 + $0x28] sm:$0xff]
    %v4489 = vld [vmem:[%s4482 + $0x30] sm:$0xff]
    %v4490 = vld [vmem:[%s4482 + $0x38] sm:$0xff]
    %v4491 = vld [vmem:[%s4482 + $0x40] sm:$0xff]
    %v4492 = vld [vmem:[%s4482 + $0x48] sm:$0xff]
    %v4493 = vld [vmem:[%s4482 + $0x50] sm:$0xff]
    %v4494 = vld [vmem:[%s4482 + $0x58] sm:$0xff]
    %v4495 = vld [vmem:[%s4482 + $0x60] sm:$0xff]
    %v4496 = vld [vmem:[%s4482 + $0x68] sm:$0xff]
    %v4497 = vld [vmem:[%s4482 + $0x70] sm:$0xff]
    %v4498 = vld [vmem:[%s4482 + $0x78] sm:$0xff]
    %v4499 = vld [vmem:[%s4482 + $0x80] sm:$0xff]
    %v4500 = vld [vmem:[%s4482 + $0x88] sm:$0xff]
    %v4501 = vld [vmem:[%s4482 + $0x90] sm:$0xff]
    %v4502 = vld [vmem:[%s4482 + $0x98] sm:$0xff]
    %v4503 = vld [vmem:[%s4482 + $0xa0] sm:$0xff]
    %v4504 = vld [vmem:[%s4482 + $0xa8] sm:$0xff]
    %v4505 = vld [vmem:[%s4482 + $0xb0] sm:$0xff]
    %v4506 = vld [vmem:[%s4482 + $0xb8] sm:$0xff]
    %v4507 = vld [vmem:[%s4482 + $0xc0] sm:$0xff]
    %v4508 = vld [vmem:[%s4482 + $0xc8] sm:$0xff]
    %v4509 = vld [vmem:[%s4482 + $0xd0] sm:$0xff]
    %v4510 = vld [vmem:[%s4482 + $0xd8] sm:$0xff]
    %v4511 = vld [vmem:[%s4482 + $0xe0] sm:$0xff]
    %v4512 = vld [vmem:[%s4482 + $0xe8] sm:$0xff]
    %v4513 = vld [vmem:[%s4482 + $0xf0] sm:$0xff]
    %v4514 = vld [vmem:[%s4482 + $0xf8] sm:$0xff]
    %s4515 = scalar_lea.vmem [#allocation8], 34
    %v4516 = vld [vmem:[%s4515] ss:$8 sm:$0x3]
    %v4518 = vlaneseq
    %v4519 = vshrl.u32 %v4518, 7
    %v4520 = vsub.s32 0, %v4519
    %v4521 = vrot.slane %v4516, %v4520
    %v4522 = vlaneseq
    %v4523 = vshrl.u32 %v4522, 7
    %v4524 = vsub.s32 1, %v4523
    %v4525 = vrot.slane %v4516, %v4524
    %v4560 = vunpack.c.l.b16 %v4483
    %v4561 = vunpack.c.h.b16 %v4483
    %v4562 = vunpack.c.l.b16 %v4484
    %v4563 = vunpack.c.h.b16 %v4484
    %v4564 = vunpack.c.l.b16 %v4485
    %v4565 = vunpack.c.h.b16 %v4485
    %v4566 = vunpack.c.l.b16 %v4486
    %v4567 = vunpack.c.h.b16 %v4486
    %v4568 = vunpack.c.l.b16 %v4487
    %v4569 = vunpack.c.h.b16 %v4487
    %v4570 = vunpack.c.l.b16 %v4488
    %v4571 = vunpack.c.h.b16 %v4488
    %v4572 = vunpack.c.l.b16 %v4489
    %v4573 = vunpack.c.h.b16 %v4489
    %v4574 = vunpack.c.l.b16 %v4490
    %v4575 = vunpack.c.h.b16 %v4490
    %v4576 = vunpack.c.l.b16 %v4491
    %v4577 = vunpack.c.h.b16 %v4491
    %v4578 = vunpack.c.l.b16 %v4492
    %v4579 = vunpack.c.h.b16 %v4492
    %v4580 = vunpack.c.l.b16 %v4493
    %v4581 = vunpack.c.h.b16 %v4493
    %v4582 = vunpack.c.l.b16 %v4494
    %v4583 = vunpack.c.h.b16 %v4494
    %v4584 = vunpack.c.l.b16 %v4495
    %v4585 = vunpack.c.h.b16 %v4495
    %v4586 = vunpack.c.l.b16 %v4496
    %v4587 = vunpack.c.h.b16 %v4496
    %v4588 = vunpack.c.l.b16 %v4497
    %v4589 = vunpack.c.h.b16 %v4497
    %v4590 = vunpack.c.l.b16 %v4498
    %v4591 = vunpack.c.h.b16 %v4498
    %v4592 = vunpack.c.l.b16 %v4499
    %v4593 = vunpack.c.h.b16 %v4499
    %v4594 = vunpack.c.l.b16 %v4500
    %v4595 = vunpack.c.h.b16 %v4500
    %v4596 = vunpack.c.l.b16 %v4501
    %v4597 = vunpack.c.h.b16 %v4501
    %v4598 = vunpack.c.l.b16 %v4502
    %v4599 = vunpack.c.h.b16 %v4502
    %v4600 = vunpack.c.l.b16 %v4503
    %v4601 = vunpack.c.h.b16 %v4503
    %v4602 = vunpack.c.l.b16 %v4504
    %v4603 = vunpack.c.h.b16 %v4504
    %v4604 = vunpack.c.l.b16 %v4505
    %v4605 = vunpack.c.h.b16 %v4505
    %v4606 = vunpack.c.l.b16 %v4506
    %v4607 = vunpack.c.h.b16 %v4506
    %v4608 = vunpack.c.l.b16 %v4507
    %v4609 = vunpack.c.h.b16 %v4507
    %v4610 = vunpack.c.l.b16 %v4508
    %v4611 = vunpack.c.h.b16 %v4508
    %v4612 = vunpack.c.l.b16 %v4509
    %v4613 = vunpack.c.h.b16 %v4509
    %v4614 = vunpack.c.l.b16 %v4510
    %v4615 = vunpack.c.h.b16 %v4510
    %v4616 = vunpack.c.l.b16 %v4511
    %v4617 = vunpack.c.h.b16 %v4511
    %v4618 = vunpack.c.l.b16 %v4512
    %v4619 = vunpack.c.h.b16 %v4512
    %v4620 = vunpack.c.l.b16 %v4513
    %v4621 = vunpack.c.h.b16 %v4513
    %v4622 = vunpack.c.l.b16 %v4514
    %v4623 = vunpack.c.h.b16 %v4514
    %v4624 = vpack.c.b16 %v4562, %v4560
    %v4625 = vpack.c.b16 %v4563, %v4561
    %v4626 = vpack.c.b16 %v4566, %v4564
    %v4627 = vpack.c.b16 %v4567, %v4565
    %v4628 = vpack.c.b16 %v4570, %v4568
    %v4629 = vpack.c.b16 %v4571, %v4569
    %v4630 = vpack.c.b16 %v4574, %v4572
    %v4631 = vpack.c.b16 %v4575, %v4573
    %v4632 = vpack.c.b16 %v4578, %v4576
    %v4633 = vpack.c.b16 %v4579, %v4577
    %v4634 = vpack.c.b16 %v4582, %v4580
    %v4635 = vpack.c.b16 %v4583, %v4581
    %v4636 = vpack.c.b16 %v4586, %v4584
    %v4637 = vpack.c.b16 %v4587, %v4585
    %v4638 = vpack.c.b16 %v4590, %v4588
    %v4639 = vpack.c.b16 %v4591, %v4589
    %v4640 = vpack.c.b16 %v4594, %v4592
    %v4641 = vpack.c.b16 %v4595, %v4593
    %v4642 = vpack.c.b16 %v4598, %v4596
    %v4643 = vpack.c.b16 %v4599, %v4597
    %v4644 = vpack.c.b16 %v4602, %v4600
    %v4645 = vpack.c.b16 %v4603, %v4601
    %v4646 = vpack.c.b16 %v4606, %v4604
    %v4647 = vpack.c.b16 %v4607, %v4605
    %v4648 = vpack.c.b16 %v4610, %v4608
    %v4649 = vpack.c.b16 %v4611, %v4609
    %v4650 = vpack.c.b16 %v4614, %v4612
    %v4651 = vpack.c.b16 %v4615, %v4613
    %v4652 = vpack.c.b16 %v4618, %v4616
    %v4653 = vpack.c.b16 %v4619, %v4617
    %v4654 = vpack.c.b16 %v4622, %v4620
    %v4655 = vpack.c.b16 %v4623, %v4621
    %4688 = vmatprep.subr.bf16.mxu0 %v4625
    %4689 = vmatpush1.bf16.msra.mxu0 %v4624
    %4690 = vmatprep.subr.bf16.mxu0 %v4627
    %4691 = vmatpush1.bf16.msra.mxu0 %v4626
    %4692 = vmatprep.subr.bf16.mxu0 %v4629
    %4693 = vmatpush1.bf16.msra.mxu0 %v4628
    %4694 = vmatprep.subr.bf16.mxu0 %v4631
    %4695 = vmatpush1.bf16.msra.mxu0 %v4630
    %4696 = vmatprep.subr.bf16.mxu0 %v4633
    %4697 = vmatpush1.bf16.msra.mxu0 %v4632
    %4698 = vmatprep.subr.bf16.mxu0 %v4635
    %4699 = vmatpush1.bf16.msra.mxu0 %v4634
    %4700 = vmatprep.subr.bf16.mxu0 %v4637
    %4701 = vmatpush1.bf16.msra.mxu0 %v4636
    %4702 = vmatprep.subr.bf16.mxu0 %v4639
    %4703 = vmatpush1.bf16.msra.mxu0 %v4638
    %4704 = vmatprep.subr.bf16.mxu0 %v4641
    %4705 = vmatpush1.bf16.msra.mxu0 %v4640
    %4706 = vmatprep.subr.bf16.mxu0 %v4643
    %4707 = vmatpush1.bf16.msra.mxu0 %v4642
    %4708 = vmatprep.subr.bf16.mxu0 %v4645
    %4709 = vmatpush1.bf16.msra.mxu0 %v4644
    %4710 = vmatprep.subr.bf16.mxu0 %v4647
    %4711 = vmatpush1.bf16.msra.mxu0 %v4646
    %4712 = vmatprep.subr.bf16.mxu0 %v4649
    %4713 = vmatpush1.bf16.msra.mxu0 %v4648
    %4714 = vmatprep.subr.bf16.mxu0 %v4651
    %4715 = vmatpush1.bf16.msra.mxu0 %v4650
    %4716 = vmatprep.subr.bf16.mxu0 %v4653
    %4717 = vmatpush1.bf16.msra.mxu0 %v4652
    %4718 = vmatprep.subr.bf16.mxu0 %v4655
    %4719 = vmatpush1.bf16.msra.mxu0 %v4654
    %4720 = vmatprep.mubr.bf16.mxu0 %v4481
    %4721 = vmatmul.mubr.bf16.gmra.mrb[0].mxu0 %v4480
    %v4722 = vpop.f32.mrb[0].mxu0
    %v4723 = vadd.f32 %v4521, %v4722
    %v4724 = vpop.f32.mrb[0].mxu0
    %v4725 = vadd.f32 %v4525, %v4724
    %v4726 = vpop.f32.mrb[0].mxu0
    %v4727 = vadd.f32 %v4521, %v4726
    %v4728 = vpop.f32.mrb[0].mxu0
    %v4729 = vadd.f32 %v4525, %v4728
    %4730 = vdwg.mxu0
    %v4731 = vmax.f32 %v4723, 0.0
    %v4732 = vmax.f32 %v4725, 0.0
    %v4733 = vmax.f32 %v4727, 0.0
    %v4734 = vmax.f32 %v4729, 0.0
    %v4735 = vpack.c.bf16 %v4733, %v4731
    %v4736 = vpack.c.bf16 %v4734, %v4732
    %s4737 = scalar_lea.vmem [#allocation7], 3584
    %v4738 = vld [vmem:[%s4737] sm:$0xff]
    %v4739 = vld [vmem:[%s4737 + $0x8] sm:$0xff]
    %v4740 = vld [vmem:[%s4737 + $0x10] sm:$0xff]
    %v4741 = vld [vmem:[%s4737 + $0x18] sm:$0xff]
    %v4742 = vld [vmem:[%s4737 + $0x20] sm:$0xff]
    %v4743 = vld [vmem:[%s4737 + $0x28] sm:$0xff]
    %v4744 = vld [vmem:[%s4737 + $0x30] sm:$0xff]
    %v4745 = vld [vmem:[%s4737 + $0x38] sm:$0xff]
    %v4746 = vld [vmem:[%s4737 + $0x40] sm:$0xff]
    %v4747 = vld [vmem:[%s4737 + $0x48] sm:$0xff]
    %v4748 = vld [vmem:[%s4737 + $0x50] sm:$0xff]
    %v4749 = vld [vmem:[%s4737 + $0x58] sm:$0xff]
    %v4750 = vld [vmem:[%s4737 + $0x60] sm:$0xff]
    %v4751 = vld [vmem:[%s4737 + $0x68] sm:$0xff]
    %v4752 = vld [vmem:[%s4737 + $0x70] sm:$0xff]
    %v4753 = vld [vmem:[%s4737 + $0x78] sm:$0xff]
    %v4754 = vld [vmem:[%s4737 + $0x80] sm:$0xff]
    %v4755 = vld [vmem:[%s4737 + $0x88] sm:$0xff]
    %v4756 = vld [vmem:[%s4737 + $0x90] sm:$0xff]
    %v4757 = vld [vmem:[%s4737 + $0x98] sm:$0xff]
    %v4758 = vld [vmem:[%s4737 + $0xa0] sm:$0xff]
    %v4759 = vld [vmem:[%s4737 + $0xa8] sm:$0xff]
    %v4760 = vld [vmem:[%s4737 + $0xb0] sm:$0xff]
    %v4761 = vld [vmem:[%s4737 + $0xb8] sm:$0xff]
    %v4762 = vld [vmem:[%s4737 + $0xc0] sm:$0xff]
    %v4763 = vld [vmem:[%s4737 + $0xc8] sm:$0xff]
    %v4764 = vld [vmem:[%s4737 + $0xd0] sm:$0xff]
    %v4765 = vld [vmem:[%s4737 + $0xd8] sm:$0xff]
    %v4766 = vld [vmem:[%s4737 + $0xe0] sm:$0xff]
    %v4767 = vld [vmem:[%s4737 + $0xe8] sm:$0xff]
    %v4768 = vld [vmem:[%s4737 + $0xf0] sm:$0xff]
    %v4769 = vld [vmem:[%s4737 + $0xf8] sm:$0xff]
    %s4770 = scalar_lea.vmem [#allocation8], 35
    %v4771 = vld [vmem:[%s4770] ss:$8 sm:$0x3]
    %v4773 = vlaneseq
    %v4774 = vshrl.u32 %v4773, 7
    %v4775 = vsub.s32 0, %v4774
    %v4776 = vrot.slane %v4771, %v4775
    %v4777 = vlaneseq
    %v4778 = vshrl.u32 %v4777, 7
    %v4779 = vsub.s32 1, %v4778
    %v4780 = vrot.slane %v4771, %v4779
    %v4815 = vunpack.c.l.b16 %v4738
    %v4816 = vunpack.c.h.b16 %v4738
    %v4817 = vunpack.c.l.b16 %v4739
    %v4818 = vunpack.c.h.b16 %v4739
    %v4819 = vunpack.c.l.b16 %v4740
    %v4820 = vunpack.c.h.b16 %v4740
    %v4821 = vunpack.c.l.b16 %v4741
    %v4822 = vunpack.c.h.b16 %v4741
    %v4823 = vunpack.c.l.b16 %v4742
    %v4824 = vunpack.c.h.b16 %v4742
    %v4825 = vunpack.c.l.b16 %v4743
    %v4826 = vunpack.c.h.b16 %v4743
    %v4827 = vunpack.c.l.b16 %v4744
    %v4828 = vunpack.c.h.b16 %v4744
    %v4829 = vunpack.c.l.b16 %v4745
    %v4830 = vunpack.c.h.b16 %v4745
    %v4831 = vunpack.c.l.b16 %v4746
    %v4832 = vunpack.c.h.b16 %v4746
    %v4833 = vunpack.c.l.b16 %v4747
    %v4834 = vunpack.c.h.b16 %v4747
    %v4835 = vunpack.c.l.b16 %v4748
    %v4836 = vunpack.c.h.b16 %v4748
    %v4837 = vunpack.c.l.b16 %v4749
    %v4838 = vunpack.c.h.b16 %v4749
    %v4839 = vunpack.c.l.b16 %v4750
    %v4840 = vunpack.c.h.b16 %v4750
    %v4841 = vunpack.c.l.b16 %v4751
    %v4842 = vunpack.c.h.b16 %v4751
    %v4843 = vunpack.c.l.b16 %v4752
    %v4844 = vunpack.c.h.b16 %v4752
    %v4845 = vunpack.c.l.b16 %v4753
    %v4846 = vunpack.c.h.b16 %v4753
    %v4847 = vunpack.c.l.b16 %v4754
    %v4848 = vunpack.c.h.b16 %v4754
    %v4849 = vunpack.c.l.b16 %v4755
    %v4850 = vunpack.c.h.b16 %v4755
    %v4851 = vunpack.c.l.b16 %v4756
    %v4852 = vunpack.c.h.b16 %v4756
    %v4853 = vunpack.c.l.b16 %v4757
    %v4854 = vunpack.c.h.b16 %v4757
    %v4855 = vunpack.c.l.b16 %v4758
    %v4856 = vunpack.c.h.b16 %v4758
    %v4857 = vunpack.c.l.b16 %v4759
    %v4858 = vunpack.c.h.b16 %v4759
    %v4859 = vunpack.c.l.b16 %v4760
    %v4860 = vunpack.c.h.b16 %v4760
    %v4861 = vunpack.c.l.b16 %v4761
    %v4862 = vunpack.c.h.b16 %v4761
    %v4863 = vunpack.c.l.b16 %v4762
    %v4864 = vunpack.c.h.b16 %v4762
    %v4865 = vunpack.c.l.b16 %v4763
    %v4866 = vunpack.c.h.b16 %v4763
    %v4867 = vunpack.c.l.b16 %v4764
    %v4868 = vunpack.c.h.b16 %v4764
    %v4869 = vunpack.c.l.b16 %v4765
    %v4870 = vunpack.c.h.b16 %v4765
    %v4871 = vunpack.c.l.b16 %v4766
    %v4872 = vunpack.c.h.b16 %v4766
    %v4873 = vunpack.c.l.b16 %v4767
    %v4874 = vunpack.c.h.b16 %v4767
    %v4875 = vunpack.c.l.b16 %v4768
    %v4876 = vunpack.c.h.b16 %v4768
    %v4877 = vunpack.c.l.b16 %v4769
    %v4878 = vunpack.c.h.b16 %v4769
    %v4879 = vpack.c.b16 %v4817, %v4815
    %v4880 = vpack.c.b16 %v4818, %v4816
    %v4881 = vpack.c.b16 %v4821, %v4819
    %v4882 = vpack.c.b16 %v4822, %v4820
    %v4883 = vpack.c.b16 %v4825, %v4823
    %v4884 = vpack.c.b16 %v4826, %v4824
    %v4885 = vpack.c.b16 %v4829, %v4827
    %v4886 = vpack.c.b16 %v4830, %v4828
    %v4887 = vpack.c.b16 %v4833, %v4831
    %v4888 = vpack.c.b16 %v4834, %v4832
    %v4889 = vpack.c.b16 %v4837, %v4835
    %v4890 = vpack.c.b16 %v4838, %v4836
    %v4891 = vpack.c.b16 %v4841, %v4839
    %v4892 = vpack.c.b16 %v4842, %v4840
    %v4893 = vpack.c.b16 %v4845, %v4843
    %v4894 = vpack.c.b16 %v4846, %v4844
    %v4895 = vpack.c.b16 %v4849, %v4847
    %v4896 = vpack.c.b16 %v4850, %v4848
    %v4897 = vpack.c.b16 %v4853, %v4851
    %v4898 = vpack.c.b16 %v4854, %v4852
    %v4899 = vpack.c.b16 %v4857, %v4855
    %v4900 = vpack.c.b16 %v4858, %v4856
    %v4901 = vpack.c.b16 %v4861, %v4859
    %v4902 = vpack.c.b16 %v4862, %v4860
    %v4903 = vpack.c.b16 %v4865, %v4863
    %v4904 = vpack.c.b16 %v4866, %v4864
    %v4905 = vpack.c.b16 %v4869, %v4867
    %v4906 = vpack.c.b16 %v4870, %v4868
    %v4907 = vpack.c.b16 %v4873, %v4871
    %v4908 = vpack.c.b16 %v4874, %v4872
    %v4909 = vpack.c.b16 %v4877, %v4875
    %v4910 = vpack.c.b16 %v4878, %v4876
    %4943 = vmatprep.subr.bf16.mxu0 %v4880
    %4944 = vmatpush1.bf16.msra.mxu0 %v4879
    %4945 = vmatprep.subr.bf16.mxu0 %v4882
    %4946 = vmatpush1.bf16.msra.mxu0 %v4881
    %4947 = vmatprep.subr.bf16.mxu0 %v4884
    %4948 = vmatpush1.bf16.msra.mxu0 %v4883
    %4949 = vmatprep.subr.bf16.mxu0 %v4886
    %4950 = vmatpush1.bf16.msra.mxu0 %v4885
    %4951 = vmatprep.subr.bf16.mxu0 %v4888
    %4952 = vmatpush1.bf16.msra.mxu0 %v4887
    %4953 = vmatprep.subr.bf16.mxu0 %v4890
    %4954 = vmatpush1.bf16.msra.mxu0 %v4889
    %4955 = vmatprep.subr.bf16.mxu0 %v4892
    %4956 = vmatpush1.bf16.msra.mxu0 %v4891
    %4957 = vmatprep.subr.bf16.mxu0 %v4894
    %4958 = vmatpush1.bf16.msra.mxu0 %v4893
    %4959 = vmatprep.subr.bf16.mxu0 %v4896
    %4960 = vmatpush1.bf16.msra.mxu0 %v4895
    %4961 = vmatprep.subr.bf16.mxu0 %v4898
    %4962 = vmatpush1.bf16.msra.mxu0 %v4897
    %4963 = vmatprep.subr.bf16.mxu0 %v4900
    %4964 = vmatpush1.bf16.msra.mxu0 %v4899
    %4965 = vmatprep.subr.bf16.mxu0 %v4902
    %4966 = vmatpush1.bf16.msra.mxu0 %v4901
    %4967 = vmatprep.subr.bf16.mxu0 %v4904
    %4968 = vmatpush1.bf16.msra.mxu0 %v4903
    %4969 = vmatprep.subr.bf16.mxu0 %v4906
    %4970 = vmatpush1.bf16.msra.mxu0 %v4905
    %4971 = vmatprep.subr.bf16.mxu0 %v4908
    %4972 = vmatpush1.bf16.msra.mxu0 %v4907
    %4973 = vmatprep.subr.bf16.mxu0 %v4910
    %4974 = vmatpush1.bf16.msra.mxu0 %v4909
    %4975 = vmatprep.mubr.bf16.mxu0 %v4736
    %4976 = vmatmul.mubr.bf16.gmra.mrb[0].mxu0 %v4735
    %v4977 = vpop.f32.mrb[0].mxu0
    %v4978 = vadd.f32 %v4776, %v4977
    %v4979 = vpop.f32.mrb[0].mxu0
    %v4980 = vadd.f32 %v4780, %v4979
    %v4981 = vpop.f32.mrb[0].mxu0
    %v4982 = vadd.f32 %v4776, %v4981
    %v4983 = vpop.f32.mrb[0].mxu0
    %v4984 = vadd.f32 %v4780, %v4983
    %4985 = vdwg.mxu0
    %v4986 = vmax.f32 %v4978, 0.0
    %v4987 = vmax.f32 %v4980, 0.0
    %v4988 = vmax.f32 %v4982, 0.0
    %v4989 = vmax.f32 %v4984, 0.0
    %s4990 = scalar_lea.vmem [#allocation10], 1024
    %v4991 = vld [vmem:[%s4990] sm:$0xff]
    %v4992 = vld [vmem:[%s4990 + $0x8] sm:$0xff]
    %v4993 = vld [vmem:[%s4990 + $0x10] sm:$0xff]
    %v4994 = vld [vmem:[%s4990 + $0x18] sm:$0xff]
    %v4995 = vld [vmem:[%s4990 + $0x20] sm:$0xff]
    %v4996 = vld [vmem:[%s4990 + $0x28] sm:$0xff]
    %v4997 = vld [vmem:[%s4990 + $0x30] sm:$0xff]
    %v4998 = vld [vmem:[%s4990 + $0x38] sm:$0xff]
    %v4999 = vld [vmem:[%s4990 + $0x40] sm:$0xff]
    %v5000 = vld [vmem:[%s4990 + $0x48] sm:$0xff]
    %v5001 = vld [vmem:[%s4990 + $0x50] sm:$0xff]
    %v5002 = vld [vmem:[%s4990 + $0x58] sm:$0xff]
    %v5003 = vld [vmem:[%s4990 + $0x60] sm:$0xff]
    %v5004 = vld [vmem:[%s4990 + $0x68] sm:$0xff]
    %v5005 = vld [vmem:[%s4990 + $0x70] sm:$0xff]
    %v5006 = vld [vmem:[%s4990 + $0x78] sm:$0xff]
    %v5007 = vld [vmem:[%s4990 + $0x80] sm:$0xff]
    %v5008 = vld [vmem:[%s4990 + $0x88] sm:$0xff]
    %v5009 = vld [vmem:[%s4990 + $0x90] sm:$0xff]
    %v5010 = vld [vmem:[%s4990 + $0x98] sm:$0xff]
    %v5011 = vld [vmem:[%s4990 + $0xa0] sm:$0xff]
    %v5012 = vld [vmem:[%s4990 + $0xa8] sm:$0xff]
    %v5013 = vld [vmem:[%s4990 + $0xb0] sm:$0xff]
    %v5014 = vld [vmem:[%s4990 + $0xb8] sm:$0xff]
    %v5015 = vld [vmem:[%s4990 + $0xc0] sm:$0xff]
    %v5016 = vld [vmem:[%s4990 + $0xc8] sm:$0xff]
    %v5017 = vld [vmem:[%s4990 + $0xd0] sm:$0xff]
    %v5018 = vld [vmem:[%s4990 + $0xd8] sm:$0xff]
    %v5019 = vld [vmem:[%s4990 + $0xe0] sm:$0xff]
    %v5020 = vld [vmem:[%s4990 + $0xe8] sm:$0xff]
    %v5021 = vld [vmem:[%s4990 + $0xf0] sm:$0xff]
    %v5022 = vld [vmem:[%s4990 + $0xf8] sm:$0xff]
    %5023 = vmatprep.subr.mxu0 0.0
    %5024 = vmatpush1.msra.mxu0 %v4991
    %5025 = vmatprep.subr.mxu0 0.0
    %5026 = vmatpush1.msra.mxu0 %v4992
    %5027 = vmatprep.subr.mxu0 0.0
    %5028 = vmatpush1.msra.mxu0 %v4993
    %5029 = vmatprep.subr.mxu0 0.0
    %5030 = vmatpush1.msra.mxu0 %v4994
    %5031 = vmatprep.subr.mxu0 0.0
    %5032 = vmatpush1.msra.mxu0 %v4995
    %5033 = vmatprep.subr.mxu0 0.0
    %5034 = vmatpush1.msra.mxu0 %v4996
    %5035 = vmatprep.subr.mxu0 0.0
    %5036 = vmatpush1.msra.mxu0 %v4997
    %5037 = vmatprep.subr.mxu0 0.0
    %5038 = vmatpush1.msra.mxu0 %v4998
    %5039 = vmatprep.subr.mxu0 0.0
    %5040 = vmatpush1.msra.mxu0 %v4999
    %5041 = vmatprep.subr.mxu0 0.0
    %5042 = vmatpush1.msra.mxu0 %v5000
    %5043 = vmatprep.subr.mxu0 0.0
    %5044 = vmatpush1.msra.mxu0 %v5001
    %5045 = vmatprep.subr.mxu0 0.0
    %5046 = vmatpush1.msra.mxu0 %v5002
    %5047 = vmatprep.subr.mxu0 0.0
    %5048 = vmatpush1.msra.mxu0 %v5003
    %5049 = vmatprep.subr.mxu0 0.0
    %5050 = vmatpush1.msra.mxu0 %v5004
    %5051 = vmatprep.subr.mxu0 0.0
    %5052 = vmatpush1.msra.mxu0 %v5005
    %5053 = vmatprep.subr.mxu0 0.0
    %5054 = vmatpush1.msra.mxu0 %v5006
    %5055 = vmatprep.subr.mxu0 0.0
    %5056 = vmatpush1.msra.mxu0 %v5007
    %5057 = vmatprep.subr.mxu0 0.0
    %5058 = vmatpush1.msra.mxu0 %v5008
    %5059 = vmatprep.subr.mxu0 0.0
    %5060 = vmatpush1.msra.mxu0 %v5009
    %5061 = vmatprep.subr.mxu0 0.0
    %5062 = vmatpush1.msra.mxu0 %v5010
    %5063 = vmatprep.subr.mxu0 0.0
    %5064 = vmatpush1.msra.mxu0 %v5011
    %5065 = vmatprep.subr.mxu0 0.0
    %5066 = vmatpush1.msra.mxu0 %v5012
    %5067 = vmatprep.subr.mxu0 0.0
    %5068 = vmatpush1.msra.mxu0 %v5013
    %5069 = vmatprep.subr.mxu0 0.0
    %5070 = vmatpush1.msra.mxu0 %v5014
    %5071 = vmatprep.subr.mxu0 0.0
    %5072 = vmatpush1.msra.mxu0 %v5015
    %5073 = vmatprep.subr.mxu0 0.0
    %5074 = vmatpush1.msra.mxu0 %v5016
    %5075 = vmatprep.subr.mxu0 0.0
    %5076 = vmatpush1.msra.mxu0 %v5017
    %5077 = vmatprep.subr.mxu0 0.0
    %5078 = vmatpush1.msra.mxu0 %v5018
    %5079 = vmatprep.subr.mxu0 0.0
    %5080 = vmatpush1.msra.mxu0 %v5019
    %5081 = vmatprep.subr.mxu0 0.0
    %5082 = vmatpush1.msra.mxu0 %v5020
    %5083 = vmatprep.subr.mxu0 0.0
    %5084 = vmatpush1.msra.mxu0 %v5021
    %5085 = vmatprep.subr.mxu0 0.0
    %5086 = vmatpush1.msra.mxu0 %v5022
    %5087 = vmatprep.mubr.f32.mxu0 %v4987
    %5088 = vmatmul.mubr.f32.gmra.mrb[0].mxu0 %v4986
    %v5089 = vpop.f32.mrb[0].mxu0
    %v5090 = vadd.f32 0.0, %v5089
    %v5091 = vpop.f32.mrb[0].mxu0
    %5092 = vmatprep.mubr.f32.mxu0 %v4989
    %5093 = vmatmul.mubr.f32.gmra.mrb[0].mxu0 %v4988
    %v5094 = vpop.f32.mrb[0].mxu0
    %v5095 = vadd.f32 0.0, %v5094
    %v5096 = vpop.f32.mrb[0].mxu0
    %5097 = vdwg.mxu0
    %v5098 = vadd.f32 %v4096, %v5090
    %v5099 = vadd.f32 %v4097, %v5095
    %s5100 = scalar_lea.vmem [#allocation5], 1280
    %v5101 = vld [vmem:[%s5100] sm:$0xff]
    %v5102 = vld [vmem:[%s5100 + $0x8] sm:$0xff]
    %v5103 = vld [vmem:[%s5100 + $0x10] sm:$0xff]
    %v5104 = vld [vmem:[%s5100 + $0x18] sm:$0xff]
    %v5105 = vld [vmem:[%s5100 + $0x20] sm:$0xff]
    %v5106 = vld [vmem:[%s5100 + $0x28] sm:$0xff]
    %v5107 = vld [vmem:[%s5100 + $0x30] sm:$0xff]
    %v5108 = vld [vmem:[%s5100 + $0x38] sm:$0xff]
    %v5109 = vld [vmem:[%s5100 + $0x40] sm:$0xff]
    %v5110 = vld [vmem:[%s5100 + $0x48] sm:$0xff]
    %v5111 = vld [vmem:[%s5100 + $0x50] sm:$0xff]
    %v5112 = vld [vmem:[%s5100 + $0x58] sm:$0xff]
    %v5113 = vld [vmem:[%s5100 + $0x60] sm:$0xff]
    %v5114 = vld [vmem:[%s5100 + $0x68] sm:$0xff]
    %v5115 = vld [vmem:[%s5100 + $0x70] sm:$0xff]
    %v5116 = vld [vmem:[%s5100 + $0x78] sm:$0xff]
    %v5117 = vld [vmem:[%s5100 + $0x80] sm:$0xff]
    %v5118 = vld [vmem:[%s5100 + $0x88] sm:$0xff]
    %v5119 = vld [vmem:[%s5100 + $0x90] sm:$0xff]
    %v5120 = vld [vmem:[%s5100 + $0x98] sm:$0xff]
    %v5121 = vld [vmem:[%s5100 + $0xa0] sm:$0xff]
    %v5122 = vld [vmem:[%s5100 + $0xa8] sm:$0xff]
    %v5123 = vld [vmem:[%s5100 + $0xb0] sm:$0xff]
    %v5124 = vld [vmem:[%s5100 + $0xb8] sm:$0xff]
    %v5125 = vld [vmem:[%s5100 + $0xc0] sm:$0xff]
    %v5126 = vld [vmem:[%s5100 + $0xc8] sm:$0xff]
    %v5127 = vld [vmem:[%s5100 + $0xd0] sm:$0xff]
    %v5128 = vld [vmem:[%s5100 + $0xd8] sm:$0xff]
    %v5129 = vld [vmem:[%s5100 + $0xe0] sm:$0xff]
    %v5130 = vld [vmem:[%s5100 + $0xe8] sm:$0xff]
    %v5131 = vld [vmem:[%s5100 + $0xf0] sm:$0xff]
    %v5132 = vld [vmem:[%s5100 + $0xf8] sm:$0xff]
    %s5133 = scalar_lea.vmem [#allocation8], 36
    %v5134 = vld [vmem:[%s5133] ss:$8 sm:$0x3]
    %v5136 = vlaneseq
    %v5137 = vshrl.u32 %v5136, 7
    %v5138 = vsub.s32 0, %v5137
    %v5139 = vrot.slane %v5134, %v5138
    %v5140 = vlaneseq
    %v5141 = vshrl.u32 %v5140, 7
    %v5142 = vsub.s32 1, %v5141
    %v5143 = vrot.slane %v5134, %v5142
    %5146 = vmatprep.subr.mxu0 %v5102
    %5147 = vmatpush1.msra.mxu0 %v5101
    %5148 = vmatprep.subr.mxu0 %v5104
    %5149 = vmatpush1.msra.mxu0 %v5103
    %5150 = vmatprep.subr.mxu0 %v5106
    %5151 = vmatpush1.msra.mxu0 %v5105
    %5152 = vmatprep.subr.mxu0 %v5108
    %5153 = vmatpush1.msra.mxu0 %v5107
    %5154 = vmatprep.subr.mxu0 %v5110
    %5155 = vmatpush1.msra.mxu0 %v5109
    %5156 = vmatprep.subr.mxu0 %v5112
    %5157 = vmatpush1.msra.mxu0 %v5111
    %5158 = vmatprep.subr.mxu0 %v5114
    %5159 = vmatpush1.msra.mxu0 %v5113
    %5160 = vmatprep.subr.mxu0 %v5116
    %5161 = vmatpush1.msra.mxu0 %v5115
    %5162 = vmatprep.subr.mxu0 %v5118
    %5163 = vmatpush1.msra.mxu0 %v5117
    %5164 = vmatprep.subr.mxu0 %v5120
    %5165 = vmatpush1.msra.mxu0 %v5119
    %5166 = vmatprep.subr.mxu0 %v5122
    %5167 = vmatpush1.msra.mxu0 %v5121
    %5168 = vmatprep.subr.mxu0 %v5124
    %5169 = vmatpush1.msra.mxu0 %v5123
    %5170 = vmatprep.subr.mxu0 %v5126
    %5171 = vmatpush1.msra.mxu0 %v5125
    %5172 = vmatprep.subr.mxu0 %v5128
    %5173 = vmatpush1.msra.mxu0 %v5127
    %5174 = vmatprep.subr.mxu0 %v5130
    %5175 = vmatpush1.msra.mxu0 %v5129
    %5176 = vmatprep.subr.mxu0 %v5132
    %5177 = vmatpush1.msra.mxu0 %v5131
    %5178 = vmatprep.subr.mxu0 0.0
    %5179 = vmatpush1.msra.mxu0 0.0
    %5180 = vmatprep.subr.mxu0 0.0
    %5181 = vmatpush1.msra.mxu0 0.0
    %5182 = vmatprep.subr.mxu0 0.0
    %5183 = vmatpush1.msra.mxu0 0.0
    %5184 = vmatprep.subr.mxu0 0.0
    %5185 = vmatpush1.msra.mxu0 0.0
    %5186 = vmatprep.subr.mxu0 0.0
    %5187 = vmatpush1.msra.mxu0 0.0
    %5188 = vmatprep.subr.mxu0 0.0
    %5189 = vmatpush1.msra.mxu0 0.0
    %5190 = vmatprep.subr.mxu0 0.0
    %5191 = vmatpush1.msra.mxu0 0.0
    %5192 = vmatprep.subr.mxu0 0.0
    %5193 = vmatpush1.msra.mxu0 0.0
    %5194 = vmatprep.subr.mxu0 0.0
    %5195 = vmatpush1.msra.mxu0 0.0
    %5196 = vmatprep.subr.mxu0 0.0
    %5197 = vmatpush1.msra.mxu0 0.0
    %5198 = vmatprep.subr.mxu0 0.0
    %5199 = vmatpush1.msra.mxu0 0.0
    %5200 = vmatprep.subr.mxu0 0.0
    %5201 = vmatpush1.msra.mxu0 0.0
    %5202 = vmatprep.subr.mxu0 0.0
    %5203 = vmatpush1.msra.mxu0 0.0
    %5204 = vmatprep.subr.mxu0 0.0
    %5205 = vmatpush1.msra.mxu0 0.0
    %5206 = vmatprep.subr.mxu0 0.0
    %5207 = vmatpush1.msra.mxu0 0.0
    %5208 = vmatprep.subr.mxu0 0.0
    %5209 = vmatpush1.msra.mxu0 0.0
    %5210 = vmatprep.mubr.f32.mxu0 0.0
    %5211 = vmatmul.mubr.f32.gmra.mrb[0].mxu0 %v5098
    %v5212 = vpop.f32.mrb[0].mxu0
    %v5213 = vadd.f32 %v5139, %v5212
    %v5214 = vpop.f32.mrb[0].mxu0
    %v5215 = vadd.f32 %v5143, %v5214
    %5216 = vmatprep.mubr.f32.mxu0 0.0
    %5217 = vmatmul.mubr.f32.gmra.mrb[0].mxu0 %v5099
    %v5218 = vpop.f32.mrb[0].mxu0
    %v5219 = vadd.f32 %v5139, %v5218
    %v5220 = vpop.f32.mrb[0].mxu0
    %v5221 = vadd.f32 %v5143, %v5220
    %5222 = vdwg.mxu0
    %v5223 = vmax.f32 %v5213, 0.0
    %v5224 = vmax.f32 %v5215, 0.0
    %v5225 = vmax.f32 %v5219, 0.0
    %v5226 = vmax.f32 %v5221, 0.0
    %v5227 = vpack.c.bf16 %v5225, %v5223
    %v5228 = vpack.c.bf16 %v5226, %v5224
    %s5229 = scalar_lea.vmem [#allocation7], 3840
    %v5230 = vld [vmem:[%s5229] sm:$0xff]
    %v5231 = vld [vmem:[%s5229 + $0x8] sm:$0xff]
    %v5232 = vld [vmem:[%s5229 + $0x10] sm:$0xff]
    %v5233 = vld [vmem:[%s5229 + $0x18] sm:$0xff]
    %v5234 = vld [vmem:[%s5229 + $0x20] sm:$0xff]
    %v5235 = vld [vmem:[%s5229 + $0x28] sm:$0xff]
    %v5236 = vld [vmem:[%s5229 + $0x30] sm:$0xff]
    %v5237 = vld [vmem:[%s5229 + $0x38] sm:$0xff]
    %v5238 = vld [vmem:[%s5229 + $0x40] sm:$0xff]
    %v5239 = vld [vmem:[%s5229 + $0x48] sm:$0xff]
    %v5240 = vld [vmem:[%s5229 + $0x50] sm:$0xff]
    %v5241 = vld [vmem:[%s5229 + $0x58] sm:$0xff]
    %v5242 = vld [vmem:[%s5229 + $0x60] sm:$0xff]
    %v5243 = vld [vmem:[%s5229 + $0x68] sm:$0xff]
    %v5244 = vld [vmem:[%s5229 + $0x70] sm:$0xff]
    %v5245 = vld [vmem:[%s5229 + $0x78] sm:$0xff]
    %v5246 = vld [vmem:[%s5229 + $0x80] sm:$0xff]
    %v5247 = vld [vmem:[%s5229 + $0x88] sm:$0xff]
    %v5248 = vld [vmem:[%s5229 + $0x90] sm:$0xff]
    %v5249 = vld [vmem:[%s5229 + $0x98] sm:$0xff]
    %v5250 = vld [vmem:[%s5229 + $0xa0] sm:$0xff]
    %v5251 = vld [vmem:[%s5229 + $0xa8] sm:$0xff]
    %v5252 = vld [vmem:[%s5229 + $0xb0] sm:$0xff]
    %v5253 = vld [vmem:[%s5229 + $0xb8] sm:$0xff]
    %v5254 = vld [vmem:[%s5229 + $0xc0] sm:$0xff]
    %v5255 = vld [vmem:[%s5229 + $0xc8] sm:$0xff]
    %v5256 = vld [vmem:[%s5229 + $0xd0] sm:$0xff]
    %v5257 = vld [vmem:[%s5229 + $0xd8] sm:$0xff]
    %v5258 = vld [vmem:[%s5229 + $0xe0] sm:$0xff]
    %v5259 = vld [vmem:[%s5229 + $0xe8] sm:$0xff]
    %v5260 = vld [vmem:[%s5229 + $0xf0] sm:$0xff]
    %v5261 = vld [vmem:[%s5229 + $0xf8] sm:$0xff]
    %s5262 = scalar_lea.vmem [#allocation8], 37
    %v5263 = vld [vmem:[%s5262] ss:$8 sm:$0x3]
    %v5265 = vlaneseq
    %v5266 = vshrl.u32 %v5265, 7
    %v5267 = vsub.s32 0, %v5266
    %v5268 = vrot.slane %v5263, %v5267
    %v5269 = vlaneseq
    %v5270 = vshrl.u32 %v5269, 7
    %v5271 = vsub.s32 1, %v5270
    %v5272 = vrot.slane %v5263, %v5271
    %v5307 = vunpack.c.l.b16 %v5230
    %v5308 = vunpack.c.h.b16 %v5230
    %v5309 = vunpack.c.l.b16 %v5231
    %v5310 = vunpack.c.h.b16 %v5231
    %v5311 = vunpack.c.l.b16 %v5232
    %v5312 = vunpack.c.h.b16 %v5232
    %v5313 = vunpack.c.l.b16 %v5233
    %v5314 = vunpack.c.h.b16 %v5233
    %v5315 = vunpack.c.l.b16 %v5234
    %v5316 = vunpack.c.h.b16 %v5234
    %v5317 = vunpack.c.l.b16 %v5235
    %v5318 = vunpack.c.h.b16 %v5235
    %v5319 = vunpack.c.l.b16 %v5236
    %v5320 = vunpack.c.h.b16 %v5236
    %v5321 = vunpack.c.l.b16 %v5237
    %v5322 = vunpack.c.h.b16 %v5237
    %v5323 = vunpack.c.l.b16 %v5238
    %v5324 = vunpack.c.h.b16 %v5238
    %v5325 = vunpack.c.l.b16 %v5239
    %v5326 = vunpack.c.h.b16 %v5239
    %v5327 = vunpack.c.l.b16 %v5240
    %v5328 = vunpack.c.h.b16 %v5240
    %v5329 = vunpack.c.l.b16 %v5241
    %v5330 = vunpack.c.h.b16 %v5241
    %v5331 = vunpack.c.l.b16 %v5242
    %v5332 = vunpack.c.h.b16 %v5242
    %v5333 = vunpack.c.l.b16 %v5243
    %v5334 = vunpack.c.h.b16 %v5243
    %v5335 = vunpack.c.l.b16 %v5244
    %v5336 = vunpack.c.h.b16 %v5244
    %v5337 = vunpack.c.l.b16 %v5245
    %v5338 = vunpack.c.h.b16 %v5245
    %v5339 = vunpack.c.l.b16 %v5246
    %v5340 = vunpack.c.h.b16 %v5246
    %v5341 = vunpack.c.l.b16 %v5247
    %v5342 = vunpack.c.h.b16 %v5247
    %v5343 = vunpack.c.l.b16 %v5248
    %v5344 = vunpack.c.h.b16 %v5248
    %v5345 = vunpack.c.l.b16 %v5249
    %v5346 = vunpack.c.h.b16 %v5249
    %v5347 = vunpack.c.l.b16 %v5250
    %v5348 = vunpack.c.h.b16 %v5250
    %v5349 = vunpack.c.l.b16 %v5251
    %v5350 = vunpack.c.h.b16 %v5251
    %v5351 = vunpack.c.l.b16 %v5252
    %v5352 = vunpack.c.h.b16 %v5252
    %v5353 = vunpack.c.l.b16 %v5253
    %v5354 = vunpack.c.h.b16 %v5253
    %v5355 = vunpack.c.l.b16 %v5254
    %v5356 = vunpack.c.h.b16 %v5254
    %v5357 = vunpack.c.l.b16 %v5255
    %v5358 = vunpack.c.h.b16 %v5255
    %v5359 = vunpack.c.l.b16 %v5256
    %v5360 = vunpack.c.h.b16 %v5256
    %v5361 = vunpack.c.l.b16 %v5257
    %v5362 = vunpack.c.h.b16 %v5257
    %v5363 = vunpack.c.l.b16 %v5258
    %v5364 = vunpack.c.h.b16 %v5258
    %v5365 = vunpack.c.l.b16 %v5259
    %v5366 = vunpack.c.h.b16 %v5259
    %v5367 = vunpack.c.l.b16 %v5260
    %v5368 = vunpack.c.h.b16 %v5260
    %v5369 = vunpack.c.l.b16 %v5261
    %v5370 = vunpack.c.h.b16 %v5261
    %v5371 = vpack.c.b16 %v5309, %v5307
    %v5372 = vpack.c.b16 %v5310, %v5308
    %v5373 = vpack.c.b16 %v5313, %v5311
    %v5374 = vpack.c.b16 %v5314, %v5312
    %v5375 = vpack.c.b16 %v5317, %v5315
    %v5376 = vpack.c.b16 %v5318, %v5316
    %v5377 = vpack.c.b16 %v5321, %v5319
    %v5378 = vpack.c.b16 %v5322, %v5320
    %v5379 = vpack.c.b16 %v5325, %v5323
    %v5380 = vpack.c.b16 %v5326, %v5324
    %v5381 = vpack.c.b16 %v5329, %v5327
    %v5382 = vpack.c.b16 %v5330, %v5328
    %v5383 = vpack.c.b16 %v5333, %v5331
    %v5384 = vpack.c.b16 %v5334, %v5332
    %v5385 = vpack.c.b16 %v5337, %v5335
    %v5386 = vpack.c.b16 %v5338, %v5336
    %v5387 = vpack.c.b16 %v5341, %v5339
    %v5388 = vpack.c.b16 %v5342, %v5340
    %v5389 = vpack.c.b16 %v5345, %v5343
    %v5390 = vpack.c.b16 %v5346, %v5344
    %v5391 = vpack.c.b16 %v5349, %v5347
    %v5392 = vpack.c.b16 %v5350, %v5348
    %v5393 = vpack.c.b16 %v5353, %v5351
    %v5394 = vpack.c.b16 %v5354, %v5352
    %v5395 = vpack.c.b16 %v5357, %v5355
    %v5396 = vpack.c.b16 %v5358, %v5356
    %v5397 = vpack.c.b16 %v5361, %v5359
    %v5398 = vpack.c.b16 %v5362, %v5360
    %v5399 = vpack.c.b16 %v5365, %v5363
    %v5400 = vpack.c.b16 %v5366, %v5364
    %v5401 = vpack.c.b16 %v5369, %v5367
    %v5402 = vpack.c.b16 %v5370, %v5368
    %5435 = vmatprep.subr.bf16.mxu0 %v5372
    %5436 = vmatpush1.bf16.msra.mxu0 %v5371
    %5437 = vmatprep.subr.bf16.mxu0 %v5374
    %5438 = vmatpush1.bf16.msra.mxu0 %v5373
    %5439 = vmatprep.subr.bf16.mxu0 %v5376
    %5440 = vmatpush1.bf16.msra.mxu0 %v5375
    %5441 = vmatprep.subr.bf16.mxu0 %v5378
    %5442 = vmatpush1.bf16.msra.mxu0 %v5377
    %5443 = vmatprep.subr.bf16.mxu0 %v5380
    %5444 = vmatpush1.bf16.msra.mxu0 %v5379
    %5445 = vmatprep.subr.bf16.mxu0 %v5382
    %5446 = vmatpush1.bf16.msra.mxu0 %v5381
    %5447 = vmatprep.subr.bf16.mxu0 %v5384
    %5448 = vmatpush1.bf16.msra.mxu0 %v5383
    %5449 = vmatprep.subr.bf16.mxu0 %v5386
    %5450 = vmatpush1.bf16.msra.mxu0 %v5385
    %5451 = vmatprep.subr.bf16.mxu0 %v5388
    %5452 = vmatpush1.bf16.msra.mxu0 %v5387
    %5453 = vmatprep.subr.bf16.mxu0 %v5390
    %5454 = vmatpush1.bf16.msra.mxu0 %v5389
    %5455 = vmatprep.subr.bf16.mxu0 %v5392
    %5456 = vmatpush1.bf16.msra.mxu0 %v5391
    %5457 = vmatprep.subr.bf16.mxu0 %v5394
    %5458 = vmatpush1.bf16.msra.mxu0 %v5393
    %5459 = vmatprep.subr.bf16.mxu0 %v5396
    %5460 = vmatpush1.bf16.msra.mxu0 %v5395
    %5461 = vmatprep.subr.bf16.mxu0 %v5398
    %5462 = vmatpush1.bf16.msra.mxu0 %v5397
    %5463 = vmatprep.subr.bf16.mxu0 %v5400
    %5464 = vmatpush1.bf16.msra.mxu0 %v5399
    %5465 = vmatprep.subr.bf16.mxu0 %v5402
    %5466 = vmatpush1.bf16.msra.mxu0 %v5401
    %5467 = vmatprep.mubr.bf16.mxu0 %v5228
    %5468 = vmatmul.mubr.bf16.gmra.mrb[0].mxu0 %v5227
    %v5469 = vpop.f32.mrb[0].mxu0
    %v5470 = vadd.f32 %v5268, %v5469
    %v5471 = vpop.f32.mrb[0].mxu0
    %v5472 = vadd.f32 %v5272, %v5471
    %v5473 = vpop.f32.mrb[0].mxu0
    %v5474 = vadd.f32 %v5268, %v5473
    %v5475 = vpop.f32.mrb[0].mxu0
    %v5476 = vadd.f32 %v5272, %v5475
    %5477 = vdwg.mxu0
    %v5478 = vmax.f32 %v5470, 0.0
    %v5479 = vmax.f32 %v5472, 0.0
    %v5480 = vmax.f32 %v5474, 0.0
    %v5481 = vmax.f32 %v5476, 0.0
    %v5482 = vpack.c.bf16 %v5480, %v5478
    %v5483 = vpack.c.bf16 %v5481, %v5479
    %s5484 = scalar_lea.vmem [#allocation7], 4096
    %v5485 = vld [vmem:[%s5484] sm:$0xff]
    %v5486 = vld [vmem:[%s5484 + $0x8] sm:$0xff]
    %v5487 = vld [vmem:[%s5484 + $0x10] sm:$0xff]
    %v5488 = vld [vmem:[%s5484 + $0x18] sm:$0xff]
    %v5489 = vld [vmem:[%s5484 + $0x20] sm:$0xff]
    %v5490 = vld [vmem:[%s5484 + $0x28] sm:$0xff]
    %v5491 = vld [vmem:[%s5484 + $0x30] sm:$0xff]
    %v5492 = vld [vmem:[%s5484 + $0x38] sm:$0xff]
    %v5493 = vld [vmem:[%s5484 + $0x40] sm:$0xff]
    %v5494 = vld [vmem:[%s5484 + $0x48] sm:$0xff]
    %v5495 = vld [vmem:[%s5484 + $0x50] sm:$0xff]
    %v5496 = vld [vmem:[%s5484 + $0x58] sm:$0xff]
    %v5497 = vld [vmem:[%s5484 + $0x60] sm:$0xff]
    %v5498 = vld [vmem:[%s5484 + $0x68] sm:$0xff]
    %v5499 = vld [vmem:[%s5484 + $0x70] sm:$0xff]
    %v5500 = vld [vmem:[%s5484 + $0x78] sm:$0xff]
    %v5501 = vld [vmem:[%s5484 + $0x80] sm:$0xff]
    %v5502 = vld [vmem:[%s5484 + $0x88] sm:$0xff]
    %v5503 = vld [vmem:[%s5484 + $0x90] sm:$0xff]
    %v5504 = vld [vmem:[%s5484 + $0x98] sm:$0xff]
    %v5505 = vld [vmem:[%s5484 + $0xa0] sm:$0xff]
    %v5506 = vld [vmem:[%s5484 + $0xa8] sm:$0xff]
    %v5507 = vld [vmem:[%s5484 + $0xb0] sm:$0xff]
    %v5508 = vld [vmem:[%s5484 + $0xb8] sm:$0xff]
    %v5509 = vld [vmem:[%s5484 + $0xc0] sm:$0xff]
    %v5510 = vld [vmem:[%s5484 + $0xc8] sm:$0xff]
    %v5511 = vld [vmem:[%s5484 + $0xd0] sm:$0xff]
    %v5512 = vld [vmem:[%s5484 + $0xd8] sm:$0xff]
    %v5513 = vld [vmem:[%s5484 + $0xe0] sm:$0xff]
    %v5514 = vld [vmem:[%s5484 + $0xe8] sm:$0xff]
    %v5515 = vld [vmem:[%s5484 + $0xf0] sm:$0xff]
    %v5516 = vld [vmem:[%s5484 + $0xf8] sm:$0xff]
    %s5517 = scalar_lea.vmem [#allocation8], 38
    %v5518 = vld [vmem:[%s5517] ss:$8 sm:$0x3]
    %v5520 = vlaneseq
    %v5521 = vshrl.u32 %v5520, 7
    %v5522 = vsub.s32 0, %v5521
    %v5523 = vrot.slane %v5518, %v5522
    %v5524 = vlaneseq
    %v5525 = vshrl.u32 %v5524, 7
    %v5526 = vsub.s32 1, %v5525
    %v5527 = vrot.slane %v5518, %v5526
    %v5562 = vunpack.c.l.b16 %v5485
    %v5563 = vunpack.c.h.b16 %v5485
    %v5564 = vunpack.c.l.b16 %v5486
    %v5565 = vunpack.c.h.b16 %v5486
    %v5566 = vunpack.c.l.b16 %v5487
    %v5567 = vunpack.c.h.b16 %v5487
    %v5568 = vunpack.c.l.b16 %v5488
    %v5569 = vunpack.c.h.b16 %v5488
    %v5570 = vunpack.c.l.b16 %v5489
    %v5571 = vunpack.c.h.b16 %v5489
    %v5572 = vunpack.c.l.b16 %v5490
    %v5573 = vunpack.c.h.b16 %v5490
    %v5574 = vunpack.c.l.b16 %v5491
    %v5575 = vunpack.c.h.b16 %v5491
    %v5576 = vunpack.c.l.b16 %v5492
    %v5577 = vunpack.c.h.b16 %v5492
    %v5578 = vunpack.c.l.b16 %v5493
    %v5579 = vunpack.c.h.b16 %v5493
    %v5580 = vunpack.c.l.b16 %v5494
    %v5581 = vunpack.c.h.b16 %v5494
    %v5582 = vunpack.c.l.b16 %v5495
    %v5583 = vunpack.c.h.b16 %v5495
    %v5584 = vunpack.c.l.b16 %v5496
    %v5585 = vunpack.c.h.b16 %v5496
    %v5586 = vunpack.c.l.b16 %v5497
    %v5587 = vunpack.c.h.b16 %v5497
    %v5588 = vunpack.c.l.b16 %v5498
    %v5589 = vunpack.c.h.b16 %v5498
    %v5590 = vunpack.c.l.b16 %v5499
    %v5591 = vunpack.c.h.b16 %v5499
    %v5592 = vunpack.c.l.b16 %v5500
    %v5593 = vunpack.c.h.b16 %v5500
    %v5594 = vunpack.c.l.b16 %v5501
    %v5595 = vunpack.c.h.b16 %v5501
    %v5596 = vunpack.c.l.b16 %v5502
    %v5597 = vunpack.c.h.b16 %v5502
    %v5598 = vunpack.c.l.b16 %v5503
    %v5599 = vunpack.c.h.b16 %v5503
    %v5600 = vunpack.c.l.b16 %v5504
    %v5601 = vunpack.c.h.b16 %v5504
    %v5602 = vunpack.c.l.b16 %v5505
    %v5603 = vunpack.c.h.b16 %v5505
    %v5604 = vunpack.c.l.b16 %v5506
    %v5605 = vunpack.c.h.b16 %v5506
    %v5606 = vunpack.c.l.b16 %v5507
    %v5607 = vunpack.c.h.b16 %v5507
    %v5608 = vunpack.c.l.b16 %v5508
    %v5609 = vunpack.c.h.b16 %v5508
    %v5610 = vunpack.c.l.b16 %v5509
    %v5611 = vunpack.c.h.b16 %v5509
    %v5612 = vunpack.c.l.b16 %v5510
    %v5613 = vunpack.c.h.b16 %v5510
    %v5614 = vunpack.c.l.b16 %v5511
    %v5615 = vunpack.c.h.b16 %v5511
    %v5616 = vunpack.c.l.b16 %v5512
    %v5617 = vunpack.c.h.b16 %v5512
    %v5618 = vunpack.c.l.b16 %v5513
    %v5619 = vunpack.c.h.b16 %v5513
    %v5620 = vunpack.c.l.b16 %v5514
    %v5621 = vunpack.c.h.b16 %v5514
    %v5622 = vunpack.c.l.b16 %v5515
    %v5623 = vunpack.c.h.b16 %v5515
    %v5624 = vunpack.c.l.b16 %v5516
    %v5625 = vunpack.c.h.b16 %v5516
    %v5626 = vpack.c.b16 %v5564, %v5562
    %v5627 = vpack.c.b16 %v5565, %v5563
    %v5628 = vpack.c.b16 %v5568, %v5566
    %v5629 = vpack.c.b16 %v5569, %v5567
    %v5630 = vpack.c.b16 %v5572, %v5570
    %v5631 = vpack.c.b16 %v5573, %v5571
    %v5632 = vpack.c.b16 %v5576, %v5574
    %v5633 = vpack.c.b16 %v5577, %v5575
    %v5634 = vpack.c.b16 %v5580, %v5578
    %v5635 = vpack.c.b16 %v5581, %v5579
    %v5636 = vpack.c.b16 %v5584, %v5582
    %v5637 = vpack.c.b16 %v5585, %v5583
    %v5638 = vpack.c.b16 %v5588, %v5586
    %v5639 = vpack.c.b16 %v5589, %v5587
    %v5640 = vpack.c.b16 %v5592, %v5590
    %v5641 = vpack.c.b16 %v5593, %v5591
    %v5642 = vpack.c.b16 %v5596, %v5594
    %v5643 = vpack.c.b16 %v5597, %v5595
    %v5644 = vpack.c.b16 %v5600, %v5598
    %v5645 = vpack.c.b16 %v5601, %v5599
    %v5646 = vpack.c.b16 %v5604, %v5602
    %v5647 = vpack.c.b16 %v5605, %v5603
    %v5648 = vpack.c.b16 %v5608, %v5606
    %v5649 = vpack.c.b16 %v5609, %v5607
    %v5650 = vpack.c.b16 %v5612, %v5610
    %v5651 = vpack.c.b16 %v5613, %v5611
    %v5652 = vpack.c.b16 %v5616, %v5614
    %v5653 = vpack.c.b16 %v5617, %v5615
    %v5654 = vpack.c.b16 %v5620, %v5618
    %v5655 = vpack.c.b16 %v5621, %v5619
    %v5656 = vpack.c.b16 %v5624, %v5622
    %v5657 = vpack.c.b16 %v5625, %v5623
    %5690 = vmatprep.subr.bf16.mxu0 %v5627
    %5691 = vmatpush1.bf16.msra.mxu0 %v5626
    %5692 = vmatprep.subr.bf16.mxu0 %v5629
    %5693 = vmatpush1.bf16.msra.mxu0 %v5628
    %5694 = vmatprep.subr.bf16.mxu0 %v5631
    %5695 = vmatpush1.bf16.msra.mxu0 %v5630
    %5696 = vmatprep.subr.bf16.mxu0 %v5633
    %5697 = vmatpush1.bf16.msra.mxu0 %v5632
    %5698 = vmatprep.subr.bf16.mxu0 %v5635
    %5699 = vmatpush1.bf16.msra.mxu0 %v5634
    %5700 = vmatprep.subr.bf16.mxu0 %v5637
    %5701 = vmatpush1.bf16.msra.mxu0 %v5636
    %5702 = vmatprep.subr.bf16.mxu0 %v5639
    %5703 = vmatpush1.bf16.msra.mxu0 %v5638
    %5704 = vmatprep.subr.bf16.mxu0 %v5641
    %5705 = vmatpush1.bf16.msra.mxu0 %v5640
    %5706 = vmatprep.subr.bf16.mxu0 %v5643
    %5707 = vmatpush1.bf16.msra.mxu0 %v5642
    %5708 = vmatprep.subr.bf16.mxu0 %v5645
    %5709 = vmatpush1.bf16.msra.mxu0 %v5644
    %5710 = vmatprep.subr.bf16.mxu0 %v5647
    %5711 = vmatpush1.bf16.msra.mxu0 %v5646
    %5712 = vmatprep.subr.bf16.mxu0 %v5649
    %5713 = vmatpush1.bf16.msra.mxu0 %v5648
    %5714 = vmatprep.subr.bf16.mxu0 %v5651
    %5715 = vmatpush1.bf16.msra.mxu0 %v5650
    %5716 = vmatprep.subr.bf16.mxu0 %v5653
    %5717 = vmatpush1.bf16.msra.mxu0 %v5652
    %5718 = vmatprep.subr.bf16.mxu0 %v5655
    %5719 = vmatpush1.bf16.msra.mxu0 %v5654
    %5720 = vmatprep.subr.bf16.mxu0 %v5657
    %5721 = vmatpush1.bf16.msra.mxu0 %v5656
    %5722 = vmatprep.mubr.bf16.mxu0 %v5483
    %5723 = vmatmul.mubr.bf16.gmra.mrb[0].mxu0 %v5482
    %v5724 = vpop.f32.mrb[0].mxu0
    %v5725 = vadd.f32 %v5523, %v5724
    %v5726 = vpop.f32.mrb[0].mxu0
    %v5727 = vadd.f32 %v5527, %v5726
    %v5728 = vpop.f32.mrb[0].mxu0
    %v5729 = vadd.f32 %v5523, %v5728
    %v5730 = vpop.f32.mrb[0].mxu0
    %v5731 = vadd.f32 %v5527, %v5730
    %5732 = vdwg.mxu0
    %v5733 = vmax.f32 %v5725, 0.0
    %v5734 = vmax.f32 %v5727, 0.0
    %v5735 = vmax.f32 %v5729, 0.0
    %v5736 = vmax.f32 %v5731, 0.0
    %v5737 = vpack.c.bf16 %v5735, %v5733
    %v5738 = vpack.c.bf16 %v5736, %v5734
    %s5739 = scalar_lea.vmem [#allocation7], 4352
    %v5740 = vld [vmem:[%s5739] sm:$0xff]
    %v5741 = vld [vmem:[%s5739 + $0x8] sm:$0xff]
    %v5742 = vld [vmem:[%s5739 + $0x10] sm:$0xff]
    %v5743 = vld [vmem:[%s5739 + $0x18] sm:$0xff]
    %v5744 = vld [vmem:[%s5739 + $0x20] sm:$0xff]
    %v5745 = vld [vmem:[%s5739 + $0x28] sm:$0xff]
    %v5746 = vld [vmem:[%s5739 + $0x30] sm:$0xff]
    %v5747 = vld [vmem:[%s5739 + $0x38] sm:$0xff]
    %v5748 = vld [vmem:[%s5739 + $0x40] sm:$0xff]
    %v5749 = vld [vmem:[%s5739 + $0x48] sm:$0xff]
    %v5750 = vld [vmem:[%s5739 + $0x50] sm:$0xff]
    %v5751 = vld [vmem:[%s5739 + $0x58] sm:$0xff]
    %v5752 = vld [vmem:[%s5739 + $0x60] sm:$0xff]
    %v5753 = vld [vmem:[%s5739 + $0x68] sm:$0xff]
    %v5754 = vld [vmem:[%s5739 + $0x70] sm:$0xff]
    %v5755 = vld [vmem:[%s5739 + $0x78] sm:$0xff]
    %v5756 = vld [vmem:[%s5739 + $0x80] sm:$0xff]
    %v5757 = vld [vmem:[%s5739 + $0x88] sm:$0xff]
    %v5758 = vld [vmem:[%s5739 + $0x90] sm:$0xff]
    %v5759 = vld [vmem:[%s5739 + $0x98] sm:$0xff]
    %v5760 = vld [vmem:[%s5739 + $0xa0] sm:$0xff]
    %v5761 = vld [vmem:[%s5739 + $0xa8] sm:$0xff]
    %v5762 = vld [vmem:[%s5739 + $0xb0] sm:$0xff]
    %v5763 = vld [vmem:[%s5739 + $0xb8] sm:$0xff]
    %v5764 = vld [vmem:[%s5739 + $0xc0] sm:$0xff]
    %v5765 = vld [vmem:[%s5739 + $0xc8] sm:$0xff]
    %v5766 = vld [vmem:[%s5739 + $0xd0] sm:$0xff]
    %v5767 = vld [vmem:[%s5739 + $0xd8] sm:$0xff]
    %v5768 = vld [vmem:[%s5739 + $0xe0] sm:$0xff]
    %v5769 = vld [vmem:[%s5739 + $0xe8] sm:$0xff]
    %v5770 = vld [vmem:[%s5739 + $0xf0] sm:$0xff]
    %v5771 = vld [vmem:[%s5739 + $0xf8] sm:$0xff]
    %s5772 = scalar_lea.vmem [#allocation8], 39
    %v5773 = vld [vmem:[%s5772] ss:$8 sm:$0x3]
    %v5775 = vlaneseq
    %v5776 = vshrl.u32 %v5775, 7
    %v5777 = vsub.s32 0, %v5776
    %v5778 = vrot.slane %v5773, %v5777
    %v5779 = vlaneseq
    %v5780 = vshrl.u32 %v5779, 7
    %v5781 = vsub.s32 1, %v5780
    %v5782 = vrot.slane %v5773, %v5781
    %v5817 = vunpack.c.l.b16 %v5740
    %v5818 = vunpack.c.h.b16 %v5740
    %v5819 = vunpack.c.l.b16 %v5741
    %v5820 = vunpack.c.h.b16 %v5741
    %v5821 = vunpack.c.l.b16 %v5742
    %v5822 = vunpack.c.h.b16 %v5742
    %v5823 = vunpack.c.l.b16 %v5743
    %v5824 = vunpack.c.h.b16 %v5743
    %v5825 = vunpack.c.l.b16 %v5744
    %v5826 = vunpack.c.h.b16 %v5744
    %v5827 = vunpack.c.l.b16 %v5745
    %v5828 = vunpack.c.h.b16 %v5745
    %v5829 = vunpack.c.l.b16 %v5746
    %v5830 = vunpack.c.h.b16 %v5746
    %v5831 = vunpack.c.l.b16 %v5747
    %v5832 = vunpack.c.h.b16 %v5747
    %v5833 = vunpack.c.l.b16 %v5748
    %v5834 = vunpack.c.h.b16 %v5748
    %v5835 = vunpack.c.l.b16 %v5749
    %v5836 = vunpack.c.h.b16 %v5749
    %v5837 = vunpack.c.l.b16 %v5750
    %v5838 = vunpack.c.h.b16 %v5750
    %v5839 = vunpack.c.l.b16 %v5751
    %v5840 = vunpack.c.h.b16 %v5751
    %v5841 = vunpack.c.l.b16 %v5752
    %v5842 = vunpack.c.h.b16 %v5752
    %v5843 = vunpack.c.l.b16 %v5753
    %v5844 = vunpack.c.h.b16 %v5753
    %v5845 = vunpack.c.l.b16 %v5754
    %v5846 = vunpack.c.h.b16 %v5754
    %v5847 = vunpack.c.l.b16 %v5755
    %v5848 = vunpack.c.h.b16 %v5755
    %v5849 = vunpack.c.l.b16 %v5756
    %v5850 = vunpack.c.h.b16 %v5756
    %v5851 = vunpack.c.l.b16 %v5757
    %v5852 = vunpack.c.h.b16 %v5757
    %v5853 = vunpack.c.l.b16 %v5758
    %v5854 = vunpack.c.h.b16 %v5758
    %v5855 = vunpack.c.l.b16 %v5759
    %v5856 = vunpack.c.h.b16 %v5759
    %v5857 = vunpack.c.l.b16 %v5760
    %v5858 = vunpack.c.h.b16 %v5760
    %v5859 = vunpack.c.l.b16 %v5761
    %v5860 = vunpack.c.h.b16 %v5761
    %v5861 = vunpack.c.l.b16 %v5762
    %v5862 = vunpack.c.h.b16 %v5762
    %v5863 = vunpack.c.l.b16 %v5763
    %v5864 = vunpack.c.h.b16 %v5763
    %v5865 = vunpack.c.l.b16 %v5764
    %v5866 = vunpack.c.h.b16 %v5764
    %v5867 = vunpack.c.l.b16 %v5765
    %v5868 = vunpack.c.h.b16 %v5765
    %v5869 = vunpack.c.l.b16 %v5766
    %v5870 = vunpack.c.h.b16 %v5766
    %v5871 = vunpack.c.l.b16 %v5767
    %v5872 = vunpack.c.h.b16 %v5767
    %v5873 = vunpack.c.l.b16 %v5768
    %v5874 = vunpack.c.h.b16 %v5768
    %v5875 = vunpack.c.l.b16 %v5769
    %v5876 = vunpack.c.h.b16 %v5769
    %v5877 = vunpack.c.l.b16 %v5770
    %v5878 = vunpack.c.h.b16 %v5770
    %v5879 = vunpack.c.l.b16 %v5771
    %v5880 = vunpack.c.h.b16 %v5771
    %v5881 = vpack.c.b16 %v5819, %v5817
    %v5882 = vpack.c.b16 %v5820, %v5818
    %v5883 = vpack.c.b16 %v5823, %v5821
    %v5884 = vpack.c.b16 %v5824, %v5822
    %v5885 = vpack.c.b16 %v5827, %v5825
    %v5886 = vpack.c.b16 %v5828, %v5826
    %v5887 = vpack.c.b16 %v5831, %v5829
    %v5888 = vpack.c.b16 %v5832, %v5830
    %v5889 = vpack.c.b16 %v5835, %v5833
    %v5890 = vpack.c.b16 %v5836, %v5834
    %v5891 = vpack.c.b16 %v5839, %v5837
    %v5892 = vpack.c.b16 %v5840, %v5838
    %v5893 = vpack.c.b16 %v5843, %v5841
    %v5894 = vpack.c.b16 %v5844, %v5842
    %v5895 = vpack.c.b16 %v5847, %v5845
    %v5896 = vpack.c.b16 %v5848, %v5846
    %v5897 = vpack.c.b16 %v5851, %v5849
    %v5898 = vpack.c.b16 %v5852, %v5850
    %v5899 = vpack.c.b16 %v5855, %v5853
    %v5900 = vpack.c.b16 %v5856, %v5854
    %v5901 = vpack.c.b16 %v5859, %v5857
    %v5902 = vpack.c.b16 %v5860, %v5858
    %v5903 = vpack.c.b16 %v5863, %v5861
    %v5904 = vpack.c.b16 %v5864, %v5862
    %v5905 = vpack.c.b16 %v5867, %v5865
    %v5906 = vpack.c.b16 %v5868, %v5866
    %v5907 = vpack.c.b16 %v5871, %v5869
    %v5908 = vpack.c.b16 %v5872, %v5870
    %v5909 = vpack.c.b16 %v5875, %v5873
    %v5910 = vpack.c.b16 %v5876, %v5874
    %v5911 = vpack.c.b16 %v5879, %v5877
    %v5912 = vpack.c.b16 %v5880, %v5878
    %5945 = vmatprep.subr.bf16.mxu0 %v5882
    %5946 = vmatpush1.bf16.msra.mxu0 %v5881
    %5947 = vmatprep.subr.bf16.mxu0 %v5884
    %5948 = vmatpush1.bf16.msra.mxu0 %v5883
    %5949 = vmatprep.subr.bf16.mxu0 %v5886
    %5950 = vmatpush1.bf16.msra.mxu0 %v5885
    %5951 = vmatprep.subr.bf16.mxu0 %v5888
    %5952 = vmatpush1.bf16.msra.mxu0 %v5887
    %5953 = vmatprep.subr.bf16.mxu0 %v5890
    %5954 = vmatpush1.bf16.msra.mxu0 %v5889
    %5955 = vmatprep.subr.bf16.mxu0 %v5892
    %5956 = vmatpush1.bf16.msra.mxu0 %v5891
    %5957 = vmatprep.subr.bf16.mxu0 %v5894
    %5958 = vmatpush1.bf16.msra.mxu0 %v5893
    %5959 = vmatprep.subr.bf16.mxu0 %v5896
    %5960 = vmatpush1.bf16.msra.mxu0 %v5895
    %5961 = vmatprep.subr.bf16.mxu0 %v5898
    %5962 = vmatpush1.bf16.msra.mxu0 %v5897
    %5963 = vmatprep.subr.bf16.mxu0 %v5900
    %5964 = vmatpush1.bf16.msra.mxu0 %v5899
    %5965 = vmatprep.subr.bf16.mxu0 %v5902
    %5966 = vmatpush1.bf16.msra.mxu0 %v5901
    %5967 = vmatprep.subr.bf16.mxu0 %v5904
    %5968 = vmatpush1.bf16.msra.mxu0 %v5903
    %5969 = vmatprep.subr.bf16.mxu0 %v5906
    %5970 = vmatpush1.bf16.msra.mxu0 %v5905
    %5971 = vmatprep.subr.bf16.mxu0 %v5908
    %5972 = vmatpush1.bf16.msra.mxu0 %v5907
    %5973 = vmatprep.subr.bf16.mxu0 %v5910
    %5974 = vmatpush1.bf16.msra.mxu0 %v5909
    %5975 = vmatprep.subr.bf16.mxu0 %v5912
    %5976 = vmatpush1.bf16.msra.mxu0 %v5911
    %5977 = vmatprep.mubr.bf16.mxu0 %v5738
    %5978 = vmatmul.mubr.bf16.gmra.mrb[0].mxu0 %v5737
    %v5979 = vpop.f32.mrb[0].mxu0
    %v5980 = vadd.f32 %v5778, %v5979
    %v5981 = vpop.f32.mrb[0].mxu0
    %v5982 = vadd.f32 %v5782, %v5981
    %v5983 = vpop.f32.mrb[0].mxu0
    %v5984 = vadd.f32 %v5778, %v5983
    %v5985 = vpop.f32.mrb[0].mxu0
    %v5986 = vadd.f32 %v5782, %v5985
    %5987 = vdwg.mxu0
    %v5988 = vmax.f32 %v5980, 0.0
    %v5989 = vmax.f32 %v5982, 0.0
    %v5990 = vmax.f32 %v5984, 0.0
    %v5991 = vmax.f32 %v5986, 0.0
    %s5992 = scalar_lea.vmem [#allocation10], 1280
    %v5993 = vld [vmem:[%s5992] sm:$0xff]
    %v5994 = vld [vmem:[%s5992 + $0x8] sm:$0xff]
    %v5995 = vld [vmem:[%s5992 + $0x10] sm:$0xff]
    %v5996 = vld [vmem:[%s5992 + $0x18] sm:$0xff]
    %v5997 = vld [vmem:[%s5992 + $0x20] sm:$0xff]
    %v5998 = vld [vmem:[%s5992 + $0x28] sm:$0xff]
    %v5999 = vld [vmem:[%s5992 + $0x30] sm:$0xff]
    %v6000 = vld [vmem:[%s5992 + $0x38] sm:$0xff]
    %v6001 = vld [vmem:[%s5992 + $0x40] sm:$0xff]
    %v6002 = vld [vmem:[%s5992 + $0x48] sm:$0xff]
    %v6003 = vld [vmem:[%s5992 + $0x50] sm:$0xff]
    %v6004 = vld [vmem:[%s5992 + $0x58] sm:$0xff]
    %v6005 = vld [vmem:[%s5992 + $0x60] sm:$0xff]
    %v6006 = vld [vmem:[%s5992 + $0x68] sm:$0xff]
    %v6007 = vld [vmem:[%s5992 + $0x70] sm:$0xff]
    %v6008 = vld [vmem:[%s5992 + $0x78] sm:$0xff]
    %v6009 = vld [vmem:[%s5992 + $0x80] sm:$0xff]
    %v6010 = vld [vmem:[%s5992 + $0x88] sm:$0xff]
    %v6011 = vld [vmem:[%s5992 + $0x90] sm:$0xff]
    %v6012 = vld [vmem:[%s5992 + $0x98] sm:$0xff]
    %v6013 = vld [vmem:[%s5992 + $0xa0] sm:$0xff]
    %v6014 = vld [vmem:[%s5992 + $0xa8] sm:$0xff]
    %v6015 = vld [vmem:[%s5992 + $0xb0] sm:$0xff]
    %v6016 = vld [vmem:[%s5992 + $0xb8] sm:$0xff]
    %v6017 = vld [vmem:[%s5992 + $0xc0] sm:$0xff]
    %v6018 = vld [vmem:[%s5992 + $0xc8] sm:$0xff]
    %v6019 = vld [vmem:[%s5992 + $0xd0] sm:$0xff]
    %v6020 = vld [vmem:[%s5992 + $0xd8] sm:$0xff]
    %v6021 = vld [vmem:[%s5992 + $0xe0] sm:$0xff]
    %v6022 = vld [vmem:[%s5992 + $0xe8] sm:$0xff]
    %v6023 = vld [vmem:[%s5992 + $0xf0] sm:$0xff]
    %v6024 = vld [vmem:[%s5992 + $0xf8] sm:$0xff]
    %6025 = vmatprep.subr.mxu0 0.0
    %6026 = vmatpush1.msra.mxu0 %v5993
    %6027 = vmatprep.subr.mxu0 0.0
    %6028 = vmatpush1.msra.mxu0 %v5994
    %6029 = vmatprep.subr.mxu0 0.0
    %6030 = vmatpush1.msra.mxu0 %v5995
    %6031 = vmatprep.subr.mxu0 0.0
    %6032 = vmatpush1.msra.mxu0 %v5996
    %6033 = vmatprep.subr.mxu0 0.0
    %6034 = vmatpush1.msra.mxu0 %v5997
    %6035 = vmatprep.subr.mxu0 0.0
    %6036 = vmatpush1.msra.mxu0 %v5998
    %6037 = vmatprep.subr.mxu0 0.0
    %6038 = vmatpush1.msra.mxu0 %v5999
    %6039 = vmatprep.subr.mxu0 0.0
    %6040 = vmatpush1.msra.mxu0 %v6000
    %6041 = vmatprep.subr.mxu0 0.0
    %6042 = vmatpush1.msra.mxu0 %v6001
    %6043 = vmatprep.subr.mxu0 0.0
    %6044 = vmatpush1.msra.mxu0 %v6002
    %6045 = vmatprep.subr.mxu0 0.0
    %6046 = vmatpush1.msra.mxu0 %v6003
    %6047 = vmatprep.subr.mxu0 0.0
    %6048 = vmatpush1.msra.mxu0 %v6004
    %6049 = vmatprep.subr.mxu0 0.0
    %6050 = vmatpush1.msra.mxu0 %v6005
    %6051 = vmatprep.subr.mxu0 0.0
    %6052 = vmatpush1.msra.mxu0 %v6006
    %6053 = vmatprep.subr.mxu0 0.0
    %6054 = vmatpush1.msra.mxu0 %v6007
    %6055 = vmatprep.subr.mxu0 0.0
    %6056 = vmatpush1.msra.mxu0 %v6008
    %6057 = vmatprep.subr.mxu0 0.0
    %6058 = vmatpush1.msra.mxu0 %v6009
    %6059 = vmatprep.subr.mxu0 0.0
    %6060 = vmatpush1.msra.mxu0 %v6010
    %6061 = vmatprep.subr.mxu0 0.0
    %6062 = vmatpush1.msra.mxu0 %v6011
    %6063 = vmatprep.subr.mxu0 0.0
    %6064 = vmatpush1.msra.mxu0 %v6012
    %6065 = vmatprep.subr.mxu0 0.0
    %6066 = vmatpush1.msra.mxu0 %v6013
    %6067 = vmatprep.subr.mxu0 0.0
    %6068 = vmatpush1.msra.mxu0 %v6014
    %6069 = vmatprep.subr.mxu0 0.0
    %6070 = vmatpush1.msra.mxu0 %v6015
    %6071 = vmatprep.subr.mxu0 0.0
    %6072 = vmatpush1.msra.mxu0 %v6016
    %6073 = vmatprep.subr.mxu0 0.0
    %6074 = vmatpush1.msra.mxu0 %v6017
    %6075 = vmatprep.subr.mxu0 0.0
    %6076 = vmatpush1.msra.mxu0 %v6018
    %6077 = vmatprep.subr.mxu0 0.0
    %6078 = vmatpush1.msra.mxu0 %v6019
    %6079 = vmatprep.subr.mxu0 0.0
    %6080 = vmatpush1.msra.mxu0 %v6020
    %6081 = vmatprep.subr.mxu0 0.0
    %6082 = vmatpush1.msra.mxu0 %v6021
    %6083 = vmatprep.subr.mxu0 0.0
    %6084 = vmatpush1.msra.mxu0 %v6022
    %6085 = vmatprep.subr.mxu0 0.0
    %6086 = vmatpush1.msra.mxu0 %v6023
    %6087 = vmatprep.subr.mxu0 0.0
    %6088 = vmatpush1.msra.mxu0 %v6024
    %6089 = vmatprep.mubr.f32.mxu0 %v5989
    %6090 = vmatmul.mubr.f32.gmra.mrb[0].mxu0 %v5988
    %v6091 = vpop.f32.mrb[0].mxu0
    %v6092 = vadd.f32 0.0, %v6091
    %v6093 = vpop.f32.mrb[0].mxu0
    %6094 = vmatprep.mubr.f32.mxu0 %v5991
    %6095 = vmatmul.mubr.f32.gmra.mrb[0].mxu0 %v5990
    %v6096 = vpop.f32.mrb[0].mxu0
    %v6097 = vadd.f32 0.0, %v6096
    %v6098 = vpop.f32.mrb[0].mxu0
    %6099 = vdwg.mxu0
    %v6100 = vadd.f32 %v5098, %v6092
    %v6101 = vadd.f32 %v5099, %v6097
    %6102 = vst [vmem:[#allocation11] sm:$0xff] %v6100
    %6103 = vst [vmem:[#allocation11 + $0x8] sm:$0xff] %v6101
    // Predicated region
    $region42: #{tpu_custom_call.1} parent=1 // pred_check
      _
    $region43: #{tpu_custom_call.1} parent=1 // pred_check_branch
      %6105 = sbr.rel (0) target = $region45
    $region44: #{tpu_custom_call.1} parent=1 // pred_region
      %s6107 = ssub.s32 256, 256
      %6108 = vsyncadd [#allocation4], %s6107
      %s6109 = sshll.u32 [#allocation11], 4
      %s6110 = int_to_ptr.vmem [resolvable:$true] %s6109
      %6115 = dma.vmem_to_hbm [thread:$0]  %s6110, 256, %s5, [#allocation4], 128, 128, 8
    $region45: #{tpu_custom_call.1} parent=1 // pred_fallthru
      _
    // Predicated region
    $region46: #{tpu_custom_call.1} parent=1 // pred_check
      _
    $region47: #{tpu_custom_call.1} parent=1 // pred_check_branch
      %6117 = sbr.rel (0) target = $region49
    $region48: #{tpu_custom_call.1} parent=1 // pred_region
      %6118 = dma.done [#allocation4], 256
    $region49: #{tpu_custom_call.1} parent=1 // pred_fallthru
      _
    %6119 = vsyncpa [#allocation3], 1
    %6120 = vsyncpa [#allocation6], 1
    %6121 = vsyncpa [#allocation9], 1
    %6122 = vsyncpa [#allocation4], 1

</llo_original>
